<compile_context>
chip_gen: v5e
topology: v5e:2x2
jax: 0.10.0
libtpu: 0.0.40
codegen_flags: <defaults>
</compile_context>

<pallas_src>
import jax
import jax.numpy as jnp
from jax.experimental import pallas as pl
from jax.experimental.pallas import tpu as pltpu

# ---- small synthetic config (CLIP ViT-B/32 scaled down) ----
B = 2                         # batch
C = 3                         # channels
IMG = 32                      # spatial size (stand-in for 224)
PATCH = 8                     # patch size (stand-in for 32)
P = (IMG // PATCH) ** 2       # 16 patches
S = P + 1                     # 17 tokens (CLS + patches)
SP = ((S + 7) // 8) * 8       # 24: tokens padded to a sublane multiple
M = B * SP                    # 48: batch folded into the matmul M dimension
D = 128                       # hidden size (lane-dense)
H = 4                         # attention heads
DH = D // H                   # head dim
MLP = 256                     # MLP hidden
LAYERS = 2                    # encoder layers
K = C * PATCH * PATCH         # 192: flattened patch dim (c, ph, pw order)
EPS = 1e-5
NEG = -1e30                   # additive mask value (avoids inf-inf NaNs)


def _ln(x, g, b):
    mu = jnp.mean(x, axis=-1, keepdims=True)
    var = jnp.mean((x - mu) ** 2, axis=-1, keepdims=True)
    return (x - mu) * jax.lax.rsqrt(var + EPS) * g + b


# --------------------------- fused kernel ---------------------------

def vit_kernel(patches_ref, wp_ref, tok_bias_ref, ln_vecs_ref, mask_ref,
               wqkv_ref, bqkv_ref, wo_ref, vec_d_ref, w1_ref, b1_ref, w2_ref,
               out_ref, x_ref):
    l = pl.program_id(0)

    # ---- patch embed + CLS/pos + pre-LN (first grid step only) ----
    @pl.when(l == 0)
    def _():
        lv = ln_vecs_ref[...]                                       # (8, D)
        emb = jnp.dot(patches_ref[...], wp_ref[...],                # (M, D); preproc folded
                      preferred_element_type=jnp.float32)
        tok = emb + tok_bias_ref[...]                               # CLS/pos/bias slab
        x_ref[...] = _ln(tok, lv[0:1], lv[1:2])                     # pre_layrnorm

    x = x_ref[...]                                                  # (M, D) resident activation
    vd = vec_d_ref[0]                                               # (8, D) packed per-layer vecs

    # ---- self-attention (pre-LN); per-head weights, block-diag batch mask ----
    h = _ln(x, vd[0:1], vd[1:2])
    attn = jnp.zeros_like(x)
    for hh in range(H):                                             # static unroll over heads
        q = jnp.dot(h, wqkv_ref[0, hh], preferred_element_type=jnp.float32) + bqkv_ref[0, hh]
        k = jnp.dot(h, wqkv_ref[0, H + hh], preferred_element_type=jnp.float32) + bqkv_ref[0, H + hh]
        v = jnp.dot(h, wqkv_ref[0, 2 * H + hh], preferred_element_type=jnp.float32) + bqkv_ref[0, 2 * H + hh]
        s = jax.lax.dot_general(q, k, (((1,), (1,)), ((), ())),     # (M, M) q @ k^T
                                preferred_element_type=jnp.float32)
        s = s + mask_ref[...]                                       # per-image + pad-key mask
        s = s - jnp.max(s, axis=-1, keepdims=True)
        e = jnp.exp(s)
        a = e * pl.reciprocal(jnp.sum(e, axis=-1, keepdims=True), approx=True)
        ctx = jnp.dot(a, v, preferred_element_type=jnp.float32)     # (M, DH)
        attn = attn + jnp.dot(ctx, wo_ref[0, hh],                   # accumulate (no head concat)
                              preferred_element_type=jnp.float32)
    x = x + attn + vd[4:5]                                          # + out_proj bias

    # ---- MLP with quickGELU (pre-LN) ----
    h2 = _ln(x, vd[2:3], vd[3:4])
    m1 = jnp.dot(h2, w1_ref[0], preferred_element_type=jnp.float32) + b1_ref[0]
    m1 = m1 * jax.nn.sigmoid(1.702 * m1)                            # CLIP quick_gelu
    x = x + jnp.dot(m1, w2_ref[0], preferred_element_type=jnp.float32) + vd[5:6]
    x_ref[...] = x

    # ---- pooler_output = post_layernorm(CLS token) (last grid step only) ----
    @pl.when(l == LAYERS - 1)
    def _():
        lv = ln_vecs_ref[...]
        cls = jnp.concatenate([x[b * SP:b * SP + 1] for b in range(B)], axis=0)  # (B, D)
        out_ref[...] = _ln(cls, lv[2:3], lv[3:4])


# --------------------------- wrapper ---------------------------

def _const_spec(shape):
    nd = len(shape)
    return pl.BlockSpec(tuple(shape), lambda l, _n=nd: (0,) * _n)


def _layer_spec(shape):
    nd = len(shape)
    return pl.BlockSpec((1,) + tuple(shape[1:]),
                        lambda l, _n=nd: (l,) + (0,) * (_n - 1))


@jax.jit
def image_encoder_forward(image, kp):
    """image: [B, C, IMG, IMG] float32 in [0, 1]. Returns pooler_output [B, D]."""
    gh = IMG // PATCH
    # patchify glue (c, ph, pw ordering == Conv2d weight flattening)
    patches = image.reshape(B, C, gh, PATCH, gh, PATCH)
    patches = patches.transpose(0, 2, 4, 1, 3, 5).reshape(B, P, K)
    # place patches into the padded token layout: [CLS slot, P patches, pad...] per image
    padded = jnp.zeros((B, SP, K), jnp.float32).at[:, 1:P + 1, :].set(patches)
    padded = padded.reshape(M, K)

    grid_spec = pltpu.PrefetchScalarGridSpec(
        num_scalar_prefetch=0,
        grid=(LAYERS,),
        in_specs=[
            _const_spec((M, K)),                 # padded patches (fetched once)
            _const_spec((K, D)),                 # patch weight (preproc folded)
            _const_spec((M, D)),                 # CLS/pos/embed-bias slab
            _const_spec((8, D)),                 # pre/post LN gamma/beta
            _const_spec((M, M)),                 # block-diagonal attention mask bias
            _layer_spec(kp["w_qkv"].shape),      # (LAYERS, 3H, D, DH)
            _layer_spec(kp["b_qkv"].shape),      # (LAYERS, 3H, 1, DH)
            _layer_spec(kp["w_out"].shape),      # (LAYERS, H, DH, D)
            _layer_spec(kp["vec_d"].shape),      # (LAYERS, 8, D)
            _layer_spec(kp["w1"].shape),         # (LAYERS, D, MLP)
            _layer_spec(kp["b1"].shape),         # (LAYERS, 1, MLP)
            _layer_spec(kp["w2"].shape),         # (LAYERS, MLP, D)
        ],
        out_specs=pl.BlockSpec((B, D), lambda l: (0, 0)),
        scratch_shapes=[pltpu.VMEM((M, D), jnp.float32)],   # resident activation
    )
    return pl.pallas_call(
        vit_kernel,
        grid_spec=grid_spec,
        out_shape=jax.ShapeDtypeStruct((B, D), jnp.float32),
        compiler_params=pltpu.CompilerParams(dimension_semantics=("arbitrary",)),
    )(padded, kp["w_patch"], kp["tok_bias"], kp["ln_vecs"], kp["mask"],
      kp["w_qkv"], kp["b_qkv"], kp["w_out"], kp["vec_d"],
      kp["w1"], kp["b1"], kp["w2"])


# --------------------------- params ---------------------------

def _rn(k, shape):
    return 0.02 * jax.random.normal(k, shape, jnp.float32)


def init_raw_params(key):
    """Raw (PyTorch-layout) synthetic weights for the frozen CLIP vision tower."""
    clip_mean = jnp.array([0.48145466, 0.4578275, 0.40821073], jnp.float32)
    clip_std = jnp.array([0.26862954, 0.26130258, 0.27577711], jnp.float32)
    k_emb, k_layers = jax.random.split(key)
    ke = jax.random.split(k_emb, 7)
    raw = {
        "mean_k": jnp.repeat(clip_mean, PATCH * PATCH).reshape(1, K),
        "std_k": jnp.repeat(clip_std, PATCH * PATCH).reshape(1, K),
        "w_patch": _rn(ke[0], (K, D)),
        "cls": _rn(ke[1], (1, D)),
        "pos": _rn(ke[2], (S, D)),
        "pre_g": 1.0 + _rn(ke[3], (1, D)), "pre_b": _rn(ke[4], (1, D)),
        "post_g": 1.0 + _rn(ke[5], (1, D)), "post_b": _rn(ke[6], (1, D)),
        "layers": [],
    }
    for lkey in jax.random.split(k_layers, LAYERS):
        lk = jax.random.split(lkey, 16)
        raw["layers"].append(dict(
            ln1g=1.0 + _rn(lk[0], (1, D)), ln1b=_rn(lk[1], (1, D)),
            wq=_rn(lk[2], (D, D)), bq=_rn(lk[3], (1, D)),
            wk=_rn(lk[4], (D, D)), bk=_rn(lk[5], (1, D)),
            wv=_rn(lk[6], (D, D)), bv=_rn(lk[7], (1, D)),
            wo=_rn(lk[8], (D, D)), bo=_rn(lk[9], (1, D)),
            ln2g=1.0 + _rn(lk[10], (1, D)), ln2b=_rn(lk[11], (1, D)),
            w1=_rn(lk[12], (D, MLP)), b1=_rn(lk[13], (1, MLP)),
            w2=_rn(lk[14], (MLP, D)), b2=_rn(lk[15], (1, D)),
        ))
    return raw


def pack_params(raw):
    """Frozen-model constant folding + per-head / per-layer packing for the fused kernel."""
    # fold CLIP normalization into the patch projection: ((p-mean)/std)@W == p@W' + b'
    w_patch = raw["w_patch"] / raw["std_k"].reshape(K, 1)
    b_emb = -(raw["mean_k"] / raw["std_k"]) @ raw["w_patch"]            # (1, D)

    # additive token slab: row0 = CLS + pos0 ; rows1..P = pos + folded bias ; pads = 0
    tok_b = jnp.zeros((SP, D), jnp.float32)
    tok_b = tok_b.at[0:1].set(raw["cls"] + raw["pos"][0:1])
    tok_b = tok_b.at[1:S].set(raw["pos"][1:S] + b_emb)
    tok_bias = jnp.tile(tok_b, (B, 1))                                  # (M, D)

    ln_vecs = jnp.zeros((8, D), jnp.float32)
    ln_vecs = ln_vecs.at[0:1].set(raw["pre_g"]).at[1:2].set(raw["pre_b"])
    ln_vecs = ln_vecs.at[2:3].set(raw["post_g"]).at[3:4].set(raw["post_b"])

    # block-diagonal (per-image) mask, pad key columns disabled
    row_b = jnp.arange(M) // SP
    col_i = jnp.arange(M) % SP
    ok = (row_b[:, None] == row_b[None, :]) & (col_i[None, :] < S)
    mask = jnp.where(ok, 0.0, NEG).astype(jnp.float32)

    scale = DH ** -0.5
    w_qkv, b_qkv, w_out, vec_d, w1s, b1s, w2s = [], [], [], [], [], [], []
    for lp in raw["layers"]:
        # per-head split; fold 1/sqrt(DH) into the query projection
        wq = (lp["wq"] * scale).reshape(D, H, DH).transpose(1, 0, 2)    # (H, D, DH)
        wk = lp["wk"].reshape(D, H, DH).transpose(1, 0, 2)
        wv = lp["wv"].reshape(D, H, DH).transpose(1, 0, 2)
        w_qkv.append(jnp.concatenate([wq, wk, wv], axis=0))             # (3H, D, DH)
        bq = (lp["bq"] * scale).reshape(H, 1, DH)
        bk = lp["bk"].reshape(H, 1, DH)
        bv = lp["bv"].reshape(H, 1, DH)
        b_qkv.append(jnp.concatenate([bq, bk, bv], axis=0))             # (3H, 1, DH)
        w_out.append(lp["wo"].reshape(H, DH, D))                        # (H, DH, D)
        vd = jnp.zeros((8, D), jnp.float32)
        vd = vd.at[0:1].set(lp["ln1g"]).at[1:2].set(lp["ln1b"])
        vd = vd.at[2:3].set(lp["ln2g"]).at[3:4].set(lp["ln2b"])
        vd = vd.at[4:5].set(lp["bo"]).at[5:6].set(lp["b2"])
        vec_d.append(vd)
        w1s.append(lp["w1"]); b1s.append(lp["b1"]); w2s.append(lp["w2"])

    return {
        "w_patch": w_patch, "tok_bias": tok_bias, "ln_vecs": ln_vecs, "mask": mask,
        "w_qkv": jnp.stack(w_qkv), "b_qkv": jnp.stack(b_qkv), "w_out": jnp.stack(w_out),
        "vec_d": jnp.stack(vec_d),
        "w1": jnp.stack(w1s), "b1": jnp.stack(b1s), "w2": jnp.stack(w2s),
    }


# --------------------------- pure-JAX reference ---------------------------

def reference_forward(image, raw):
    gh = IMG // PATCH
    patches = image.reshape(B, C, gh, PATCH, gh, PATCH)
    patches = patches.transpose(0, 2, 4, 1, 3, 5).reshape(B, P, K)
    p = (patches - raw["mean_k"]) / raw["std_k"]
    emb = jnp.einsum("bpk,kd->bpd", p, raw["w_patch"])
    cls = jnp.broadcast_to(raw["cls"], (B, 1, D))
    x = jnp.concatenate([cls, emb], axis=1) + raw["pos"][None]
    x = _ln(x, raw["pre_g"], raw["pre_b"])
    scale = DH ** -0.5
    for lp in raw["layers"]:
        h = _ln(x, lp["ln1g"], lp["ln1b"])
        q = (h @ lp["wq"] + lp["bq"]).reshape(B, S, H, DH).transpose(0, 2, 1, 3) * scale
        k = (h @ lp["wk"] + lp["bk"]).reshape(B, S, H, DH).transpose(0, 2, 1, 3)
        v = (h @ lp["wv"] + lp["bv"]).reshape(B, S, H, DH).transpose(0, 2, 1, 3)
        a = jax.nn.softmax(jnp.einsum("bhqd,bhkd->bhqk", q, k), axis=-1)
        ctx = jnp.einsum("bhqk,bhkd->bhqd", a, v).transpose(0, 2, 1, 3).reshape(B, S, D)
        x = x + ctx @ lp["wo"] + lp["bo"]
        h2 = _ln(x, lp["ln2g"], lp["ln2b"])
        m1 = h2 @ lp["w1"] + lp["b1"]
        m1 = m1 * jax.nn.sigmoid(1.702 * m1)
        x = x + m1 @ lp["w2"] + lp["b2"]
    return _ln(x[:, 0, :], raw["post_g"], raw["post_b"])


if __name__ == "__main__":
    key = jax.random.PRNGKey(0)
    k_img, k_par = jax.random.split(key)
    image = jax.random.uniform(k_img, (B, C, IMG, IMG), jnp.float32)   # NCHW like PyTorch
    raw = init_raw_params(k_par)
    kp = pack_params(raw)

    pooled = jax.block_until_ready(image_encoder_forward(image, kp))
    assert pooled.shape == (B, D) and pooled.dtype == jnp.float32
    assert bool(jnp.all(jnp.isfinite(pooled)))

    ref = reference_forward(image, raw)
    err = float(jnp.max(jnp.abs(pooled - ref)))
    assert err < 5e-2, f"kernel/reference mismatch: max abs err = {err}"
    print("KERNEL_OK")
</pallas_src>

<mosaic_0001>
module attributes {stable_mosaic.version = 11 : i64} {
  func.func @vit_kernel(%arg0: i32, %arg1: memref<48x192xf32, #tpu.memory_space<vmem>>, %arg2: memref<192x128xf32, #tpu.memory_space<vmem>>, %arg3: memref<48x128xf32, #tpu.memory_space<vmem>>, %arg4: memref<8x128xf32, #tpu.memory_space<vmem>>, %arg5: memref<48x48xf32, #tpu.memory_space<vmem>>, %arg6: memref<1x12x128x32xf32, #tpu.memory_space<vmem>>, %arg7: memref<1x12x1x32xf32, #tpu.memory_space<vmem>>, %arg8: memref<1x4x32x128xf32, #tpu.memory_space<vmem>>, %arg9: memref<1x8x128xf32, #tpu.memory_space<vmem>>, %arg10: memref<1x128x256xf32, #tpu.memory_space<vmem>>, %arg11: memref<1x1x256xf32, #tpu.memory_space<vmem>>, %arg12: memref<1x256x128xf32, #tpu.memory_space<vmem>>, %arg13: memref<2x128xf32, #tpu.memory_space<vmem>>, %arg14: memref<48x128xf32, #tpu.memory_space<vmem>>) attributes {dimension_semantics = [#tpu.dimension_semantics<arbitrary>], iteration_bounds = array<i64: 2>, scalar_prefetch = 0 : i64, scratch_operands = 1 : i64, tpu.core_type = #tpu.core_type<tc>, window_params = [{pipeline_mode = #tpu.pipeline_mode<synchronous>, transform_indices = @transform_0, window_bounds = array<i64: 48, 192>}, {pipeline_mode = #tpu.pipeline_mode<synchronous>, transform_indices = @transform_1, window_bounds = array<i64: 192, 128>}, {pipeline_mode = #tpu.pipeline_mode<synchronous>, transform_indices = @transform_2, window_bounds = array<i64: 48, 128>}, {pipeline_mode = #tpu.pipeline_mode<synchronous>, transform_indices = @transform_3, window_bounds = array<i64: 8, 128>}, {pipeline_mode = #tpu.pipeline_mode<synchronous>, transform_indices = @transform_4, window_bounds = array<i64: 48, 48>}, {transform_indices = @transform_5, window_bounds = array<i64: 1, 12, 128, 32>}, {transform_indices = @transform_6, window_bounds = array<i64: 1, 12, 1, 32>}, {transform_indices = @transform_7, window_bounds = array<i64: 1, 4, 32, 128>}, {transform_indices = @transform_8, window_bounds = array<i64: 1, 8, 128>}, {transform_indices = @transform_9, window_bounds = array<i64: 1, 128, 256>}, {transform_indices = @transform_10, window_bounds = array<i64: 1, 1, 256>}, {transform_indices = @transform_11, window_bounds = array<i64: 1, 256, 128>}, {pipeline_mode = #tpu.pipeline_mode<synchronous>, transform_indices = @transform_12, window_bounds = array<i64: 2, 128>}]} {
    %c0_i32 = arith.constant 0 : i32
    %0 = arith.cmpi eq, %arg0, %c0_i32 : i32
    %1 = arith.extui %0 : i1 to i32
    %c0_i32_0 = arith.constant 0 : i32
    %2 = arith.cmpi ne, %1, %c0_i32_0 : i32
    scf.if %2 {
      %c0_172 = arith.constant 0 : index
      %c0_173 = arith.constant 0 : index
      %241 = vector.load %arg4[%c0_172, %c0_173] : memref<8x128xf32, #tpu.memory_space<vmem>>, vector<8x128xf32>
      %c0_174 = arith.constant 0 : index
      %c0_175 = arith.constant 0 : index
      %242 = vector.load %arg1[%c0_174, %c0_175] : memref<48x192xf32, #tpu.memory_space<vmem>>, vector<48x192xf32>
      %c0_176 = arith.constant 0 : index
      %c0_177 = arith.constant 0 : index
      %243 = vector.load %arg2[%c0_176, %c0_177] : memref<192x128xf32, #tpu.memory_space<vmem>>, vector<192x128xf32>
      %cst_178 = arith.constant dense<0.000000e+00> : vector<48x128xf32>
      %244 = tpu.matmul %242, %243, %cst_178 {dimension_numbers = #tpu.dot_dimension_numbers<[1], [0], [0], [1], [0, 0, 1, 1], [], []>} : vector<48x192xf32>, vector<192x128xf32>, vector<48x128xf32> -> vector<48x128xf32>
      %c0_179 = arith.constant 0 : index
      %c0_180 = arith.constant 0 : index
      %245 = vector.load %arg3[%c0_179, %c0_180] : memref<48x128xf32, #tpu.memory_space<vmem>>, vector<48x128xf32>
      %246 = arith.addf %244, %245 : vector<48x128xf32>
      %247 = vector.extract_strided_slice %241 {offsets = [0, 0], sizes = [1, 128], strides = [1, 1]} : vector<8x128xf32> to vector<1x128xf32>
      %248 = vector.extract_strided_slice %241 {offsets = [1, 0], sizes = [1, 128], strides = [1, 1]} : vector<8x128xf32> to vector<1x128xf32>
      %cst_181 = arith.constant dense<0.000000e+00> : vector<48xf32>
      %249 = vector.multi_reduction <add>, %246, %cst_181 [1] : vector<48x128xf32> to vector<48xf32>
      %250 = vector.shape_cast %249 : vector<48xf32> to vector<48x1xf32>
      %cst_182 = arith.constant 1.280000e+02 : f32
      %251 = vector.broadcast %cst_182 : f32 to vector<48x1xf32>
      %252 = arith.divf %250, %251 : vector<48x1xf32>
      %253 = vector.broadcast %252 : vector<48x1xf32> to vector<48x128xf32>
      %254 = arith.subf %246, %253 : vector<48x128xf32>
      %255 = arith.mulf %254, %254 : vector<48x128xf32>
      %cst_183 = arith.constant dense<0.000000e+00> : vector<48xf32>
      %256 = vector.multi_reduction <add>, %255, %cst_183 [1] : vector<48x128xf32> to vector<48xf32>
      %257 = vector.shape_cast %256 : vector<48xf32> to vector<48x1xf32>
      %cst_184 = arith.constant 1.280000e+02 : f32
      %258 = vector.broadcast %cst_184 : f32 to vector<48x1xf32>
      %259 = arith.divf %257, %258 : vector<48x1xf32>
      %260 = vector.broadcast %252 : vector<48x1xf32> to vector<48x128xf32>
      %261 = arith.subf %246, %260 : vector<48x128xf32>
      %cst_185 = arith.constant 9.99999974E-6 : f32
      %262 = vector.broadcast %cst_185 : f32 to vector<48x1xf32>
      %263 = arith.addf %259, %262 : vector<48x1xf32>
      %264 = math.rsqrt %263 : vector<48x1xf32>
      %265 = vector.broadcast %264 : vector<48x1xf32> to vector<48x128xf32>
      %266 = arith.mulf %261, %265 : vector<48x128xf32>
      %267 = vector.broadcast %247 : vector<1x128xf32> to vector<48x128xf32>
      %268 = arith.mulf %266, %267 : vector<48x128xf32>
      %269 = vector.broadcast %248 : vector<1x128xf32> to vector<48x128xf32>
      %270 = arith.addf %268, %269 : vector<48x128xf32>
      %c0_186 = arith.constant 0 : index
      %c0_187 = arith.constant 0 : index
      %271 = vector.load %arg14[%c0_186, %c0_187] : memref<48x128xf32, #tpu.memory_space<vmem>>, vector<48x128xf32>
      tpu.vector_store %arg14[%c0_186, %c0_187], %270 {strides = array<i32>} : memref<48x128xf32, #tpu.memory_space<vmem>>, vector<48x128xf32>,
    } else {
    }
    %c0 = arith.constant 0 : index
    %c0_1 = arith.constant 0 : index
    %3 = vector.load %arg14[%c0, %c0_1] : memref<48x128xf32, #tpu.memory_space<vmem>>, vector<48x128xf32>
    %c0_2 = arith.constant 0 : index
    %c0_3 = arith.constant 0 : index
    %c0_4 = arith.constant 0 : index
    %4 = vector.load %arg9[%c0_2, %c0_3, %c0_4] : memref<1x8x128xf32, #tpu.memory_space<vmem>>, vector<1x8x128xf32>
    %5 = vector.shape_cast %4 : vector<1x8x128xf32> to vector<8x128xf32>
    %6 = vector.extract_strided_slice %5 {offsets = [0, 0], sizes = [1, 128], strides = [1, 1]} : vector<8x128xf32> to vector<1x128xf32>
    %7 = vector.extract_strided_slice %5 {offsets = [1, 0], sizes = [1, 128], strides = [1, 1]} : vector<8x128xf32> to vector<1x128xf32>
    %cst = arith.constant dense<0.000000e+00> : vector<48xf32>
    %8 = vector.multi_reduction <add>, %3, %cst [1] : vector<48x128xf32> to vector<48xf32>
    %9 = vector.shape_cast %8 : vector<48xf32> to vector<48x1xf32>
    %cst_5 = arith.constant 1.280000e+02 : f32
    %10 = vector.broadcast %cst_5 : f32 to vector<48x1xf32>
    %11 = arith.divf %9, %10 : vector<48x1xf32>
    %12 = vector.broadcast %11 : vector<48x1xf32> to vector<48x128xf32>
    %13 = arith.subf %3, %12 : vector<48x128xf32>
    %14 = arith.mulf %13, %13 : vector<48x128xf32>
    %cst_6 = arith.constant dense<0.000000e+00> : vector<48xf32>
    %15 = vector.multi_reduction <add>, %14, %cst_6 [1] : vector<48x128xf32> to vector<48xf32>
    %16 = vector.shape_cast %15 : vector<48xf32> to vector<48x1xf32>
    %cst_7 = arith.constant 1.280000e+02 : f32
    %17 = vector.broadcast %cst_7 : f32 to vector<48x1xf32>
    %18 = arith.divf %16, %17 : vector<48x1xf32>
    %19 = vector.broadcast %11 : vector<48x1xf32> to vector<48x128xf32>
    %20 = arith.subf %3, %19 : vector<48x128xf32>
    %cst_8 = arith.constant 9.99999974E-6 : f32
    %21 = vector.broadcast %cst_8 : f32 to vector<48x1xf32>
    %22 = arith.addf %18, %21 : vector<48x1xf32>
    %23 = math.rsqrt %22 : vector<48x1xf32>
    %24 = vector.broadcast %23 : vector<48x1xf32> to vector<48x128xf32>
    %25 = arith.mulf %20, %24 : vector<48x128xf32>
    %26 = vector.broadcast %6 : vector<1x128xf32> to vector<48x128xf32>
    %27 = arith.mulf %25, %26 : vector<48x128xf32>
    %28 = vector.broadcast %7 : vector<1x128xf32> to vector<48x128xf32>
    %29 = arith.addf %27, %28 : vector<48x128xf32>
    %cst_9 = arith.constant 0.000000e+00 : f32
    %30 = vector.broadcast %cst_9 : f32 to vector<48x128xf32>
    %c0_10 = arith.constant 0 : index
    %c0_11 = arith.constant 0 : index
    %c0_12 = arith.constant 0 : index
    %c0_13 = arith.constant 0 : index
    %31 = vector.load %arg6[%c0_10, %c0_11, %c0_12, %c0_13] : memref<1x12x128x32xf32, #tpu.memory_space<vmem>>, vector<1x1x128x32xf32>
    %32 = vector.shape_cast %31 : vector<1x1x128x32xf32> to vector<128x32xf32>
    %cst_14 = arith.constant dense<0.000000e+00> : vector<48x32xf32>
    %33 = tpu.matmul %29, %32, %cst_14 {dimension_numbers = #tpu.dot_dimension_numbers<[1], [0], [0], [1], [0, 0, 1, 1], [], []>} : vector<48x128xf32>, vector<128x32xf32>, vector<48x32xf32> -> vector<48x32xf32>
    %c0_15 = arith.constant 0 : index
    %c0_16 = arith.constant 0 : index
    %c0_17 = arith.constant 0 : index
    %c0_18 = arith.constant 0 : index
    %34 = vector.load %arg7[%c0_15, %c0_16, %c0_17, %c0_18] : memref<1x12x1x32xf32, #tpu.memory_space<vmem>>, vector<1x1x1x32xf32>
    %35 = vector.shape_cast %34 : vector<1x1x1x32xf32> to vector<1x32xf32>
    %36 = vector.broadcast %35 : vector<1x32xf32> to vector<48x32xf32>
    %37 = arith.addf %33, %36 : vector<48x32xf32>
    %c0_19 = arith.constant 0 : index
    %c4 = arith.constant 4 : index
    %c0_20 = arith.constant 0 : index
    %c0_21 = arith.constant 0 : index
    %38 = vector.load %arg6[%c0_19, %c4, %c0_20, %c0_21] : memref<1x12x128x32xf32, #tpu.memory_space<vmem>>, vector<1x1x128x32xf32>
    %39 = vector.shape_cast %38 : vector<1x1x128x32xf32> to vector<128x32xf32>
    %cst_22 = arith.constant dense<0.000000e+00> : vector<48x32xf32>
    %40 = tpu.matmul %29, %39, %cst_22 {dimension_numbers = #tpu.dot_dimension_numbers<[1], [0], [0], [1], [0, 0, 1, 1], [], []>} : vector<48x128xf32>, vector<128x32xf32>, vector<48x32xf32> -> vector<48x32xf32>
    %c0_23 = arith.constant 0 : index
    %c4_24 = arith.constant 4 : index
    %c0_25 = arith.constant 0 : index
    %c0_26 = arith.constant 0 : index
    %41 = vector.load %arg7[%c0_23, %c4_24, %c0_25, %c0_26] : memref<1x12x1x32xf32, #tpu.memory_space<vmem>>, vector<1x1x1x32xf32>
    %42 = vector.shape_cast %41 : vector<1x1x1x32xf32> to vector<1x32xf32>
    %43 = vector.broadcast %42 : vector<1x32xf32> to vector<48x32xf32>
    %44 = arith.addf %40, %43 : vector<48x32xf32>
    %c0_27 = arith.constant 0 : index
    %c8 = arith.constant 8 : index
    %c0_28 = arith.constant 0 : index
    %c0_29 = arith.constant 0 : index
    %45 = vector.load %arg6[%c0_27, %c8, %c0_28, %c0_29] : memref<1x12x128x32xf32, #tpu.memory_space<vmem>>, vector<1x1x128x32xf32>
    %46 = vector.shape_cast %45 : vector<1x1x128x32xf32> to vector<128x32xf32>
    %cst_30 = arith.constant dense<0.000000e+00> : vector<48x32xf32>
    %47 = tpu.matmul %29, %46, %cst_30 {dimension_numbers = #tpu.dot_dimension_numbers<[1], [0], [0], [1], [0, 0, 1, 1], [], []>} : vector<48x128xf32>, vector<128x32xf32>, vector<48x32xf32> -> vector<48x32xf32>
    %c0_31 = arith.constant 0 : index
    %c8_32 = arith.constant 8 : index
    %c0_33 = arith.constant 0 : index
    %c0_34 = arith.constant 0 : index
    %48 = vector.load %arg7[%c0_31, %c8_32, %c0_33, %c0_34] : memref<1x12x1x32xf32, #tpu.memory_space<vmem>>, vector<1x1x1x32xf32>
    %49 = vector.shape_cast %48 : vector<1x1x1x32xf32> to vector<1x32xf32>
    %50 = vector.broadcast %49 : vector<1x32xf32> to vector<48x32xf32>
    %51 = arith.addf %47, %50 : vector<48x32xf32>
    %cst_35 = arith.constant dense<0.000000e+00> : vector<48x48xf32>
    %52 = tpu.matmul %37, %44, %cst_35 {dimension_numbers = #tpu.dot_dimension_numbers<[1], [1], [0], [0], [0, 0, 1, 0], [], []>} : vector<48x32xf32>, vector<48x32xf32>, vector<48x48xf32> -> vector<48x48xf32>
    %c0_36 = arith.constant 0 : index
    %c0_37 = arith.constant 0 : index
    %53 = vector.load %arg5[%c0_36, %c0_37] : memref<48x48xf32, #tpu.memory_space<vmem>>, vector<48x48xf32>
    %54 = arith.addf %52, %53 : vector<48x48xf32>
    %cst_38 = arith.constant dense<0xFF800000> : vector<48xf32>
    %55 = vector.multi_reduction <maximumf>, %54, %cst_38 [1] : vector<48x48xf32> to vector<48xf32>
    %56 = vector.shape_cast %55 : vector<48xf32> to vector<48x1xf32>
    %57 = vector.broadcast %56 : vector<48x1xf32> to vector<48x48xf32>
    %58 = arith.subf %54, %57 : vector<48x48xf32>
    %59 = math.exp %58 : vector<48x48xf32>
    %cst_39 = arith.constant dense<0.000000e+00> : vector<48xf32>
    %60 = vector.multi_reduction <add>, %59, %cst_39 [1] : vector<48x48xf32> to vector<48xf32>
    %61 = vector.shape_cast %60 : vector<48xf32> to vector<48x1xf32>
    %62 = tpu.reciprocal %61 {approx = true} : vector<48x1xf32> -> vector<48x1xf32>
    %63 = vector.broadcast %62 : vector<48x1xf32> to vector<48x48xf32>
    %64 = arith.mulf %59, %63 : vector<48x48xf32>
    %cst_40 = arith.constant dense<0.000000e+00> : vector<48x32xf32>
    %65 = tpu.matmul %64, %51, %cst_40 {dimension_numbers = #tpu.dot_dimension_numbers<[1], [0], [0], [1], [0, 0, 1, 1], [], []>} : vector<48x48xf32>, vector<48x32xf32>, vector<48x32xf32> -> vector<48x32xf32>
    %c0_41 = arith.constant 0 : index
    %c0_42 = arith.constant 0 : index
    %c0_43 = arith.constant 0 : index
    %c0_44 = arith.constant 0 : index
    %66 = vector.load %arg8[%c0_41, %c0_42, %c0_43, %c0_44] : memref<1x4x32x128xf32, #tpu.memory_space<vmem>>, vector<1x1x32x128xf32>
    %67 = vector.shape_cast %66 : vector<1x1x32x128xf32> to vector<32x128xf32>
    %cst_45 = arith.constant dense<0.000000e+00> : vector<48x128xf32>
    %68 = tpu.matmul %65, %67, %cst_45 {dimension_numbers = #tpu.dot_dimension_numbers<[1], [0], [0], [1], [0, 0, 1, 1], [], []>} : vector<48x32xf32>, vector<32x128xf32>, vector<48x128xf32> -> vector<48x128xf32>
    %69 = arith.addf %30, %68 : vector<48x128xf32>
    %c0_46 = arith.constant 0 : index
    %c1 = arith.constant 1 : index
    %c0_47 = arith.constant 0 : index
    %c0_48 = arith.constant 0 : index
    %70 = vector.load %arg6[%c0_46, %c1, %c0_47, %c0_48] : memref<1x12x128x32xf32, #tpu.memory_space<vmem>>, vector<1x1x128x32xf32>
    %71 = vector.shape_cast %70 : vector<1x1x128x32xf32> to vector<128x32xf32>
    %cst_49 = arith.constant dense<0.000000e+00> : vector<48x32xf32>
    %72 = tpu.matmul %29, %71, %cst_49 {dimension_numbers = #tpu.dot_dimension_numbers<[1], [0], [0], [1], [0, 0, 1, 1], [], []>} : vector<48x128xf32>, vector<128x32xf32>, vector<48x32xf32> -> vector<48x32xf32>
    %c0_50 = arith.constant 0 : index
    %c1_51 = arith.constant 1 : index
    %c0_52 = arith.constant 0 : index
    %c0_53 = arith.constant 0 : index
    %73 = vector.load %arg7[%c0_50, %c1_51, %c0_52, %c0_53] : memref<1x12x1x32xf32, #tpu.memory_space<vmem>>, vector<1x1x1x32xf32>
    %74 = vector.shape_cast %73 : vector<1x1x1x32xf32> to vector<1x32xf32>
    %75 = vector.broadcast %74 : vector<1x32xf32> to vector<48x32xf32>
    %76 = arith.addf %72, %75 : vector<48x32xf32>
    %c0_54 = arith.constant 0 : index
    %c5 = arith.constant 5 : index
    %c0_55 = arith.constant 0 : index
    %c0_56 = arith.constant 0 : index
    %77 = vector.load %arg6[%c0_54, %c5, %c0_55, %c0_56] : memref<1x12x128x32xf32, #tpu.memory_space<vmem>>, vector<1x1x128x32xf32>
    %78 = vector.shape_cast %77 : vector<1x1x128x32xf32> to vector<128x32xf32>
    %cst_57 = arith.constant dense<0.000000e+00> : vector<48x32xf32>
    %79 = tpu.matmul %29, %78, %cst_57 {dimension_numbers = #tpu.dot_dimension_numbers<[1], [0], [0], [1], [0, 0, 1, 1], [], []>} : vector<48x128xf32>, vector<128x32xf32>, vector<48x32xf32> -> vector<48x32xf32>
    %c0_58 = arith.constant 0 : index
    %c5_59 = arith.constant 5 : index
    %c0_60 = arith.constant 0 : index
    %c0_61 = arith.constant 0 : index
    %80 = vector.load %arg7[%c0_58, %c5_59, %c0_60, %c0_61] : memref<1x12x1x32xf32, #tpu.memory_space<vmem>>, vector<1x1x1x32xf32>
    %81 = vector.shape_cast %80 : vector<1x1x1x32xf32> to vector<1x32xf32>
    %82 = vector.broadcast %81 : vector<1x32xf32> to vector<48x32xf32>
    %83 = arith.addf %79, %82 : vector<48x32xf32>
    %c0_62 = arith.constant 0 : index
    %c9 = arith.constant 9 : index
    %c0_63 = arith.constant 0 : index
    %c0_64 = arith.constant 0 : index
    %84 = vector.load %arg6[%c0_62, %c9, %c0_63, %c0_64] : memref<1x12x128x32xf32, #tpu.memory_space<vmem>>, vector<1x1x128x32xf32>
    %85 = vector.shape_cast %84 : vector<1x1x128x32xf32> to vector<128x32xf32>
    %cst_65 = arith.constant dense<0.000000e+00> : vector<48x32xf32>
    %86 = tpu.matmul %29, %85, %cst_65 {dimension_numbers = #tpu.dot_dimension_numbers<[1], [0], [0], [1], [0, 0, 1, 1], [], []>} : vector<48x128xf32>, vector<128x32xf32>, vector<48x32xf32> -> vector<48x32xf32>
    %c0_66 = arith.constant 0 : index
    %c9_67 = arith.constant 9 : index
    %c0_68 = arith.constant 0 : index
    %c0_69 = arith.constant 0 : index
    %87 = vector.load %arg7[%c0_66, %c9_67, %c0_68, %c0_69] : memref<1x12x1x32xf32, #tpu.memory_space<vmem>>, vector<1x1x1x32xf32>
    %88 = vector.shape_cast %87 : vector<1x1x1x32xf32> to vector<1x32xf32>
    %89 = vector.broadcast %88 : vector<1x32xf32> to vector<48x32xf32>
    %90 = arith.addf %86, %89 : vector<48x32xf32>
    %cst_70 = arith.constant dense<0.000000e+00> : vector<48x48xf32>
    %91 = tpu.matmul %76, %83, %cst_70 {dimension_numbers = #tpu.dot_dimension_numbers<[1], [1], [0], [0], [0, 0, 1, 0], [], []>} : vector<48x32xf32>, vector<48x32xf32>, vector<48x48xf32> -> vector<48x48xf32>
    %c0_71 = arith.constant 0 : index
    %c0_72 = arith.constant 0 : index
    %92 = vector.load %arg5[%c0_71, %c0_72] : memref<48x48xf32, #tpu.memory_space<vmem>>, vector<48x48xf32>
    %93 = arith.addf %91, %92 : vector<48x48xf32>
    %cst_73 = arith.constant dense<0xFF800000> : vector<48xf32>
    %94 = vector.multi_reduction <maximumf>, %93, %cst_73 [1] : vector<48x48xf32> to vector<48xf32>
    %95 = vector.shape_cast %94 : vector<48xf32> to vector<48x1xf32>
    %96 = vector.broadcast %95 : vector<48x1xf32> to vector<48x48xf32>
    %97 = arith.subf %93, %96 : vector<48x48xf32>
    %98 = math.exp %97 : vector<48x48xf32>
    %cst_74 = arith.constant dense<0.000000e+00> : vector<48xf32>
    %99 = vector.multi_reduction <add>, %98, %cst_74 [1] : vector<48x48xf32> to vector<48xf32>
    %100 = vector.shape_cast %99 : vector<48xf32> to vector<48x1xf32>
    %101 = tpu.reciprocal %100 {approx = true} : vector<48x1xf32> -> vector<48x1xf32>
    %102 = vector.broadcast %101 : vector<48x1xf32> to vector<48x48xf32>
    %103 = arith.mulf %98, %102 : vector<48x48xf32>
    %cst_75 = arith.constant dense<0.000000e+00> : vector<48x32xf32>
    %104 = tpu.matmul %103, %90, %cst_75 {dimension_numbers = #tpu.dot_dimension_numbers<[1], [0], [0], [1], [0, 0, 1, 1], [], []>} : vector<48x48xf32>, vector<48x32xf32>, vector<48x32xf32> -> vector<48x32xf32>
    %c0_76 = arith.constant 0 : index
    %c1_77 = arith.constant 1 : index
    %c0_78 = arith.constant 0 : index
    %c0_79 = arith.constant 0 : index
    %105 = vector.load %arg8[%c0_76, %c1_77, %c0_78, %c0_79] : memref<1x4x32x128xf32, #tpu.memory_space<vmem>>, vector<1x1x32x128xf32>
    %106 = vector.shape_cast %105 : vector<1x1x32x128xf32> to vector<32x128xf32>
    %cst_80 = arith.constant dense<0.000000e+00> : vector<48x128xf32>
    %107 = tpu.matmul %104, %106, %cst_80 {dimension_numbers = #tpu.dot_dimension_numbers<[1], [0], [0], [1], [0, 0, 1, 1], [], []>} : vector<48x32xf32>, vector<32x128xf32>, vector<48x128xf32> -> vector<48x128xf32>
    %108 = arith.addf %69, %107 : vector<48x128xf32>
    %c0_81 = arith.constant 0 : index
    %c2 = arith.constant 2 : index
    %c0_82 = arith.constant 0 : index
    %c0_83 = arith.constant 0 : index
    %109 = vector.load %arg6[%c0_81, %c2, %c0_82, %c0_83] : memref<1x12x128x32xf32, #tpu.memory_space<vmem>>, vector<1x1x128x32xf32>
    %110 = vector.shape_cast %109 : vector<1x1x128x32xf32> to vector<128x32xf32>
    %cst_84 = arith.constant dense<0.000000e+00> : vector<48x32xf32>
    %111 = tpu.matmul %29, %110, %cst_84 {dimension_numbers = #tpu.dot_dimension_numbers<[1], [0], [0], [1], [0, 0, 1, 1], [], []>} : vector<48x128xf32>, vector<128x32xf32>, vector<48x32xf32> -> vector<48x32xf32>
    %c0_85 = arith.constant 0 : index
    %c2_86 = arith.constant 2 : index
    %c0_87 = arith.constant 0 : index
    %c0_88 = arith.constant 0 : index
    %112 = vector.load %arg7[%c0_85, %c2_86, %c0_87, %c0_88] : memref<1x12x1x32xf32, #tpu.memory_space<vmem>>, vector<1x1x1x32xf32>
    %113 = vector.shape_cast %112 : vector<1x1x1x32xf32> to vector<1x32xf32>
    %114 = vector.broadcast %113 : vector<1x32xf32> to vector<48x32xf32>
    %115 = arith.addf %111, %114 : vector<48x32xf32>
    %c0_89 = arith.constant 0 : index
    %c6 = arith.constant 6 : index
    %c0_90 = arith.constant 0 : index
    %c0_91 = arith.constant 0 : index
    %116 = vector.load %arg6[%c0_89, %c6, %c0_90, %c0_91] : memref<1x12x128x32xf32, #tpu.memory_space<vmem>>, vector<1x1x128x32xf32>
    %117 = vector.shape_cast %116 : vector<1x1x128x32xf32> to vector<128x32xf32>
    %cst_92 = arith.constant dense<0.000000e+00> : vector<48x32xf32>
    %118 = tpu.matmul %29, %117, %cst_92 {dimension_numbers = #tpu.dot_dimension_numbers<[1], [0], [0], [1], [0, 0, 1, 1], [], []>} : vector<48x128xf32>, vector<128x32xf32>, vector<48x32xf32> -> vector<48x32xf32>
    %c0_93 = arith.constant 0 : index
    %c6_94 = arith.constant 6 : index
    %c0_95 = arith.constant 0 : index
    %c0_96 = arith.constant 0 : index
    %119 = vector.load %arg7[%c0_93, %c6_94, %c0_95, %c0_96] : memref<1x12x1x32xf32, #tpu.memory_space<vmem>>, vector<1x1x1x32xf32>
    %120 = vector.shape_cast %119 : vector<1x1x1x32xf32> to vector<1x32xf32>
    %121 = vector.broadcast %120 : vector<1x32xf32> to vector<48x32xf32>
    %122 = arith.addf %118, %121 : vector<48x32xf32>
    %c0_97 = arith.constant 0 : index
    %c10 = arith.constant 10 : index
    %c0_98 = arith.constant 0 : index
    %c0_99 = arith.constant 0 : index
    %123 = vector.load %arg6[%c0_97, %c10, %c0_98, %c0_99] : memref<1x12x128x32xf32, #tpu.memory_space<vmem>>, vector<1x1x128x32xf32>
    %124 = vector.shape_cast %123 : vector<1x1x128x32xf32> to vector<128x32xf32>
    %cst_100 = arith.constant dense<0.000000e+00> : vector<48x32xf32>
    %125 = tpu.matmul %29, %124, %cst_100 {dimension_numbers = #tpu.dot_dimension_numbers<[1], [0], [0], [1], [0, 0, 1, 1], [], []>} : vector<48x128xf32>, vector<128x32xf32>, vector<48x32xf32> -> vector<48x32xf32>
    %c0_101 = arith.constant 0 : index
    %c10_102 = arith.constant 10 : index
    %c0_103 = arith.constant 0 : index
    %c0_104 = arith.constant 0 : index
    %126 = vector.load %arg7[%c0_101, %c10_102, %c0_103, %c0_104] : memref<1x12x1x32xf32, #tpu.memory_space<vmem>>, vector<1x1x1x32xf32>
    %127 = vector.shape_cast %126 : vector<1x1x1x32xf32> to vector<1x32xf32>
    %128 = vector.broadcast %127 : vector<1x32xf32> to vector<48x32xf32>
    %129 = arith.addf %125, %128 : vector<48x32xf32>
    %cst_105 = arith.constant dense<0.000000e+00> : vector<48x48xf32>
    %130 = tpu.matmul %115, %122, %cst_105 {dimension_numbers = #tpu.dot_dimension_numbers<[1], [1], [0], [0], [0, 0, 1, 0], [], []>} : vector<48x32xf32>, vector<48x32xf32>, vector<48x48xf32> -> vector<48x48xf32>
    %c0_106 = arith.constant 0 : index
    %c0_107 = arith.constant 0 : index
    %131 = vector.load %arg5[%c0_106, %c0_107] : memref<48x48xf32, #tpu.memory_space<vmem>>, vector<48x48xf32>
    %132 = arith.addf %130, %131 : vector<48x48xf32>
    %cst_108 = arith.constant dense<0xFF800000> : vector<48xf32>
    %133 = vector.multi_reduction <maximumf>, %132, %cst_108 [1] : vector<48x48xf32> to vector<48xf32>
    %134 = vector.shape_cast %133 : vector<48xf32> to vector<48x1xf32>
    %135 = vector.broadcast %134 : vector<48x1xf32> to vector<48x48xf32>
    %136 = arith.subf %132, %135 : vector<48x48xf32>
    %137 = math.exp %136 : vector<48x48xf32>
    %cst_109 = arith.constant dense<0.000000e+00> : vector<48xf32>
    %138 = vector.multi_reduction <add>, %137, %cst_109 [1] : vector<48x48xf32> to vector<48xf32>
    %139 = vector.shape_cast %138 : vector<48xf32> to vector<48x1xf32>
    %140 = tpu.reciprocal %139 {approx = true} : vector<48x1xf32> -> vector<48x1xf32>
    %141 = vector.broadcast %140 : vector<48x1xf32> to vector<48x48xf32>
    %142 = arith.mulf %137, %141 : vector<48x48xf32>
    %cst_110 = arith.constant dense<0.000000e+00> : vector<48x32xf32>
    %143 = tpu.matmul %142, %129, %cst_110 {dimension_numbers = #tpu.dot_dimension_numbers<[1], [0], [0], [1], [0, 0, 1, 1], [], []>} : vector<48x48xf32>, vector<48x32xf32>, vector<48x32xf32> -> vector<48x32xf32>
    %c0_111 = arith.constant 0 : index
    %c2_112 = arith.constant 2 : index
    %c0_113 = arith.constant 0 : index
    %c0_114 = arith.constant 0 : index
    %144 = vector.load %arg8[%c0_111, %c2_112, %c0_113, %c0_114] : memref<1x4x32x128xf32, #tpu.memory_space<vmem>>, vector<1x1x32x128xf32>
    %145 = vector.shape_cast %144 : vector<1x1x32x128xf32> to vector<32x128xf32>
    %cst_115 = arith.constant dense<0.000000e+00> : vector<48x128xf32>
    %146 = tpu.matmul %143, %145, %cst_115 {dimension_numbers = #tpu.dot_dimension_numbers<[1], [0], [0], [1], [0, 0, 1, 1], [], []>} : vector<48x32xf32>, vector<32x128xf32>, vector<48x128xf32> -> vector<48x128xf32>
    %147 = arith.addf %108, %146 : vector<48x128xf32>
    %c0_116 = arith.constant 0 : index
    %c3 = arith.constant 3 : index
    %c0_117 = arith.constant 0 : index
    %c0_118 = arith.constant 0 : index
    %148 = vector.load %arg6[%c0_116, %c3, %c0_117, %c0_118] : memref<1x12x128x32xf32, #tpu.memory_space<vmem>>, vector<1x1x128x32xf32>
    %149 = vector.shape_cast %148 : vector<1x1x128x32xf32> to vector<128x32xf32>
    %cst_119 = arith.constant dense<0.000000e+00> : vector<48x32xf32>
    %150 = tpu.matmul %29, %149, %cst_119 {dimension_numbers = #tpu.dot_dimension_numbers<[1], [0], [0], [1], [0, 0, 1, 1], [], []>} : vector<48x128xf32>, vector<128x32xf32>, vector<48x32xf32> -> vector<48x32xf32>
    %c0_120 = arith.constant 0 : index
    %c3_121 = arith.constant 3 : index
    %c0_122 = arith.constant 0 : index
    %c0_123 = arith.constant 0 : index
    %151 = vector.load %arg7[%c0_120, %c3_121, %c0_122, %c0_123] : memref<1x12x1x32xf32, #tpu.memory_space<vmem>>, vector<1x1x1x32xf32>
    %152 = vector.shape_cast %151 : vector<1x1x1x32xf32> to vector<1x32xf32>
    %153 = vector.broadcast %152 : vector<1x32xf32> to vector<48x32xf32>
    %154 = arith.addf %150, %153 : vector<48x32xf32>
    %c0_124 = arith.constant 0 : index
    %c7 = arith.constant 7 : index
    %c0_125 = arith.constant 0 : index
    %c0_126 = arith.constant 0 : index
    %155 = vector.load %arg6[%c0_124, %c7, %c0_125, %c0_126] : memref<1x12x128x32xf32, #tpu.memory_space<vmem>>, vector<1x1x128x32xf32>
    %156 = vector.shape_cast %155 : vector<1x1x128x32xf32> to vector<128x32xf32>
    %cst_127 = arith.constant dense<0.000000e+00> : vector<48x32xf32>
    %157 = tpu.matmul %29, %156, %cst_127 {dimension_numbers = #tpu.dot_dimension_numbers<[1], [0], [0], [1], [0, 0, 1, 1], [], []>} : vector<48x128xf32>, vector<128x32xf32>, vector<48x32xf32> -> vector<48x32xf32>
    %c0_128 = arith.constant 0 : index
    %c7_129 = arith.constant 7 : index
    %c0_130 = arith.constant 0 : index
    %c0_131 = arith.constant 0 : index
    %158 = vector.load %arg7[%c0_128, %c7_129, %c0_130, %c0_131] : memref<1x12x1x32xf32, #tpu.memory_space<vmem>>, vector<1x1x1x32xf32>
    %159 = vector.shape_cast %158 : vector<1x1x1x32xf32> to vector<1x32xf32>
    %160 = vector.broadcast %159 : vector<1x32xf32> to vector<48x32xf32>
    %161 = arith.addf %157, %160 : vector<48x32xf32>
    %c0_132 = arith.constant 0 : index
    %c11 = arith.constant 11 : index
    %c0_133 = arith.constant 0 : index
    %c0_134 = arith.constant 0 : index
    %162 = vector.load %arg6[%c0_132, %c11, %c0_133, %c0_134] : memref<1x12x128x32xf32, #tpu.memory_space<vmem>>, vector<1x1x128x32xf32>
    %163 = vector.shape_cast %162 : vector<1x1x128x32xf32> to vector<128x32xf32>
    %cst_135 = arith.constant dense<0.000000e+00> : vector<48x32xf32>
    %164 = tpu.matmul %29, %163, %cst_135 {dimension_numbers = #tpu.dot_dimension_numbers<[1], [0], [0], [1], [0, 0, 1, 1], [], []>} : vector<48x128xf32>, vector<128x32xf32>, vector<48x32xf32> -> vector<48x32xf32>
    %c0_136 = arith.constant 0 : index
    %c11_137 = arith.constant 11 : index
    %c0_138 = arith.constant 0 : index
    %c0_139 = arith.constant 0 : index
    %165 = vector.load %arg7[%c0_136, %c11_137, %c0_138, %c0_139] : memref<1x12x1x32xf32, #tpu.memory_space<vmem>>, vector<1x1x1x32xf32>
    %166 = vector.shape_cast %165 : vector<1x1x1x32xf32> to vector<1x32xf32>
    %167 = vector.broadcast %166 : vector<1x32xf32> to vector<48x32xf32>
    %168 = arith.addf %164, %167 : vector<48x32xf32>
    %cst_140 = arith.constant dense<0.000000e+00> : vector<48x48xf32>
    %169 = tpu.matmul %154, %161, %cst_140 {dimension_numbers = #tpu.dot_dimension_numbers<[1], [1], [0], [0], [0, 0, 1, 0], [], []>} : vector<48x32xf32>, vector<48x32xf32>, vector<48x48xf32> -> vector<48x48xf32>
    %c0_141 = arith.constant 0 : index
    %c0_142 = arith.constant 0 : index
    %170 = vector.load %arg5[%c0_141, %c0_142] : memref<48x48xf32, #tpu.memory_space<vmem>>, vector<48x48xf32>
    %171 = arith.addf %169, %170 : vector<48x48xf32>
    %cst_143 = arith.constant dense<0xFF800000> : vector<48xf32>
    %172 = vector.multi_reduction <maximumf>, %171, %cst_143 [1] : vector<48x48xf32> to vector<48xf32>
    %173 = vector.shape_cast %172 : vector<48xf32> to vector<48x1xf32>
    %174 = vector.broadcast %173 : vector<48x1xf32> to vector<48x48xf32>
    %175 = arith.subf %171, %174 : vector<48x48xf32>
    %176 = math.exp %175 : vector<48x48xf32>
    %cst_144 = arith.constant dense<0.000000e+00> : vector<48xf32>
    %177 = vector.multi_reduction <add>, %176, %cst_144 [1] : vector<48x48xf32> to vector<48xf32>
    %178 = vector.shape_cast %177 : vector<48xf32> to vector<48x1xf32>
    %179 = tpu.reciprocal %178 {approx = true} : vector<48x1xf32> -> vector<48x1xf32>
    %180 = vector.broadcast %179 : vector<48x1xf32> to vector<48x48xf32>
    %181 = arith.mulf %176, %180 : vector<48x48xf32>
    %cst_145 = arith.constant dense<0.000000e+00> : vector<48x32xf32>
    %182 = tpu.matmul %181, %168, %cst_145 {dimension_numbers = #tpu.dot_dimension_numbers<[1], [0], [0], [1], [0, 0, 1, 1], [], []>} : vector<48x48xf32>, vector<48x32xf32>, vector<48x32xf32> -> vector<48x32xf32>
    %c0_146 = arith.constant 0 : index
    %c3_147 = arith.constant 3 : index
    %c0_148 = arith.constant 0 : index
    %c0_149 = arith.constant 0 : index
    %183 = vector.load %arg8[%c0_146, %c3_147, %c0_148, %c0_149] : memref<1x4x32x128xf32, #tpu.memory_space<vmem>>, vector<1x1x32x128xf32>
    %184 = vector.shape_cast %183 : vector<1x1x32x128xf32> to vector<32x128xf32>
    %cst_150 = arith.constant dense<0.000000e+00> : vector<48x128xf32>
    %185 = tpu.matmul %182, %184, %cst_150 {dimension_numbers = #tpu.dot_dimension_numbers<[1], [0], [0], [1], [0, 0, 1, 1], [], []>} : vector<48x32xf32>, vector<32x128xf32>, vector<48x128xf32> -> vector<48x128xf32>
    %186 = arith.addf %147, %185 : vector<48x128xf32>
    %187 = arith.addf %3, %186 : vector<48x128xf32>
    %188 = vector.extract_strided_slice %5 {offsets = [4, 0], sizes = [1, 128], strides = [1, 1]} : vector<8x128xf32> to vector<1x128xf32>
    %189 = vector.broadcast %188 : vector<1x128xf32> to vector<48x128xf32>
    %190 = arith.addf %187, %189 : vector<48x128xf32>
    %191 = vector.extract_strided_slice %5 {offsets = [2, 0], sizes = [1, 128], strides = [1, 1]} : vector<8x128xf32> to vector<1x128xf32>
    %192 = vector.extract_strided_slice %5 {offsets = [3, 0], sizes = [1, 128], strides = [1, 1]} : vector<8x128xf32> to vector<1x128xf32>
    %cst_151 = arith.constant dense<0.000000e+00> : vector<48xf32>
    %193 = vector.multi_reduction <add>, %190, %cst_151 [1] : vector<48x128xf32> to vector<48xf32>
    %194 = vector.shape_cast %193 : vector<48xf32> to vector<48x1xf32>
    %cst_152 = arith.constant 1.280000e+02 : f32
    %195 = vector.broadcast %cst_152 : f32 to vector<48x1xf32>
    %196 = arith.divf %194, %195 : vector<48x1xf32>
    %197 = vector.broadcast %196 : vector<48x1xf32> to vector<48x128xf32>
    %198 = arith.subf %190, %197 : vector<48x128xf32>
    %199 = arith.mulf %198, %198 : vector<48x128xf32>
    %cst_153 = arith.constant dense<0.000000e+00> : vector<48xf32>
    %200 = vector.multi_reduction <add>, %199, %cst_153 [1] : vector<48x128xf32> to vector<48xf32>
    %201 = vector.shape_cast %200 : vector<48xf32> to vector<48x1xf32>
    %cst_154 = arith.constant 1.280000e+02 : f32
    %202 = vector.broadcast %cst_154 : f32 to vector<48x1xf32>
    %203 = arith.divf %201, %202 : vector<48x1xf32>
    %204 = vector.broadcast %196 : vector<48x1xf32> to vector<48x128xf32>
    %205 = arith.subf %190, %204 : vector<48x128xf32>
    %cst_155 = arith.constant 9.99999974E-6 : f32
    %206 = vector.broadcast %cst_155 : f32 to vector<48x1xf32>
    %207 = arith.addf %203, %206 : vector<48x1xf32>
    %208 = math.rsqrt %207 : vector<48x1xf32>
    %209 = vector.broadcast %208 : vector<48x1xf32> to vector<48x128xf32>
    %210 = arith.mulf %205, %209 : vector<48x128xf32>
    %211 = vector.broadcast %191 : vector<1x128xf32> to vector<48x128xf32>
    %212 = arith.mulf %210, %211 : vector<48x128xf32>
    %213 = vector.broadcast %192 : vector<1x128xf32> to vector<48x128xf32>
    %214 = arith.addf %212, %213 : vector<48x128xf32>
    %c0_156 = arith.constant 0 : index
    %c0_157 = arith.constant 0 : index
    %c0_158 = arith.constant 0 : index
    %215 = vector.load %arg10[%c0_156, %c0_157, %c0_158] : memref<1x128x256xf32, #tpu.memory_space<vmem>>, vector<1x128x256xf32>
    %216 = vector.shape_cast %215 : vector<1x128x256xf32> to vector<128x256xf32>
    %cst_159 = arith.constant dense<0.000000e+00> : vector<48x256xf32>
    %217 = tpu.matmul %214, %216, %cst_159 {dimension_numbers = #tpu.dot_dimension_numbers<[1], [0], [0], [1], [0, 0, 1, 1], [], []>} : vector<48x128xf32>, vector<128x256xf32>, vector<48x256xf32> -> vector<48x256xf32>
    %c0_160 = arith.constant 0 : index
    %c0_161 = arith.constant 0 : index
    %c0_162 = arith.constant 0 : index
    %218 = vector.load %arg11[%c0_160, %c0_161, %c0_162] : memref<1x1x256xf32, #tpu.memory_space<vmem>>, vector<1x1x256xf32>
    %219 = vector.shape_cast %218 : vector<1x1x256xf32> to vector<1x256xf32>
    %220 = vector.broadcast %219 : vector<1x256xf32> to vector<48x256xf32>
    %221 = arith.addf %217, %220 : vector<48x256xf32>
    %cst_163 = arith.constant 1.702000e+00 : f32
    %222 = vector.broadcast %cst_163 : f32 to vector<48x256xf32>
    %223 = arith.mulf %222, %221 : vector<48x256xf32>
    %224 = arith.negf %223 : vector<48x256xf32>
    %225 = math.exp %224 : vector<48x256xf32>
    %cst_164 = arith.constant 1.000000e+00 : f32
    %226 = vector.broadcast %cst_164 : f32 to vector<48x256xf32>
    %227 = arith.addf %226, %225 : vector<48x256xf32>
    %228 = arith.divf %226, %227 : vector<48x256xf32>
    %229 = arith.mulf %221, %228 : vector<48x256xf32>
    %c0_165 = arith.constant 0 : index
    %c0_166 = arith.constant 0 : index
    %c0_167 = arith.constant 0 : index
    %230 = vector.load %arg12[%c0_165, %c0_166, %c0_167] : memref<1x256x128xf32, #tpu.memory_space<vmem>>, vector<1x256x128xf32>
    %231 = vector.shape_cast %230 : vector<1x256x128xf32> to vector<256x128xf32>
    %cst_168 = arith.constant dense<0.000000e+00> : vector<48x128xf32>
    %232 = tpu.matmul %229, %231, %cst_168 {dimension_numbers = #tpu.dot_dimension_numbers<[1], [0], [0], [1], [0, 0, 1, 1], [], []>} : vector<48x256xf32>, vector<256x128xf32>, vector<48x128xf32> -> vector<48x128xf32>
    %233 = arith.addf %190, %232 : vector<48x128xf32>
    %234 = vector.extract_strided_slice %5 {offsets = [5, 0], sizes = [1, 128], strides = [1, 1]} : vector<8x128xf32> to vector<1x128xf32>
    %235 = vector.broadcast %234 : vector<1x128xf32> to vector<48x128xf32>
    %236 = arith.addf %233, %235 : vector<48x128xf32>
    %c0_169 = arith.constant 0 : index
    %c0_170 = arith.constant 0 : index
    %237 = vector.load %arg14[%c0_169, %c0_170] : memref<48x128xf32, #tpu.memory_space<vmem>>, vector<48x128xf32>
    tpu.vector_store %arg14[%c0_169, %c0_170], %236 {strides = array<i32>} : memref<48x128xf32, #tpu.memory_space<vmem>>, vector<48x128xf32>,
    %c1_i32 = arith.constant 1 : i32
    %238 = arith.cmpi eq, %arg0, %c1_i32 : i32
    %239 = arith.extui %238 : i1 to i32
    %c0_i32_171 = arith.constant 0 : i32
    %240 = arith.cmpi ne, %239, %c0_i32_171 : i32
    scf.if %240 {
      %c0_172 = arith.constant 0 : index
      %c0_173 = arith.constant 0 : index
      %241 = vector.load %arg4[%c0_172, %c0_173] : memref<8x128xf32, #tpu.memory_space<vmem>>, vector<8x128xf32>
      %242 = vector.extract_strided_slice %236 {offsets = [0, 0], sizes = [1, 128], strides = [1, 1]} : vector<48x128xf32> to vector<1x128xf32>
      %243 = vector.extract_strided_slice %236 {offsets = [24, 0], sizes = [1, 128], strides = [1, 1]} : vector<48x128xf32> to vector<1x128xf32>
      %244 = tpu.concatenate %242, %243 in 0 : vector<1x128xf32>, vector<1x128xf32> -> vector<2x128xf32>
      %245 = vector.extract_strided_slice %241 {offsets = [2, 0], sizes = [1, 128], strides = [1, 1]} : vector<8x128xf32> to vector<1x128xf32>
      %246 = vector.extract_strided_slice %241 {offsets = [3, 0], sizes = [1, 128], strides = [1, 1]} : vector<8x128xf32> to vector<1x128xf32>
      %cst_174 = arith.constant dense<0.000000e+00> : vector<2xf32>
      %247 = vector.multi_reduction <add>, %244, %cst_174 [1] : vector<2x128xf32> to vector<2xf32>
      %248 = vector.shape_cast %247 : vector<2xf32> to vector<2x1xf32>
      %cst_175 = arith.constant 1.280000e+02 : f32
      %249 = vector.broadcast %cst_175 : f32 to vector<2x1xf32>
      %250 = arith.divf %248, %249 : vector<2x1xf32>
      %251 = vector.broadcast %250 : vector<2x1xf32> to vector<2x128xf32>
      %252 = arith.subf %244, %251 : vector<2x128xf32>
      %253 = arith.mulf %252, %252 : vector<2x128xf32>
      %cst_176 = arith.constant dense<0.000000e+00> : vector<2xf32>
      %254 = vector.multi_reduction <add>, %253, %cst_176 [1] : vector<2x128xf32> to vector<2xf32>
      %255 = vector.shape_cast %254 : vector<2xf32> to vector<2x1xf32>
      %cst_177 = arith.constant 1.280000e+02 : f32
      %256 = vector.broadcast %cst_177 : f32 to vector<2x1xf32>
      %257 = arith.divf %255, %256 : vector<2x1xf32>
      %258 = vector.broadcast %250 : vector<2x1xf32> to vector<2x128xf32>
      %259 = arith.subf %244, %258 : vector<2x128xf32>
      %cst_178 = arith.constant 9.99999974E-6 : f32
      %260 = vector.broadcast %cst_178 : f32 to vector<2x1xf32>
      %261 = arith.addf %257, %260 : vector<2x1xf32>
      %262 = math.rsqrt %261 : vector<2x1xf32>
      %263 = vector.broadcast %262 : vector<2x1xf32> to vector<2x128xf32>
      %264 = arith.mulf %259, %263 : vector<2x128xf32>
      %265 = vector.broadcast %245 : vector<1x128xf32> to vector<2x128xf32>
      %266 = arith.mulf %264, %265 : vector<2x128xf32>
      %267 = vector.broadcast %246 : vector<1x128xf32> to vector<2x128xf32>
      %268 = arith.addf %266, %267 : vector<2x128xf32>
      %c0_179 = arith.constant 0 : index
      %c0_180 = arith.constant 0 : index
      %269 = vector.load %arg13[%c0_179, %c0_180] : memref<2x128xf32, #tpu.memory_space<vmem>>, vector<2x128xf32>
      tpu.vector_store %arg13[%c0_179, %c0_180], %268 {strides = array<i32>} : memref<2x128xf32, #tpu.memory_space<vmem>>, vector<2x128xf32>,
    } else {
    }
    return
  }
  func.func @transform_0(%arg0: i32) -> (i32, i32) {
    %c0_i32 = arith.constant 0 : i32
    %c0_i32_0 = arith.constant 0 : i32
    %c0_i32_1 = arith.constant 0 : i32
    return %c0_i32, %c0_i32_0 : i32, i32
  }
  func.func @transform_1(%arg0: i32) -> (i32, i32) {
    %c0_i32 = arith.constant 0 : i32
    %c0_i32_0 = arith.constant 0 : i32
    %c0_i32_1 = arith.constant 0 : i32
    return %c0_i32, %c0_i32_0 : i32, i32
  }
  func.func @transform_2(%arg0: i32) -> (i32, i32) {
    %c0_i32 = arith.constant 0 : i32
    %c0_i32_0 = arith.constant 0 : i32
    %c0_i32_1 = arith.constant 0 : i32
    return %c0_i32, %c0_i32_0 : i32, i32
  }
  func.func @transform_3(%arg0: i32) -> (i32, i32) {
    %c0_i32 = arith.constant 0 : i32
    %c0_i32_0 = arith.constant 0 : i32
    %c0_i32_1 = arith.constant 0 : i32
    return %c0_i32, %c0_i32_0 : i32, i32
  }
  func.func @transform_4(%arg0: i32) -> (i32, i32) {
    %c0_i32 = arith.constant 0 : i32
    %c0_i32_0 = arith.constant 0 : i32
    %c0_i32_1 = arith.constant 0 : i32
    return %c0_i32, %c0_i32_0 : i32, i32
  }
  func.func @transform_5(%arg0: i32) -> (i32, i32, i32, i32) {
    %c0_i32 = arith.constant 0 : i32
    %c0_i32_0 = arith.constant 0 : i32
    %c0_i32_1 = arith.constant 0 : i32
    %c0_i32_2 = arith.constant 0 : i32
    return %arg0, %c0_i32, %c0_i32_0, %c0_i32_1 : i32, i32, i32, i32
  }
  func.func @transform_6(%arg0: i32) -> (i32, i32, i32, i32) {
    %c0_i32 = arith.constant 0 : i32
    %c0_i32_0 = arith.constant 0 : i32
    %c0_i32_1 = arith.constant 0 : i32
    %c0_i32_2 = arith.constant 0 : i32
    return %arg0, %c0_i32, %c0_i32_0, %c0_i32_1 : i32, i32, i32, i32
  }
  func.func @transform_7(%arg0: i32) -> (i32, i32, i32, i32) {
    %c0_i32 = arith.constant 0 : i32
    %c0_i32_0 = arith.constant 0 : i32
    %c0_i32_1 = arith.constant 0 : i32
    %c0_i32_2 = arith.constant 0 : i32
    return %arg0, %c0_i32, %c0_i32_0, %c0_i32_1 : i32, i32, i32, i32
  }
  func.func @transform_8(%arg0: i32) -> (i32, i32, i32) {
    %c0_i32 = arith.constant 0 : i32
    %c0_i32_0 = arith.constant 0 : i32
    %c0_i32_1 = arith.constant 0 : i32
    return %arg0, %c0_i32, %c0_i32_0 : i32, i32, i32
  }
  func.func @transform_9(%arg0: i32) -> (i32, i32, i32) {
    %c0_i32 = arith.constant 0 : i32
    %c0_i32_0 = arith.constant 0 : i32
    %c0_i32_1 = arith.constant 0 : i32
    return %arg0, %c0_i32, %c0_i32_0 : i32, i32, i32
  }
  func.func @transform_10(%arg0: i32) -> (i32, i32, i32) {
    %c0_i32 = arith.constant 0 : i32
    %c0_i32_0 = arith.constant 0 : i32
    %c0_i32_1 = arith.constant 0 : i32
    return %arg0, %c0_i32, %c0_i32_0 : i32, i32, i32
  }
  func.func @transform_11(%arg0: i32) -> (i32, i32, i32) {
    %c0_i32 = arith.constant 0 : i32
    %c0_i32_0 = arith.constant 0 : i32
    %c0_i32_1 = arith.constant 0 : i32
    return %arg0, %c0_i32, %c0_i32_0 : i32, i32, i32
  }
  func.func @transform_12(%arg0: i32) -> (i32, i32) {
    %c0_i32 = arith.constant 0 : i32
    %c0_i32_0 = arith.constant 0 : i32
    %c0_i32_1 = arith.constant 0 : i32
    return %c0_i32, %c0_i32_0 : i32, i32
  }
}

</mosaic_0001>

<llo_original>
// kernel: image_encoder_forward.1
$region0: #{image_encoder_forward.1}
  #allocation0 [shape = 'u32[]', space=smem, size = 0x4, offset = 0x4, fixed_abs, tag = 'smem constant byte address 0x4 - core index']
  #allocation1 [shape = 'u32[72,128]{1,0:T(1,128)}', space=vmem, size = 0x9000, scoped, tag = 'internal scratch']
  #allocation2 [shape = 'f32[48,128]{1,0:T(8,128)}', space=vmem, size = 0x6000, scoped, tag = 'scratch operand']
  %s0 = inlined_call_operand.vmem [shape: f32[48,192], index: 0, kind: input, shape index: {}]
  %s1 = inlined_call_operand.vmem [shape: f32[192,128], index: 1, kind: input, shape index: {}]
  %s2 = inlined_call_operand.vmem [shape: f32[48,128], index: 2, kind: input, shape index: {}]
  %s3 = inlined_call_operand.vmem [shape: f32[8,128], index: 3, kind: input, shape index: {}]
  %s4 = inlined_call_operand.vmem [shape: f32[48,48], index: 4, kind: input, shape index: {}]
  %s5 = inlined_call_operand.vmem [shape: f32[2,12,128,32], index: 5, kind: input, shape index: {}]
  %s6 = inlined_call_operand.vmem [shape: f32[2,12,1,32], index: 6, kind: input, shape index: {}]
  %s7 = inlined_call_operand.vmem [shape: f32[2,4,32,128], index: 7, kind: input, shape index: {}]
  %s8 = inlined_call_operand.vmem [shape: f32[2,8,128], index: 8, kind: input, shape index: {}]
  %s9 = inlined_call_operand.vmem [shape: f32[2,128,256], index: 9, kind: input, shape index: {}]
  %s10 = inlined_call_operand.vmem [shape: f32[2,1,256], index: 10, kind: input, shape index: {}]
  %s11 = inlined_call_operand.vmem [shape: f32[2,256,128], index: 11, kind: input, shape index: {}]
  %s12 = inlined_call_operand.hbm [shape: f32[2,128], index: 12, kind: output, shape index: {}]
  %s13 = sld [smem:[#allocation0]]
  $region89: #{image_encoder_forward.1} parent=0
    _
  %s15 = ssub.s32 1, %s13
  %s16 = scalar_select 0, %s15, %s13
  $region1: #{image_encoder_forward.1} parent=0
    #allocation3 [shape = 'u8[1024]{0}', space=vmem, size = 0x400, scoped, tag = 'output window, operand 0, single buffered']
    #allocation4 [shape = 's32[2]{0}', space=sflag, size = 0x8, scoped, tag = 'scoped memory for image_encoder_forward.1']
    %17 = vsyncpa [#allocation4], 0
    loop: start=0, step=1, limit=4
    $region2: #{image_encoder_forward.1} parent=1 // loop_pre_header
      _
    $region3: #{image_encoder_forward.1} parent=1 // loop_header
      %s19 = sphi 0, %s23
      %p20 = scmp.ge.s32.totalorder %s19, 4
      %s27 = sphi 0, %s27
      %s29 = sphi 0, %s27
      %s30 = sphi 0, %s29
      %s44 = sphi 0, %s30
      %s48 = sphi 0, %s48
      %s50 = sphi 0, %s48
      %s51 = sphi 0, %s50
      %s65 = sphi 0, %s51
      %s69 = sphi 0, %s69
      %s71 = sphi 0, %s69
      %s72 = sphi 0, %s71
      %s86 = sphi 0, %s72
      %s90 = sphi 0, %s90
      %s92 = sphi 0, %s90
      %s93 = sphi 0, %s92
      %s107 = sphi 0, %s93
      %s111 = sphi 0, %s111
      %s113 = sphi 0, %s111
      %s114 = sphi 0, %s113
      %s128 = sphi 0, %s114
      %s134 = sphi 0, %s136
      %s137 = sphi 0, %s134
      %s138 = sphi 0, %s137
      %s154 = sphi 0, %s138
      %s160 = sphi 0, %s162
      %s163 = sphi 0, %s160
      %s164 = sphi 0, %s163
      %s180 = sphi 0, %s164
      %s186 = sphi 0, %s188
      %s189 = sphi 0, %s186
      %s190 = sphi 0, %s189
      %s206 = sphi 0, %s190
      %s212 = sphi 0, %s214
      %s215 = sphi 0, %s212
      %s216 = sphi 0, %s215
      %s232 = sphi 0, %s216
      %s238 = sphi 0, %s240
      %s241 = sphi 0, %s238
      %s242 = sphi 0, %s241
      %s258 = sphi 0, %s242
      %s264 = sphi 0, %s266
      %s267 = sphi 0, %s264
      %s268 = sphi 0, %s267
      %s284 = sphi 0, %s268
      %s290 = sphi 0, %s292
      %s293 = sphi 0, %s290
      %s294 = sphi 0, %s293
      %s310 = sphi 0, %s294
      %s314 = sphi 0, %s314
      %s316 = sphi 0, %s314
      %s317 = sphi 0, %s316
      %s331 = sphi 0, %s317
    $region4: #{image_encoder_forward.1} parent=1 // loop_header_branch
      %22 = sbr.rel (%p20) target = $region8
    $region5: #{image_encoder_forward.1} parent=1 // loop_body
      %s24 = ssub.s32 %s19, 1
      %s25 = ssub.s32 %s19, 2
      %s26 = sadd.s32 %s19, 1
      %s28 = sadd.s32 %s27, 1
      %p31 = scmp.eq.s32.totalorder %s19, 1
      %p32 = scmp.ne.s32.totalorder %s27, %s29
      %p33 = scmp.eq.s32.totalorder %s19, 0
      %p34 = por %p32, %p33
      %p35 = scmp.ne.s32.totalorder %s27, %s29
      %p36 = scmp.eq.s32.totalorder %s24, 1
      %p37 = por %p35, %p36
      %p38 = scmp.ne.s32.totalorder %s29, %s30
      %p39 = scmp.eq.s32.totalorder %s24, 0
      %p40 = por %p38, %p39
      %p41 = scmp.ne.s32.totalorder %s29, %s30
      %p42 = scmp.eq.s32.totalorder %s25, 1
      %p43 = por %p41, %p42
      %p45 = scmp.ne.s32.totalorder %s30, %s44
      %p46 = scmp.eq.s32.totalorder %s25, 0
      %p47 = por %p45, %p46
      %s49 = sadd.s32 %s48, 1
      %p52 = scmp.eq.s32.totalorder %s19, 1
      %p53 = scmp.ne.s32.totalorder %s48, %s50
      %p54 = scmp.eq.s32.totalorder %s19, 0
      %p55 = por %p53, %p54
      %p56 = scmp.ne.s32.totalorder %s48, %s50
      %p57 = scmp.eq.s32.totalorder %s24, 1
      %p58 = por %p56, %p57
      %p59 = scmp.ne.s32.totalorder %s50, %s51
      %p60 = scmp.eq.s32.totalorder %s24, 0
      %p61 = por %p59, %p60
      %p62 = scmp.ne.s32.totalorder %s50, %s51
      %p63 = scmp.eq.s32.totalorder %s25, 1
      %p64 = por %p62, %p63
      %p66 = scmp.ne.s32.totalorder %s51, %s65
      %p67 = scmp.eq.s32.totalorder %s25, 0
      %p68 = por %p66, %p67
      %s70 = sadd.s32 %s69, 1
      %p73 = scmp.eq.s32.totalorder %s19, 1
      %p74 = scmp.ne.s32.totalorder %s69, %s71
      %p75 = scmp.eq.s32.totalorder %s19, 0
      %p76 = por %p74, %p75
      %p77 = scmp.ne.s32.totalorder %s69, %s71
      %p78 = scmp.eq.s32.totalorder %s24, 1
      %p79 = por %p77, %p78
      %p80 = scmp.ne.s32.totalorder %s71, %s72
      %p81 = scmp.eq.s32.totalorder %s24, 0
      %p82 = por %p80, %p81
      %p83 = scmp.ne.s32.totalorder %s71, %s72
      %p84 = scmp.eq.s32.totalorder %s25, 1
      %p85 = por %p83, %p84
      %p87 = scmp.ne.s32.totalorder %s72, %s86
      %p88 = scmp.eq.s32.totalorder %s25, 0
      %p89 = por %p87, %p88
      %s91 = sadd.s32 %s90, 1
      %p94 = scmp.eq.s32.totalorder %s19, 1
      %p95 = scmp.ne.s32.totalorder %s90, %s92
      %p96 = scmp.eq.s32.totalorder %s19, 0
      %p97 = por %p95, %p96
      %p98 = scmp.ne.s32.totalorder %s90, %s92
      %p99 = scmp.eq.s32.totalorder %s24, 1
      %p100 = por %p98, %p99
      %p101 = scmp.ne.s32.totalorder %s92, %s93
      %p102 = scmp.eq.s32.totalorder %s24, 0
      %p103 = por %p101, %p102
      %p104 = scmp.ne.s32.totalorder %s92, %s93
      %p105 = scmp.eq.s32.totalorder %s25, 1
      %p106 = por %p104, %p105
      %p108 = scmp.ne.s32.totalorder %s93, %s107
      %p109 = scmp.eq.s32.totalorder %s25, 0
      %p110 = por %p108, %p109
      %s112 = sadd.s32 %s111, 1
      %p115 = scmp.eq.s32.totalorder %s19, 1
      %p116 = scmp.ne.s32.totalorder %s111, %s113
      %p117 = scmp.eq.s32.totalorder %s19, 0
      %p118 = por %p116, %p117
      %p119 = scmp.ne.s32.totalorder %s111, %s113
      %p120 = scmp.eq.s32.totalorder %s24, 1
      %p121 = por %p119, %p120
      %p122 = scmp.ne.s32.totalorder %s113, %s114
      %p123 = scmp.eq.s32.totalorder %s24, 0
      %p124 = por %p122, %p123
      %p125 = scmp.ne.s32.totalorder %s113, %s114
      %p126 = scmp.eq.s32.totalorder %s25, 1
      %p127 = por %p125, %p126
      %p129 = scmp.ne.s32.totalorder %s114, %s128
      %p130 = scmp.eq.s32.totalorder %s25, 0
      %p131 = por %p129, %p130
      %s132 = ssub.s32 %s19, %s26
      %p133 = scmp.eq.s32.totalorder %s132, 0
      %s135 = sadd.s32 %s134, 1
      %s136 = scalar_select %p133, %s134, %s135
      %p139 = pneg %p133
      %p140 = scmp.eq.s32.totalorder %s19, 1
      %p141 = por %p139, %p140
      %p142 = scmp.ne.s32.totalorder %s134, %s137
      %p143 = scmp.eq.s32.totalorder %s19, 0
      %p144 = por %p142, %p143
      %p145 = scmp.ne.s32.totalorder %s134, %s137
      %p146 = scmp.eq.s32.totalorder %s24, 1
      %p147 = por %p145, %p146
      %p148 = scmp.ne.s32.totalorder %s137, %s138
      %p149 = scmp.eq.s32.totalorder %s24, 0
      %p150 = por %p148, %p149
      %p151 = scmp.ne.s32.totalorder %s137, %s138
      %p152 = scmp.eq.s32.totalorder %s25, 1
      %p153 = por %p151, %p152
      %p155 = scmp.ne.s32.totalorder %s138, %s154
      %p156 = scmp.eq.s32.totalorder %s25, 0
      %p157 = por %p155, %p156
      %s158 = ssub.s32 %s19, %s26
      %p159 = scmp.eq.s32.totalorder %s158, 0
      %s161 = sadd.s32 %s160, 1
      %s162 = scalar_select %p159, %s160, %s161
      %p165 = pneg %p159
      %p166 = scmp.eq.s32.totalorder %s19, 1
      %p167 = por %p165, %p166
      %p168 = scmp.ne.s32.totalorder %s160, %s163
      %p169 = scmp.eq.s32.totalorder %s19, 0
      %p170 = por %p168, %p169
      %p171 = scmp.ne.s32.totalorder %s160, %s163
      %p172 = scmp.eq.s32.totalorder %s24, 1
      %p173 = por %p171, %p172
      %p174 = scmp.ne.s32.totalorder %s163, %s164
      %p175 = scmp.eq.s32.totalorder %s24, 0
      %p176 = por %p174, %p175
      %p177 = scmp.ne.s32.totalorder %s163, %s164
      %p178 = scmp.eq.s32.totalorder %s25, 1
      %p179 = por %p177, %p178
      %p181 = scmp.ne.s32.totalorder %s164, %s180
      %p182 = scmp.eq.s32.totalorder %s25, 0
      %p183 = por %p181, %p182
      %s184 = ssub.s32 %s19, %s26
      %p185 = scmp.eq.s32.totalorder %s184, 0
      %s187 = sadd.s32 %s186, 1
      %s188 = scalar_select %p185, %s186, %s187
      %p191 = pneg %p185
      %p192 = scmp.eq.s32.totalorder %s19, 1
      %p193 = por %p191, %p192
      %p194 = scmp.ne.s32.totalorder %s186, %s189
      %p195 = scmp.eq.s32.totalorder %s19, 0
      %p196 = por %p194, %p195
      %p197 = scmp.ne.s32.totalorder %s186, %s189
      %p198 = scmp.eq.s32.totalorder %s24, 1
      %p199 = por %p197, %p198
      %p200 = scmp.ne.s32.totalorder %s189, %s190
      %p201 = scmp.eq.s32.totalorder %s24, 0
      %p202 = por %p200, %p201
      %p203 = scmp.ne.s32.totalorder %s189, %s190
      %p204 = scmp.eq.s32.totalorder %s25, 1
      %p205 = por %p203, %p204
      %p207 = scmp.ne.s32.totalorder %s190, %s206
      %p208 = scmp.eq.s32.totalorder %s25, 0
      %p209 = por %p207, %p208
      %s210 = ssub.s32 %s19, %s26
      %p211 = scmp.eq.s32.totalorder %s210, 0
      %s213 = sadd.s32 %s212, 1
      %s214 = scalar_select %p211, %s212, %s213
      %p217 = pneg %p211
      %p218 = scmp.eq.s32.totalorder %s19, 1
      %p219 = por %p217, %p218
      %p220 = scmp.ne.s32.totalorder %s212, %s215
      %p221 = scmp.eq.s32.totalorder %s19, 0
      %p222 = por %p220, %p221
      %p223 = scmp.ne.s32.totalorder %s212, %s215
      %p224 = scmp.eq.s32.totalorder %s24, 1
      %p225 = por %p223, %p224
      %p226 = scmp.ne.s32.totalorder %s215, %s216
      %p227 = scmp.eq.s32.totalorder %s24, 0
      %p228 = por %p226, %p227
      %p229 = scmp.ne.s32.totalorder %s215, %s216
      %p230 = scmp.eq.s32.totalorder %s25, 1
      %p231 = por %p229, %p230
      %p233 = scmp.ne.s32.totalorder %s216, %s232
      %p234 = scmp.eq.s32.totalorder %s25, 0
      %p235 = por %p233, %p234
      %s236 = ssub.s32 %s19, %s26
      %p237 = scmp.eq.s32.totalorder %s236, 0
      %s239 = sadd.s32 %s238, 1
      %s240 = scalar_select %p237, %s238, %s239
      %p243 = pneg %p237
      %p244 = scmp.eq.s32.totalorder %s19, 1
      %p245 = por %p243, %p244
      %p246 = scmp.ne.s32.totalorder %s238, %s241
      %p247 = scmp.eq.s32.totalorder %s19, 0
      %p248 = por %p246, %p247
      %p249 = scmp.ne.s32.totalorder %s238, %s241
      %p250 = scmp.eq.s32.totalorder %s24, 1
      %p251 = por %p249, %p250
      %p252 = scmp.ne.s32.totalorder %s241, %s242
      %p253 = scmp.eq.s32.totalorder %s24, 0
      %p254 = por %p252, %p253
      %p255 = scmp.ne.s32.totalorder %s241, %s242
      %p256 = scmp.eq.s32.totalorder %s25, 1
      %p257 = por %p255, %p256
      %p259 = scmp.ne.s32.totalorder %s242, %s258
      %p260 = scmp.eq.s32.totalorder %s25, 0
      %p261 = por %p259, %p260
      %s262 = ssub.s32 %s19, %s26
      %p263 = scmp.eq.s32.totalorder %s262, 0
      %s265 = sadd.s32 %s264, 1
      %s266 = scalar_select %p263, %s264, %s265
      %p269 = pneg %p263
      %p270 = scmp.eq.s32.totalorder %s19, 1
      %p271 = por %p269, %p270
      %p272 = scmp.ne.s32.totalorder %s264, %s267
      %p273 = scmp.eq.s32.totalorder %s19, 0
      %p274 = por %p272, %p273
      %p275 = scmp.ne.s32.totalorder %s264, %s267
      %p276 = scmp.eq.s32.totalorder %s24, 1
      %p277 = por %p275, %p276
      %p278 = scmp.ne.s32.totalorder %s267, %s268
      %p279 = scmp.eq.s32.totalorder %s24, 0
      %p280 = por %p278, %p279
      %p281 = scmp.ne.s32.totalorder %s267, %s268
      %p282 = scmp.eq.s32.totalorder %s25, 1
      %p283 = por %p281, %p282
      %p285 = scmp.ne.s32.totalorder %s268, %s284
      %p286 = scmp.eq.s32.totalorder %s25, 0
      %p287 = por %p285, %p286
      %s288 = ssub.s32 %s19, %s26
      %p289 = scmp.eq.s32.totalorder %s288, 0
      %s291 = sadd.s32 %s290, 1
      %s292 = scalar_select %p289, %s290, %s291
      %p295 = pneg %p289
      %p296 = scmp.eq.s32.totalorder %s19, 1
      %p297 = por %p295, %p296
      %p298 = scmp.ne.s32.totalorder %s290, %s293
      %p299 = scmp.eq.s32.totalorder %s19, 0
      %p300 = por %p298, %p299
      %p301 = scmp.ne.s32.totalorder %s290, %s293
      %p302 = scmp.eq.s32.totalorder %s24, 1
      %p303 = por %p301, %p302
      %p304 = scmp.ne.s32.totalorder %s293, %s294
      %p305 = scmp.eq.s32.totalorder %s24, 0
      %p306 = por %p304, %p305
      %p307 = scmp.ne.s32.totalorder %s293, %s294
      %p308 = scmp.eq.s32.totalorder %s25, 1
      %p309 = por %p307, %p308
      %p311 = scmp.ne.s32.totalorder %s294, %s310
      %p312 = scmp.eq.s32.totalorder %s25, 0
      %p313 = por %p311, %p312
      %s315 = sadd.s32 %s314, 1
      %p318 = scmp.eq.s32.totalorder %s19, 1
      %p319 = scmp.ne.s32.totalorder %s314, %s316
      %p320 = scmp.eq.s32.totalorder %s19, 0
      %p321 = por %p319, %p320
      %p322 = scmp.ne.s32.totalorder %s314, %s316
      %p323 = scmp.eq.s32.totalorder %s24, 1
      %p324 = por %p322, %p323
      %p325 = scmp.ne.s32.totalorder %s316, %s317
      %p326 = scmp.eq.s32.totalorder %s24, 0
      %p327 = por %p325, %p326
      %p328 = scmp.ne.s32.totalorder %s316, %s317
      %p329 = scmp.eq.s32.totalorder %s25, 1
      %p330 = por %p328, %p329
      %p332 = scmp.ne.s32.totalorder %s317, %s331
      %p333 = scmp.eq.s32.totalorder %s25, 0
      %p334 = por %p332, %p333
      %p335 = scmp.le.s32.totalorder 1, %s19
      %p336 = scmp.lt.s32.totalorder %s19, 3
      %p337 = pnand %p335, %p336
      %p338 = pneg %p337
      // Predicated region
      $region9: #{image_encoder_forward.1} parent=5 // pred_check
        _
      $region10: #{image_encoder_forward.1} parent=5 // pred_check_branch
        %340 = sbr.rel (%p337) target = $region12
      $region11: #{image_encoder_forward.1} parent=5 // pred_region
        %s341 = ssub.s32 %s19, 1
        // Predicated region
        $region13: #{image_encoder_forward.1} parent=11 // pred_check
          %p342 = pneg %p40
        $region14: #{image_encoder_forward.1} parent=11 // pred_check_branch
          %344 = sbr.rel (%p342) target = $region16
        $region15: #{image_encoder_forward.1} parent=11 // pred_region
          _
        $region16: #{image_encoder_forward.1} parent=11 // pred_fallthru
          _
        // Predicated region
        $region17: #{image_encoder_forward.1} parent=11 // pred_check
          %p345 = pneg %p61
        $region18: #{image_encoder_forward.1} parent=11 // pred_check_branch
          %347 = sbr.rel (%p345) target = $region20
        $region19: #{image_encoder_forward.1} parent=11 // pred_region
          _
        $region20: #{image_encoder_forward.1} parent=11 // pred_fallthru
          _
        // Predicated region
        $region21: #{image_encoder_forward.1} parent=11 // pred_check
          %p348 = pneg %p82
        $region22: #{image_encoder_forward.1} parent=11 // pred_check_branch
          %350 = sbr.rel (%p348) target = $region24
        $region23: #{image_encoder_forward.1} parent=11 // pred_region
          _
        $region24: #{image_encoder_forward.1} parent=11 // pred_fallthru
          _
        // Predicated region
        $region25: #{image_encoder_forward.1} parent=11 // pred_check
          %p351 = pneg %p103
        $region26: #{image_encoder_forward.1} parent=11 // pred_check_branch
          %353 = sbr.rel (%p351) target = $region28
        $region27: #{image_encoder_forward.1} parent=11 // pred_region
          _
        $region28: #{image_encoder_forward.1} parent=11 // pred_fallthru
          _
        // Predicated region
        $region29: #{image_encoder_forward.1} parent=11 // pred_check
          %p354 = pneg %p124
        $region30: #{image_encoder_forward.1} parent=11 // pred_check_branch
          %356 = sbr.rel (%p354) target = $region32
        $region31: #{image_encoder_forward.1} parent=11 // pred_region
          _
        $region32: #{image_encoder_forward.1} parent=11 // pred_fallthru
          _
      $region12: #{image_encoder_forward.1} parent=5 // pred_fallthru
        _
      %p357 = scmp.lt.s32.totalorder %s19, 2
      // Predicated region
      $region33: #{image_encoder_forward.1} parent=5 // pred_check
        %p358 = pneg %p357
      $region34: #{image_encoder_forward.1} parent=5 // pred_check_branch
        %360 = sbr.rel (%p358) target = $region36
      $region35: #{image_encoder_forward.1} parent=5 // pred_region
        // Predicated region
        $region37: #{image_encoder_forward.1} parent=35 // pred_check
          %p361 = pneg %p144
        $region38: #{image_encoder_forward.1} parent=35 // pred_check_branch
          %363 = sbr.rel (%p361) target = $region40
        $region39: #{image_encoder_forward.1} parent=35 // pred_region
          %p364 = scmp.lt.s32.totalorder %s19, 1
          %s365 = scalar_select %p364, %s19, 1
          %s366 = smul.addr %s365, 192
          %s367 = smul.addr %s366, 8
          %s368 = scalar_lea.vmem %s5, %s367
        $region40: #{image_encoder_forward.1} parent=35 // pred_fallthru
          _
        // Predicated region
        $region41: #{image_encoder_forward.1} parent=35 // pred_check
          %p369 = pneg %p170
        $region42: #{image_encoder_forward.1} parent=35 // pred_check_branch
          %371 = sbr.rel (%p369) target = $region44
        $region43: #{image_encoder_forward.1} parent=35 // pred_region
          %p372 = scmp.lt.s32.totalorder %s19, 1
          %s373 = scalar_select %p372, %s19, 1
          %s374 = smul.addr %s373, 12
          %s375 = scalar_lea.vmem %s6, %s374
        $region44: #{image_encoder_forward.1} parent=35 // pred_fallthru
          _
        // Predicated region
        $region45: #{image_encoder_forward.1} parent=35 // pred_check
          %p376 = pneg %p196
        $region46: #{image_encoder_forward.1} parent=35 // pred_check_branch
          %378 = sbr.rel (%p376) target = $region48
        $region47: #{image_encoder_forward.1} parent=35 // pred_region
          %p379 = scmp.lt.s32.totalorder %s19, 1
          %s380 = scalar_select %p379, %s19, 1
          %s381 = smul.addr %s380, 16
          %s382 = smul.addr %s381, 8
          %s383 = scalar_lea.vmem %s7, %s382
        $region48: #{image_encoder_forward.1} parent=35 // pred_fallthru
          _
        // Predicated region
        $region49: #{image_encoder_forward.1} parent=35 // pred_check
          %p384 = pneg %p222
        $region50: #{image_encoder_forward.1} parent=35 // pred_check_branch
          %386 = sbr.rel (%p384) target = $region52
        $region51: #{image_encoder_forward.1} parent=35 // pred_region
          %p387 = scmp.lt.s32.totalorder %s19, 1
          %s388 = scalar_select %p387, %s19, 1
          %s389 = smul.addr %s388, 8
          %s390 = scalar_lea.vmem %s8, %s389
        $region52: #{image_encoder_forward.1} parent=35 // pred_fallthru
          _
        // Predicated region
        $region53: #{image_encoder_forward.1} parent=35 // pred_check
          %p391 = pneg %p248
        $region54: #{image_encoder_forward.1} parent=35 // pred_check_branch
          %393 = sbr.rel (%p391) target = $region56
        $region55: #{image_encoder_forward.1} parent=35 // pred_region
          %p394 = scmp.lt.s32.totalorder %s19, 1
          %s395 = scalar_select %p394, %s19, 1
          %s396 = smul.addr %s395, 32
          %s397 = smul.addr %s396, 8
          %s398 = scalar_lea.vmem %s9, %s397
        $region56: #{image_encoder_forward.1} parent=35 // pred_fallthru
          _
        // Predicated region
        $region57: #{image_encoder_forward.1} parent=35 // pred_check
          %p399 = pneg %p274
        $region58: #{image_encoder_forward.1} parent=35 // pred_check_branch
          %401 = sbr.rel (%p399) target = $region60
        $region59: #{image_encoder_forward.1} parent=35 // pred_region
          %p402 = scmp.lt.s32.totalorder %s19, 1
          %s403 = scalar_select %p402, %s19, 1
          %s404 = smul.addr %s403, 2
          %s405 = scalar_lea.vmem %s10, %s404
        $region60: #{image_encoder_forward.1} parent=35 // pred_fallthru
          _
        // Predicated region
        $region61: #{image_encoder_forward.1} parent=35 // pred_check
          %p406 = pneg %p300
        $region62: #{image_encoder_forward.1} parent=35 // pred_check_branch
          %408 = sbr.rel (%p406) target = $region64
        $region63: #{image_encoder_forward.1} parent=35 // pred_region
          %p409 = scmp.lt.s32.totalorder %s19, 1
          %s410 = scalar_select %p409, %s19, 1
          %s411 = smul.addr %s410, 32
          %s412 = smul.addr %s411, 8
          %s413 = scalar_lea.vmem %s11, %s412
        $region64: #{image_encoder_forward.1} parent=35 // pred_fallthru
          _
      $region36: #{image_encoder_forward.1} parent=5 // pred_fallthru
        _
      %p414 = scmp.le.s32.totalorder 1, %s19
      %p415 = scmp.lt.s32.totalorder %s19, 3
      %p416 = pnand %p414, %p415
      %p417 = pneg %p416
      // Predicated region
      $region65: #{image_encoder_forward.1} parent=5 // pred_check
        _
      $region66: #{image_encoder_forward.1} parent=5 // pred_check_branch
        %419 = sbr.rel (%p416) target = $region68
      $region67: #{image_encoder_forward.1} parent=5 // pred_region
        %s420 = ssub.s32 %s19, 1
        %p421 = pneg %p40
        %p422 = pneg %p37
        %p423 = pneg %p61
        %p424 = pneg %p58
        %p425 = pneg %p82
        %p426 = pneg %p79
        %p427 = pneg %p103
        %p428 = pneg %p100
        %p429 = pneg %p124
        %p430 = pneg %p121
        %p431 = scmp.lt.s32.totalorder %s24, 1
        %s432 = scalar_select %p431, %s24, 1
        %s433 = smul.addr %s432, 192
        %s434 = smul.addr %s433, 8
        %s435 = scalar_lea.vmem %s5, %s434
        %p436 = pneg %p150
        %p437 = pneg %p147
        %p438 = scmp.lt.s32.totalorder %s24, 1
        %s439 = scalar_select %p438, %s24, 1
        %s440 = smul.addr %s439, 12
        %s441 = scalar_lea.vmem %s6, %s440
        %p442 = pneg %p176
        %p443 = pneg %p173
        %p444 = scmp.lt.s32.totalorder %s24, 1
        %s445 = scalar_select %p444, %s24, 1
        %s446 = smul.addr %s445, 16
        %s447 = smul.addr %s446, 8
        %s448 = scalar_lea.vmem %s7, %s447
        %p449 = pneg %p202
        %p450 = pneg %p199
        %p451 = scmp.lt.s32.totalorder %s24, 1
        %s452 = scalar_select %p451, %s24, 1
        %s453 = smul.addr %s452, 8
        %s454 = scalar_lea.vmem %s8, %s453
        %p455 = pneg %p228
        %p456 = pneg %p225
        %p457 = scmp.lt.s32.totalorder %s24, 1
        %s458 = scalar_select %p457, %s24, 1
        %s459 = smul.addr %s458, 32
        %s460 = smul.addr %s459, 8
        %s461 = scalar_lea.vmem %s9, %s460
        %p462 = pneg %p254
        %p463 = pneg %p251
        %p464 = scmp.lt.s32.totalorder %s24, 1
        %s465 = scalar_select %p464, %s24, 1
        %s466 = smul.addr %s465, 2
        %s467 = scalar_lea.vmem %s10, %s466
        %p468 = pneg %p280
        %p469 = pneg %p277
        %p470 = scmp.lt.s32.totalorder %s24, 1
        %s471 = scalar_select %p470, %s24, 1
        %s472 = smul.addr %s471, 32
        %s473 = smul.addr %s472, 8
        %s474 = scalar_lea.vmem %s11, %s473
        %p475 = pneg %p306
        %p476 = pneg %p303
        %p477 = pneg %p327
        %p478 = pneg %p324
        %p479 = scmp.lt.s32.totalorder %s24, 1
        %s480 = scalar_select %p479, %s24, 1
        %s481 = smul.addr %s480, 192
        %s482 = smul.addr %s481, 8
        %s483 = scalar_lea.vmem %s5, %s482
        %p484 = scmp.lt.s32.totalorder %s24, 1
        %s485 = scalar_select %p484, %s24, 1
        %s486 = smul.addr %s485, 12
        %s487 = scalar_lea.vmem %s6, %s486
        %p488 = scmp.lt.s32.totalorder %s24, 1
        %s489 = scalar_select %p488, %s24, 1
        %s490 = smul.addr %s489, 16
        %s491 = smul.addr %s490, 8
        %s492 = scalar_lea.vmem %s7, %s491
        %p493 = scmp.lt.s32.totalorder %s24, 1
        %s494 = scalar_select %p493, %s24, 1
        %s495 = smul.addr %s494, 8
        %s496 = scalar_lea.vmem %s8, %s495
        %p497 = scmp.lt.s32.totalorder %s24, 1
        %s498 = scalar_select %p497, %s24, 1
        %s499 = smul.addr %s498, 32
        %s500 = smul.addr %s499, 8
        %s501 = scalar_lea.vmem %s9, %s500
        %p502 = scmp.lt.s32.totalorder %s24, 1
        %s503 = scalar_select %p502, %s24, 1
        %s504 = smul.addr %s503, 2
        %s505 = scalar_lea.vmem %s10, %s504
        %p506 = scmp.lt.s32.totalorder %s24, 1
        %s507 = scalar_select %p506, %s24, 1
        %s508 = smul.addr %s507, 32
        %s509 = smul.addr %s508, 8
        %s510 = scalar_lea.vmem %s11, %s509
        %p511 = scmp.eq.s32.totalorder %s24, 0
        // Predicated region
        $region69: #{image_encoder_forward.1} parent=67 // pred_check
          %p512 = pneg %p511
        $region70: #{image_encoder_forward.1} parent=67 // pred_check_branch
          %514 = sbr.rel (%p512) target = $region72
        $region71: #{image_encoder_forward.1} parent=67 // pred_region
          %v515 = vld [vmem:[%s3] sm:$0xff]
          %v516 = vld [vmem:[%s0] sm:$0xff]
          %v517 = vld [vmem:[%s0 + $0x8] sm:$0xff]
          %v518 = vld [vmem:[%s0 + $0x10] sm:$0xff]
          %v519 = vld [vmem:[%s0 + $0x18] sm:$0xff]
          %v520 = vld [vmem:[%s0 + $0x20] sm:$0xff]
          %v521 = vld [vmem:[%s0 + $0x28] sm:$0xff]
          %v522 = vld [vmem:[%s0 + $0x30] sm:$0xff]
          %v523 = vld [vmem:[%s0 + $0x38] sm:$0xff]
          %v524 = vld [vmem:[%s0 + $0x40] sm:$0xff]
          %v525 = vld [vmem:[%s0 + $0x48] sm:$0xff]
          %v526 = vld [vmem:[%s0 + $0x50] sm:$0xff]
          %v527 = vld [vmem:[%s0 + $0x58] sm:$0xff]
          %v528 = vld [vmem:[%s1] sm:$0xff]
          %v529 = vld [vmem:[%s1 + $0x8] sm:$0xff]
          %v530 = vld [vmem:[%s1 + $0x10] sm:$0xff]
          %v531 = vld [vmem:[%s1 + $0x18] sm:$0xff]
          %v532 = vld [vmem:[%s1 + $0x20] sm:$0xff]
          %v533 = vld [vmem:[%s1 + $0x28] sm:$0xff]
          %v534 = vld [vmem:[%s1 + $0x30] sm:$0xff]
          %v535 = vld [vmem:[%s1 + $0x38] sm:$0xff]
          %v536 = vld [vmem:[%s1 + $0x40] sm:$0xff]
          %v537 = vld [vmem:[%s1 + $0x48] sm:$0xff]
          %v538 = vld [vmem:[%s1 + $0x50] sm:$0xff]
          %v539 = vld [vmem:[%s1 + $0x58] sm:$0xff]
          %v540 = vld [vmem:[%s1 + $0x60] sm:$0xff]
          %v541 = vld [vmem:[%s1 + $0x68] sm:$0xff]
          %v542 = vld [vmem:[%s1 + $0x70] sm:$0xff]
          %v543 = vld [vmem:[%s1 + $0x78] sm:$0xff]
          %v544 = vld [vmem:[%s1 + $0x80] sm:$0xff]
          %v545 = vld [vmem:[%s1 + $0x88] sm:$0xff]
          %v546 = vld [vmem:[%s1 + $0x90] sm:$0xff]
          %v547 = vld [vmem:[%s1 + $0x98] sm:$0xff]
          %v548 = vld [vmem:[%s1 + $0xa0] sm:$0xff]
          %v549 = vld [vmem:[%s1 + $0xa8] sm:$0xff]
          %v550 = vld [vmem:[%s1 + $0xb0] sm:$0xff]
          %v551 = vld [vmem:[%s1 + $0xb8] sm:$0xff]
          %v552 = vld [vmem:[%s2] sm:$0xff]
          %v553 = vld [vmem:[%s2 + $0x8] sm:$0xff]
          %v554 = vld [vmem:[%s2 + $0x10] sm:$0xff]
          %v555 = vld [vmem:[%s2 + $0x18] sm:$0xff]
          %v556 = vld [vmem:[%s2 + $0x20] sm:$0xff]
          %v557 = vld [vmem:[%s2 + $0x28] sm:$0xff]
          %vm558 = vcmask 523264
          %v560 = vsel %vm558, %v517, 0
          %v563 = vsel %vm558, %v519, 0
          %v566 = vsel %vm558, %v521, 0
          %v569 = vsel %vm558, %v523, 0
          %v572 = vsel %vm558, %v525, 0
          %v575 = vsel %vm558, %v527, 0
          %577 = vmatpush.msra.mxu0 %v543
          %578 = vmatpush.msra.mxu0 %v542
          %579 = vmatpush.msra.mxu0 %v541
          %580 = vmatpush.msra.mxu0 %v540
          %581 = vmatpush.msra.mxu0 %v539
          %582 = vmatpush.msra.mxu0 %v538
          %583 = vmatpush.msra.mxu0 %v537
          %584 = vmatpush.msra.mxu0 %v536
          %585 = vmatpush.msra.mxu0 %v535
          %586 = vmatpush.msra.mxu0 %v534
          %587 = vmatpush.msra.mxu0 %v533
          %588 = vmatpush.msra.mxu0 %v532
          %589 = vmatpush.msra.mxu0 %v531
          %590 = vmatpush.msra.mxu0 %v530
          %591 = vmatpush.msra.mxu0 %v529
          %592 = vmatpush.msra.mxu0 %v528
          %593 = vmatmul.f32.gmra.mxu0 %v516
          %v594 = vpop.f32.mrf.mxu0
          %v595 = vadd.f32 %v552, %v594
          %596 = vmatmul.f32.gmra.mxu0 %v518
          %v597 = vpop.f32.mrf.mxu0
          %v598 = vadd.f32 %v553, %v597
          %599 = vmatmul.f32.gmra.mxu0 %v520
          %v600 = vpop.f32.mrf.mxu0
          %v601 = vadd.f32 %v554, %v600
          %602 = vmatmul.f32.gmra.mxu0 %v522
          %v603 = vpop.f32.mrf.mxu0
          %v604 = vadd.f32 %v555, %v603
          %605 = vmatmul.f32.gmra.mxu0 %v524
          %v606 = vpop.f32.mrf.mxu0
          %v607 = vadd.f32 %v556, %v606
          %608 = vmatmul.f32.gmra.mxu0 %v526
          %v609 = vpop.f32.mrf.mxu0
          %v610 = vadd.f32 %v557, %v609
          %611 = vdwg.mxu0
          %612 = vmatpush.msra.mxu0 0.0
          %613 = vmatpush.msra.mxu0 0.0
          %614 = vmatpush.msra.mxu0 0.0
          %615 = vmatpush.msra.mxu0 0.0
          %616 = vmatpush.msra.mxu0 0.0
          %617 = vmatpush.msra.mxu0 0.0
          %618 = vmatpush.msra.mxu0 0.0
          %619 = vmatpush.msra.mxu0 0.0
          %620 = vmatpush.msra.mxu0 %v551
          %621 = vmatpush.msra.mxu0 %v550
          %622 = vmatpush.msra.mxu0 %v549
          %623 = vmatpush.msra.mxu0 %v548
          %624 = vmatpush.msra.mxu0 %v547
          %625 = vmatpush.msra.mxu0 %v546
          %626 = vmatpush.msra.mxu0 %v545
          %627 = vmatpush.msra.mxu0 %v544
          %628 = vmatmul.f32.gmra.mxu0 %v560
          %v629 = vpop.f32.mrf.mxu0
          %v630 = vadd.f32 %v595, %v629
          %631 = vmatmul.f32.gmra.mxu0 %v563
          %v632 = vpop.f32.mrf.mxu0
          %v633 = vadd.f32 %v598, %v632
          %634 = vmatmul.f32.gmra.mxu0 %v566
          %v635 = vpop.f32.mrf.mxu0
          %v636 = vadd.f32 %v601, %v635
          %637 = vmatmul.f32.gmra.mxu0 %v569
          %v638 = vpop.f32.mrf.mxu0
          %v639 = vadd.f32 %v604, %v638
          %640 = vmatmul.f32.gmra.mxu0 %v572
          %v641 = vpop.f32.mrf.mxu0
          %v642 = vadd.f32 %v607, %v641
          %643 = vmatmul.f32.gmra.mxu0 %v575
          %v644 = vpop.f32.mrf.mxu0
          %v645 = vadd.f32 %v610, %v644
          %646 = vdwg.mxu0
          %647 = vadd.xlane.f32.xlu0 %v630
          %v648 = vpop.xlane.xlu0 %647
          %649 = vadd.xlane.f32.xlu0 %v633
          %v650 = vpop.xlane.xlu0 %649
          %651 = vadd.xlane.f32.xlu0 %v636
          %v652 = vpop.xlane.xlu0 %651
          %653 = vadd.xlane.f32.xlu0 %v639
          %v654 = vpop.xlane.xlu0 %653
          %655 = vadd.xlane.f32.xlu0 %v642
          %v656 = vpop.xlane.xlu0 %655
          %657 = vadd.xlane.f32.xlu0 %v645
          %v658 = vpop.xlane.xlu0 %657
          %v659 = vrcp.pop 128.0
          %v660 = vmul.f32 128.0, %v659
          %v661 = vsub.f32 1.0, %v660
          %v662 = vmul.f32 %v659, %v661
          %v663 = vadd.f32 %v659, %v662
          %vm664 = vweird.f32 %v659
          %v665 = vsel %vm664, %v659, %v663
          %v666 = vmul.f32 %v648, %v665
          %v667 = vmul.f32 %v650, %v665
          %v668 = vmul.f32 %v652, %v665
          %v669 = vmul.f32 %v654, %v665
          %v670 = vmul.f32 %v656, %v665
          %v671 = vmul.f32 %v658, %v665
          %v672 = vsub.f32 %v630, %v666
          %v673 = vsub.f32 %v633, %v667
          %v674 = vsub.f32 %v636, %v668
          %v675 = vsub.f32 %v639, %v669
          %v676 = vsub.f32 %v642, %v670
          %v677 = vsub.f32 %v645, %v671
          %v678 = vmul.f32 %v672, %v672
          %v679 = vmul.f32 %v673, %v673
          %v680 = vmul.f32 %v674, %v674
          %v681 = vmul.f32 %v675, %v675
          %v682 = vmul.f32 %v676, %v676
          %v683 = vmul.f32 %v677, %v677
          %684 = vadd.xlane.f32.xlu0 %v678
          %v685 = vpop.xlane.xlu0 %684
          %686 = vadd.xlane.f32.xlu0 %v679
          %v687 = vpop.xlane.xlu0 %686
          %688 = vadd.xlane.f32.xlu0 %v680
          %v689 = vpop.xlane.xlu0 %688
          %690 = vadd.xlane.f32.xlu0 %v681
          %v691 = vpop.xlane.xlu0 %690
          %692 = vadd.xlane.f32.xlu0 %v682
          %v693 = vpop.xlane.xlu0 %692
          %694 = vadd.xlane.f32.xlu0 %v683
          %v695 = vpop.xlane.xlu0 %694
          %v696 = vmul.f32 %v685, %v665
          %v697 = vmul.f32 %v687, %v665
          %v698 = vmul.f32 %v689, %v665
          %v699 = vmul.f32 %v691, %v665
          %v700 = vmul.f32 %v693, %v665
          %v701 = vmul.f32 %v695, %v665
          %v702 = vadd.f32 %v696, 1e-05
          %v703 = vadd.f32 %v697, 1e-05
          %v704 = vadd.f32 %v698, 1e-05
          %v705 = vadd.f32 %v699, 1e-05
          %v706 = vadd.f32 %v700, 1e-05
          %v707 = vadd.f32 %v701, 1e-05
          %v708 = vrsqrt.pop %v702
          %v709 = vmul.f32 %v708, %v702
          %v710 = vmul.f32 %v709, %v708
          %v711 = vmul.f32 0.5, %v710
          %v712 = vsub.f32 1.5, %v711
          %v713 = vmul.f32 %v708, %v712
          %vm714 = vweird.f32 %v702
          %vm715 = vweird.f32 %v708
          %vm716 = vmor %vm714, %vm715
          %v717 = vsel %vm716, %v708, %v713
          %v718 = vrsqrt.pop %v703
          %v719 = vmul.f32 %v718, %v703
          %v720 = vmul.f32 %v719, %v718
          %v721 = vmul.f32 0.5, %v720
          %v722 = vsub.f32 1.5, %v721
          %v723 = vmul.f32 %v718, %v722
          %vm724 = vweird.f32 %v703
          %vm725 = vweird.f32 %v718
          %vm726 = vmor %vm724, %vm725
          %v727 = vsel %vm726, %v718, %v723
          %v728 = vrsqrt.pop %v704
          %v729 = vmul.f32 %v728, %v704
          %v730 = vmul.f32 %v729, %v728
          %v731 = vmul.f32 0.5, %v730
          %v732 = vsub.f32 1.5, %v731
          %v733 = vmul.f32 %v728, %v732
          %vm734 = vweird.f32 %v704
          %vm735 = vweird.f32 %v728
          %vm736 = vmor %vm734, %vm735
          %v737 = vsel %vm736, %v728, %v733
          %v738 = vrsqrt.pop %v705
          %v739 = vmul.f32 %v738, %v705
          %v740 = vmul.f32 %v739, %v738
          %v741 = vmul.f32 0.5, %v740
          %v742 = vsub.f32 1.5, %v741
          %v743 = vmul.f32 %v738, %v742
          %vm744 = vweird.f32 %v705
          %vm745 = vweird.f32 %v738
          %vm746 = vmor %vm744, %vm745
          %v747 = vsel %vm746, %v738, %v743
          %v748 = vrsqrt.pop %v706
          %v749 = vmul.f32 %v748, %v706
          %v750 = vmul.f32 %v749, %v748
          %v751 = vmul.f32 0.5, %v750
          %v752 = vsub.f32 1.5, %v751
          %v753 = vmul.f32 %v748, %v752
          %vm754 = vweird.f32 %v706
          %vm755 = vweird.f32 %v748
          %vm756 = vmor %vm754, %vm755
          %v757 = vsel %vm756, %v748, %v753
          %v758 = vrsqrt.pop %v707
          %v759 = vmul.f32 %v758, %v707
          %v760 = vmul.f32 %v759, %v758
          %v761 = vmul.f32 0.5, %v760
          %v762 = vsub.f32 1.5, %v761
          %v763 = vmul.f32 %v758, %v762
          %vm764 = vweird.f32 %v707
          %vm765 = vweird.f32 %v758
          %vm766 = vmor %vm764, %vm765
          %v767 = vsel %vm766, %v758, %v763
          %v768 = vmul.f32 %v672, %v717
          %v769 = vmul.f32 %v673, %v727
          %v770 = vmul.f32 %v674, %v737
          %v771 = vmul.f32 %v675, %v747
          %v772 = vmul.f32 %v676, %v757
          %v773 = vmul.f32 %v677, %v767
          %v774 = vperm.slane %v515, 0
          %v775 = vmul.f32 %v768, %v774
          %v776 = vmul.f32 %v769, %v774
          %v777 = vmul.f32 %v770, %v774
          %v778 = vmul.f32 %v771, %v774
          %v779 = vmul.f32 %v772, %v774
          %v780 = vmul.f32 %v773, %v774
          %v781 = vperm.slane %v515, 1
          %v782 = vadd.f32 %v775, %v781
          %v783 = vadd.f32 %v776, %v781
          %v784 = vadd.f32 %v777, %v781
          %v785 = vadd.f32 %v778, %v781
          %v786 = vadd.f32 %v779, %v781
          %v787 = vadd.f32 %v780, %v781
          %788 = vst [vmem:[#allocation2] sm:$0xff] %v782
          %789 = vst [vmem:[#allocation2 + $0x8] sm:$0xff] %v783
          %790 = vst [vmem:[#allocation2 + $0x10] sm:$0xff] %v784
          %791 = vst [vmem:[#allocation2 + $0x18] sm:$0xff] %v785
          %792 = vst [vmem:[#allocation2 + $0x20] sm:$0xff] %v786
          %793 = vst [vmem:[#allocation2 + $0x28] sm:$0xff] %v787
        $region72: #{image_encoder_forward.1} parent=67 // pred_fallthru
          _
        %v794 = vld [vmem:[#allocation2] sm:$0xff]
        %v795 = vld [vmem:[#allocation2 + $0x8] sm:$0xff]
        %v796 = vld [vmem:[#allocation2 + $0x10] sm:$0xff]
        %v797 = vld [vmem:[#allocation2 + $0x18] sm:$0xff]
        %v798 = vld [vmem:[#allocation2 + $0x20] sm:$0xff]
        %v799 = vld [vmem:[#allocation2 + $0x28] sm:$0xff]
        %v800 = vld [vmem:[%s496] sm:$0xff]
        %801 = vadd.xlane.f32.xlu0 %v794
        %v802 = vpop.xlane.xlu0 %801
        %803 = vadd.xlane.f32.xlu0 %v795
        %v804 = vpop.xlane.xlu0 %803
        %805 = vadd.xlane.f32.xlu0 %v796
        %v806 = vpop.xlane.xlu0 %805
        %807 = vadd.xlane.f32.xlu0 %v797
        %v808 = vpop.xlane.xlu0 %807
        %809 = vadd.xlane.f32.xlu0 %v798
        %v810 = vpop.xlane.xlu0 %809
        %811 = vadd.xlane.f32.xlu0 %v799
        %v812 = vpop.xlane.xlu0 %811
        %v813 = vrcp.pop 128.0
        %v814 = vmul.f32 128.0, %v813
        %v815 = vsub.f32 1.0, %v814
        %v816 = vmul.f32 %v813, %v815
        %v817 = vadd.f32 %v813, %v816
        %vm818 = vweird.f32 %v813
        %v819 = vsel %vm818, %v813, %v817
        %v820 = vmul.f32 %v802, %v819
        %v821 = vmul.f32 %v804, %v819
        %v822 = vmul.f32 %v806, %v819
        %v823 = vmul.f32 %v808, %v819
        %v824 = vmul.f32 %v810, %v819
        %v825 = vmul.f32 %v812, %v819
        %v826 = vsub.f32 %v794, %v820
        %v827 = vsub.f32 %v795, %v821
        %v828 = vsub.f32 %v796, %v822
        %v829 = vsub.f32 %v797, %v823
        %v830 = vsub.f32 %v798, %v824
        %v831 = vsub.f32 %v799, %v825
        %v832 = vmul.f32 %v826, %v826
        %v833 = vmul.f32 %v827, %v827
        %v834 = vmul.f32 %v828, %v828
        %v835 = vmul.f32 %v829, %v829
        %v836 = vmul.f32 %v830, %v830
        %v837 = vmul.f32 %v831, %v831
        %838 = vadd.xlane.f32.xlu0 %v832
        %v839 = vpop.xlane.xlu0 %838
        %840 = vadd.xlane.f32.xlu0 %v833
        %v841 = vpop.xlane.xlu0 %840
        %842 = vadd.xlane.f32.xlu0 %v834
        %v843 = vpop.xlane.xlu0 %842
        %844 = vadd.xlane.f32.xlu0 %v835
        %v845 = vpop.xlane.xlu0 %844
        %846 = vadd.xlane.f32.xlu0 %v836
        %v847 = vpop.xlane.xlu0 %846
        %848 = vadd.xlane.f32.xlu0 %v837
        %v849 = vpop.xlane.xlu0 %848
        %v850 = vmul.f32 %v839, %v819
        %v851 = vmul.f32 %v841, %v819
        %v852 = vmul.f32 %v843, %v819
        %v853 = vmul.f32 %v845, %v819
        %v854 = vmul.f32 %v847, %v819
        %v855 = vmul.f32 %v849, %v819
        %v856 = vadd.f32 %v850, 1e-05
        %v857 = vadd.f32 %v851, 1e-05
        %v858 = vadd.f32 %v852, 1e-05
        %v859 = vadd.f32 %v853, 1e-05
        %v860 = vadd.f32 %v854, 1e-05
        %v861 = vadd.f32 %v855, 1e-05
        %v862 = vrsqrt.pop %v856
        %v863 = vmul.f32 %v862, %v856
        %v864 = vmul.f32 %v863, %v862
        %v865 = vmul.f32 0.5, %v864
        %v866 = vsub.f32 1.5, %v865
        %v867 = vmul.f32 %v862, %v866
        %vm868 = vweird.f32 %v856
        %vm869 = vweird.f32 %v862
        %vm870 = vmor %vm868, %vm869
        %v871 = vsel %vm870, %v862, %v867
        %v872 = vrsqrt.pop %v857
        %v873 = vmul.f32 %v872, %v857
        %v874 = vmul.f32 %v873, %v872
        %v875 = vmul.f32 0.5, %v874
        %v876 = vsub.f32 1.5, %v875
        %v877 = vmul.f32 %v872, %v876
        %vm878 = vweird.f32 %v857
        %vm879 = vweird.f32 %v872
        %vm880 = vmor %vm878, %vm879
        %v881 = vsel %vm880, %v872, %v877
        %v882 = vrsqrt.pop %v858
        %v883 = vmul.f32 %v882, %v858
        %v884 = vmul.f32 %v883, %v882
        %v885 = vmul.f32 0.5, %v884
        %v886 = vsub.f32 1.5, %v885
        %v887 = vmul.f32 %v882, %v886
        %vm888 = vweird.f32 %v858
        %vm889 = vweird.f32 %v882
        %vm890 = vmor %vm888, %vm889
        %v891 = vsel %vm890, %v882, %v887
        %v892 = vrsqrt.pop %v859
        %v893 = vmul.f32 %v892, %v859
        %v894 = vmul.f32 %v893, %v892
        %v895 = vmul.f32 0.5, %v894
        %v896 = vsub.f32 1.5, %v895
        %v897 = vmul.f32 %v892, %v896
        %vm898 = vweird.f32 %v859
        %vm899 = vweird.f32 %v892
        %vm900 = vmor %vm898, %vm899
        %v901 = vsel %vm900, %v892, %v897
        %v902 = vrsqrt.pop %v860
        %v903 = vmul.f32 %v902, %v860
        %v904 = vmul.f32 %v903, %v902
        %v905 = vmul.f32 0.5, %v904
        %v906 = vsub.f32 1.5, %v905
        %v907 = vmul.f32 %v902, %v906
        %vm908 = vweird.f32 %v860
        %vm909 = vweird.f32 %v902
        %vm910 = vmor %vm908, %vm909
        %v911 = vsel %vm910, %v902, %v907
        %v912 = vrsqrt.pop %v861
        %v913 = vmul.f32 %v912, %v861
        %v914 = vmul.f32 %v913, %v912
        %v915 = vmul.f32 0.5, %v914
        %v916 = vsub.f32 1.5, %v915
        %v917 = vmul.f32 %v912, %v916
        %vm918 = vweird.f32 %v861
        %vm919 = vweird.f32 %v912
        %vm920 = vmor %vm918, %vm919
        %v921 = vsel %vm920, %v912, %v917
        %v922 = vmul.f32 %v826, %v871
        %v923 = vmul.f32 %v827, %v881
        %v924 = vmul.f32 %v828, %v891
        %v925 = vmul.f32 %v829, %v901
        %v926 = vmul.f32 %v830, %v911
        %v927 = vmul.f32 %v831, %v921
        %v928 = vperm.slane %v800, 0
        %v929 = vmul.f32 %v922, %v928
        %v930 = vmul.f32 %v923, %v928
        %v931 = vmul.f32 %v924, %v928
        %v932 = vmul.f32 %v925, %v928
        %v933 = vmul.f32 %v926, %v928
        %v934 = vmul.f32 %v927, %v928
        %v935 = vperm.slane %v800, 1
        %v936 = vadd.f32 %v929, %v935
        %v937 = vadd.f32 %v930, %v935
        %v938 = vadd.f32 %v931, %v935
        %v939 = vadd.f32 %v932, %v935
        %v940 = vadd.f32 %v933, %v935
        %v941 = vadd.f32 %v934, %v935
        %v942 = vld [vmem:[%s483] sm:$0xff]
        %v943 = vld [vmem:[%s483 + $0x8] sm:$0xff]
        %v944 = vld [vmem:[%s483 + $0x10] sm:$0xff]
        %v945 = vld [vmem:[%s483 + $0x18] sm:$0xff]
        %v946 = vld [vmem:[%s483 + $0x20] sm:$0xff]
        %v947 = vld [vmem:[%s483 + $0x28] sm:$0xff]
        %v948 = vld [vmem:[%s483 + $0x30] sm:$0xff]
        %v949 = vld [vmem:[%s483 + $0x38] sm:$0xff]
        %v950 = vld [vmem:[%s483 + $0x40] sm:$0xff]
        %v951 = vld [vmem:[%s483 + $0x48] sm:$0xff]
        %v952 = vld [vmem:[%s483 + $0x50] sm:$0xff]
        %v953 = vld [vmem:[%s483 + $0x58] sm:$0xff]
        %v954 = vld [vmem:[%s483 + $0x60] sm:$0xff]
        %v955 = vld [vmem:[%s483 + $0x68] sm:$0xff]
        %v956 = vld [vmem:[%s483 + $0x70] sm:$0xff]
        %v957 = vld [vmem:[%s483 + $0x78] sm:$0xff]
        %v958 = vld [vmem:[%s487] sm:$0x1]
        %v960 = vperm.slane %v958, 0
        %962 = vmatpush.msra.mxu0 %v957
        %963 = vmatpush.msra.mxu0 %v956
        %964 = vmatpush.msra.mxu0 %v955
        %965 = vmatpush.msra.mxu0 %v954
        %966 = vmatpush.msra.mxu0 %v953
        %967 = vmatpush.msra.mxu0 %v952
        %968 = vmatpush.msra.mxu0 %v951
        %969 = vmatpush.msra.mxu0 %v950
        %970 = vmatpush.msra.mxu0 %v949
        %971 = vmatpush.msra.mxu0 %v948
        %972 = vmatpush.msra.mxu0 %v947
        %973 = vmatpush.msra.mxu0 %v946
        %974 = vmatpush.msra.mxu0 %v945
        %975 = vmatpush.msra.mxu0 %v944
        %976 = vmatpush.msra.mxu0 %v943
        %977 = vmatpush.msra.mxu0 %v942
        %978 = vmatmul.f32.gmra.mxu0 %v936
        %v979 = vpop.f32.mrf.mxu0
        %v980 = vadd.f32 %v960, %v979
        %981 = vmatmul.f32.gmra.mxu0 %v937
        %v982 = vpop.f32.mrf.mxu0
        %v983 = vadd.f32 %v960, %v982
        %984 = vmatmul.f32.gmra.mxu0 %v938
        %v985 = vpop.f32.mrf.mxu0
        %v986 = vadd.f32 %v960, %v985
        %987 = vmatmul.f32.gmra.mxu0 %v939
        %v988 = vpop.f32.mrf.mxu0
        %v989 = vadd.f32 %v960, %v988
        %990 = vmatmul.f32.gmra.mxu0 %v940
        %v991 = vpop.f32.mrf.mxu0
        %v992 = vadd.f32 %v960, %v991
        %993 = vmatmul.f32.gmra.mxu0 %v941
        %v994 = vpop.f32.mrf.mxu0
        %v995 = vadd.f32 %v960, %v994
        %996 = vdwg.mxu0
        %s997 = scalar_lea.vmem %s483, 512
        %v998 = vld [vmem:[%s997] sm:$0xff]
        %v999 = vld [vmem:[%s997 + $0x8] sm:$0xff]
        %v1000 = vld [vmem:[%s997 + $0x10] sm:$0xff]
        %v1001 = vld [vmem:[%s997 + $0x18] sm:$0xff]
        %v1002 = vld [vmem:[%s997 + $0x20] sm:$0xff]
        %v1003 = vld [vmem:[%s997 + $0x28] sm:$0xff]
        %v1004 = vld [vmem:[%s997 + $0x30] sm:$0xff]
        %v1005 = vld [vmem:[%s997 + $0x38] sm:$0xff]
        %v1006 = vld [vmem:[%s997 + $0x40] sm:$0xff]
        %v1007 = vld [vmem:[%s997 + $0x48] sm:$0xff]
        %v1008 = vld [vmem:[%s997 + $0x50] sm:$0xff]
        %v1009 = vld [vmem:[%s997 + $0x58] sm:$0xff]
        %v1010 = vld [vmem:[%s997 + $0x60] sm:$0xff]
        %v1011 = vld [vmem:[%s997 + $0x68] sm:$0xff]
        %v1012 = vld [vmem:[%s997 + $0x70] sm:$0xff]
        %v1013 = vld [vmem:[%s997 + $0x78] sm:$0xff]
        %s1014 = scalar_lea.vmem %s487, 4
        %v1015 = vld [vmem:[%s1014] sm:$0x1]
        %v1017 = vperm.slane %v1015, 0
        %1019 = vmatpush.msra.mxu0 %v1013
        %1020 = vmatpush.msra.mxu0 %v1012
        %1021 = vmatpush.msra.mxu0 %v1011
        %1022 = vmatpush.msra.mxu0 %v1010
        %1023 = vmatpush.msra.mxu0 %v1009
        %1024 = vmatpush.msra.mxu0 %v1008
        %1025 = vmatpush.msra.mxu0 %v1007
        %1026 = vmatpush.msra.mxu0 %v1006
        %1027 = vmatpush.msra.mxu0 %v1005
        %1028 = vmatpush.msra.mxu0 %v1004
        %1029 = vmatpush.msra.mxu0 %v1003
        %1030 = vmatpush.msra.mxu0 %v1002
        %1031 = vmatpush.msra.mxu0 %v1001
        %1032 = vmatpush.msra.mxu0 %v1000
        %1033 = vmatpush.msra.mxu0 %v999
        %1034 = vmatpush.msra.mxu0 %v998
        %1035 = vmatmul.f32.gmra.mxu0 %v936
        %v1036 = vpop.f32.mrf.mxu0
        %v1037 = vadd.f32 %v1017, %v1036
        %1038 = vmatmul.f32.gmra.mxu0 %v937
        %v1039 = vpop.f32.mrf.mxu0
        %v1040 = vadd.f32 %v1017, %v1039
        %1041 = vmatmul.f32.gmra.mxu0 %v938
        %v1042 = vpop.f32.mrf.mxu0
        %v1043 = vadd.f32 %v1017, %v1042
        %1044 = vmatmul.f32.gmra.mxu0 %v939
        %v1045 = vpop.f32.mrf.mxu0
        %v1046 = vadd.f32 %v1017, %v1045
        %1047 = vmatmul.f32.gmra.mxu0 %v940
        %v1048 = vpop.f32.mrf.mxu0
        %v1049 = vadd.f32 %v1017, %v1048
        %1050 = vmatmul.f32.gmra.mxu0 %v941
        %v1051 = vpop.f32.mrf.mxu0
        %v1052 = vadd.f32 %v1017, %v1051
        %1053 = vdwg.mxu0
        %s1054 = scalar_lea.vmem %s483, 1024
        %v1055 = vld [vmem:[%s1054] sm:$0xff]
        %v1056 = vld [vmem:[%s1054 + $0x8] sm:$0xff]
        %v1057 = vld [vmem:[%s1054 + $0x10] sm:$0xff]
        %v1058 = vld [vmem:[%s1054 + $0x18] sm:$0xff]
        %v1059 = vld [vmem:[%s1054 + $0x20] sm:$0xff]
        %v1060 = vld [vmem:[%s1054 + $0x28] sm:$0xff]
        %v1061 = vld [vmem:[%s1054 + $0x30] sm:$0xff]
        %v1062 = vld [vmem:[%s1054 + $0x38] sm:$0xff]
        %v1063 = vld [vmem:[%s1054 + $0x40] sm:$0xff]
        %v1064 = vld [vmem:[%s1054 + $0x48] sm:$0xff]
        %v1065 = vld [vmem:[%s1054 + $0x50] sm:$0xff]
        %v1066 = vld [vmem:[%s1054 + $0x58] sm:$0xff]
        %v1067 = vld [vmem:[%s1054 + $0x60] sm:$0xff]
        %v1068 = vld [vmem:[%s1054 + $0x68] sm:$0xff]
        %v1069 = vld [vmem:[%s1054 + $0x70] sm:$0xff]
        %v1070 = vld [vmem:[%s1054 + $0x78] sm:$0xff]
        %s1071 = scalar_lea.vmem %s487, 8
        %v1072 = vld [vmem:[%s1071] sm:$0x1]
        %v1074 = vperm.slane %v1072, 0
        %1076 = vmatpush.msra.mxu0 %v1070
        %1077 = vmatpush.msra.mxu0 %v1069
        %1078 = vmatpush.msra.mxu0 %v1068
        %1079 = vmatpush.msra.mxu0 %v1067
        %1080 = vmatpush.msra.mxu0 %v1066
        %1081 = vmatpush.msra.mxu0 %v1065
        %1082 = vmatpush.msra.mxu0 %v1064
        %1083 = vmatpush.msra.mxu0 %v1063
        %1084 = vmatpush.msra.mxu0 %v1062
        %1085 = vmatpush.msra.mxu0 %v1061
        %1086 = vmatpush.msra.mxu0 %v1060
        %1087 = vmatpush.msra.mxu0 %v1059
        %1088 = vmatpush.msra.mxu0 %v1058
        %1089 = vmatpush.msra.mxu0 %v1057
        %1090 = vmatpush.msra.mxu0 %v1056
        %1091 = vmatpush.msra.mxu0 %v1055
        %1092 = vmatmul.f32.gmra.mxu0 %v936
        %v1093 = vpop.f32.mrf.mxu0
        %v1094 = vadd.f32 %v1074, %v1093
        %1095 = vmatmul.f32.gmra.mxu0 %v937
        %v1096 = vpop.f32.mrf.mxu0
        %v1097 = vadd.f32 %v1074, %v1096
        %1098 = vmatmul.f32.gmra.mxu0 %v938
        %v1099 = vpop.f32.mrf.mxu0
        %v1100 = vadd.f32 %v1074, %v1099
        %1101 = vmatmul.f32.gmra.mxu0 %v939
        %v1102 = vpop.f32.mrf.mxu0
        %v1103 = vadd.f32 %v1074, %v1102
        %1104 = vmatmul.f32.gmra.mxu0 %v940
        %v1105 = vpop.f32.mrf.mxu0
        %v1106 = vadd.f32 %v1074, %v1105
        %1107 = vmatmul.f32.gmra.mxu0 %v941
        %v1108 = vpop.f32.mrf.mxu0
        %v1109 = vadd.f32 %v1074, %v1108
        %1110 = vdwg.mxu0
        %v1111 = vld [vmem:[%s4] sm:$0xff]
        %v1112 = vld [vmem:[%s4 + $0x8] sm:$0xff]
        %v1113 = vld [vmem:[%s4 + $0x10] sm:$0xff]
        %v1114 = vld [vmem:[%s4 + $0x18] sm:$0xff]
        %v1115 = vld [vmem:[%s4 + $0x20] sm:$0xff]
        %v1116 = vld [vmem:[%s4 + $0x28] sm:$0xff]
        %vm1117 = vcmask 261120
        %v1119 = vsel %vm1117, %v980, 0
        %v1122 = vsel %vm1117, %v983, 0
        %v1125 = vsel %vm1117, %v986, 0
        %v1128 = vsel %vm1117, %v989, 0
        %v1131 = vsel %vm1117, %v992, 0
        %v1134 = vsel %vm1117, %v995, 0
        %v1137 = vsel %vm1117, %v1037, 0
        %v1140 = vsel %vm1117, %v1040, 0
        %v1143 = vsel %vm1117, %v1043, 0
        %v1146 = vsel %vm1117, %v1046, 0
        %v1149 = vsel %vm1117, %v1049, 0
        %v1152 = vsel %vm1117, %v1052, 0
        %1154 = vmatpush.xpose.msra.mxu0 0.0
        %1155 = vmatpush.xpose.msra.mxu0 0.0
        %1156 = vmatpush.xpose.msra.mxu0 0.0
        %1157 = vmatpush.xpose.msra.mxu0 0.0
        %1158 = vmatpush.xpose.msra.mxu0 0.0
        %1159 = vmatpush.xpose.msra.mxu0 0.0
        %1160 = vmatpush.xpose.msra.mxu0 0.0
        %1161 = vmatpush.xpose.msra.mxu0 0.0
        %1162 = vmatpush.xpose.msra.mxu0 0.0
        %1163 = vmatpush.xpose.msra.mxu0 0.0
        %1164 = vmatpush.xpose.msra.mxu0 %v1152
        %1165 = vmatpush.xpose.msra.mxu0 %v1149
        %1166 = vmatpush.xpose.msra.mxu0 %v1146
        %1167 = vmatpush.xpose.msra.mxu0 %v1143
        %1168 = vmatpush.xpose.msra.mxu0 %v1140
        %1169 = vmatpush.xpose.msra.mxu0 %v1137
        %1170 = vmatmul.f32.gmra.mxu0 %v1119
        %v1171 = vpop.f32.mrf.mxu0
        %v1172 = vadd.f32 %v1111, %v1171
        %1173 = vmatmul.f32.gmra.mxu0 %v1122
        %v1174 = vpop.f32.mrf.mxu0
        %v1175 = vadd.f32 %v1112, %v1174
        %1176 = vmatmul.f32.gmra.mxu0 %v1125
        %v1177 = vpop.f32.mrf.mxu0
        %v1178 = vadd.f32 %v1113, %v1177
        %1179 = vmatmul.f32.gmra.mxu0 %v1128
        %v1180 = vpop.f32.mrf.mxu0
        %v1181 = vadd.f32 %v1114, %v1180
        %1182 = vmatmul.f32.gmra.mxu0 %v1131
        %v1183 = vpop.f32.mrf.mxu0
        %v1184 = vadd.f32 %v1115, %v1183
        %1185 = vmatmul.f32.gmra.mxu0 %v1134
        %v1186 = vpop.f32.mrf.mxu0
        %v1187 = vadd.f32 %v1116, %v1186
        %1188 = vdwg.mxu0
        %vm1189 = vcmask 392192
        %v1190 = vsel %vm1189, %v1172, -inf
        %1191 = vmax.xlane.f32.xlu0 %v1190
        %v1192 = vpop.xlane.xlu0 %1191
        %v1193 = vsel %vm1189, %v1175, -inf
        %1194 = vmax.xlane.f32.xlu0 %v1193
        %v1195 = vpop.xlane.xlu0 %1194
        %v1196 = vsel %vm1189, %v1178, -inf
        %1197 = vmax.xlane.f32.xlu0 %v1196
        %v1198 = vpop.xlane.xlu0 %1197
        %v1199 = vsel %vm1189, %v1181, -inf
        %1200 = vmax.xlane.f32.xlu0 %v1199
        %v1201 = vpop.xlane.xlu0 %1200
        %v1202 = vsel %vm1189, %v1184, -inf
        %1203 = vmax.xlane.f32.xlu0 %v1202
        %v1204 = vpop.xlane.xlu0 %1203
        %v1205 = vsel %vm1189, %v1187, -inf
        %1206 = vmax.xlane.f32.xlu0 %v1205
        %v1207 = vpop.xlane.xlu0 %1206
        %v1208 = vsub.f32 %v1172, %v1192
        %v1209 = vsub.f32 %v1175, %v1195
        %v1210 = vsub.f32 %v1178, %v1198
        %v1211 = vsub.f32 %v1181, %v1201
        %v1212 = vsub.f32 %v1184, %v1204
        %v1213 = vsub.f32 %v1187, %v1207
        %v1214 = vmul.f32 %v1208, 1.442695
        %v1215 = vpow.pop %v1214
        %v1216 = vmul.f32 %v1209, 1.442695
        %v1217 = vpow.pop %v1216
        %v1218 = vmul.f32 %v1210, 1.442695
        %v1219 = vpow.pop %v1218
        %v1220 = vmul.f32 %v1211, 1.442695
        %v1221 = vpow.pop %v1220
        %v1222 = vmul.f32 %v1212, 1.442695
        %v1223 = vpow.pop %v1222
        %v1224 = vmul.f32 %v1213, 1.442695
        %v1225 = vpow.pop %v1224
        %v1226 = vsel %vm1189, %v1215, 0.0
        %1227 = vadd.xlane.f32.xlu0 %v1226
        %v1228 = vpop.xlane.xlu0 %1227
        %v1229 = vsel %vm1189, %v1217, 0.0
        %1230 = vadd.xlane.f32.xlu0 %v1229
        %v1231 = vpop.xlane.xlu0 %1230
        %v1232 = vsel %vm1189, %v1219, 0.0
        %1233 = vadd.xlane.f32.xlu0 %v1232
        %v1234 = vpop.xlane.xlu0 %1233
        %v1235 = vsel %vm1189, %v1221, 0.0
        %1236 = vadd.xlane.f32.xlu0 %v1235
        %v1237 = vpop.xlane.xlu0 %1236
        %v1238 = vsel %vm1189, %v1223, 0.0
        %1239 = vadd.xlane.f32.xlu0 %v1238
        %v1240 = vpop.xlane.xlu0 %1239
        %v1241 = vsel %vm1189, %v1225, 0.0
        %1242 = vadd.xlane.f32.xlu0 %v1241
        %v1243 = vpop.xlane.xlu0 %1242
        %v1244 = vrcp.pop %v1228
        %v1245 = vrcp.pop %v1231
        %v1246 = vrcp.pop %v1234
        %v1247 = vrcp.pop %v1237
        %v1248 = vrcp.pop %v1240
        %v1249 = vrcp.pop %v1243
        %v1250 = vmul.f32 %v1215, %v1244
        %v1251 = vmul.f32 %v1217, %v1245
        %v1252 = vmul.f32 %v1219, %v1246
        %v1253 = vmul.f32 %v1221, %v1247
        %v1254 = vmul.f32 %v1223, %v1248
        %v1255 = vmul.f32 %v1225, %v1249
        %v1257 = vsel %vm1189, %v1250, 0
        %v1260 = vsel %vm1189, %v1251, 0
        %v1263 = vsel %vm1189, %v1252, 0
        %v1266 = vsel %vm1189, %v1253, 0
        %v1269 = vsel %vm1189, %v1254, 0
        %v1272 = vsel %vm1189, %v1255, 0
        %1274 = vmatpush.msra.mxu0 0.0
        %1275 = vmatpush.msra.mxu0 0.0
        %1276 = vmatpush.msra.mxu0 0.0
        %1277 = vmatpush.msra.mxu0 0.0
        %1278 = vmatpush.msra.mxu0 0.0
        %1279 = vmatpush.msra.mxu0 0.0
        %1280 = vmatpush.msra.mxu0 0.0
        %1281 = vmatpush.msra.mxu0 0.0
        %1282 = vmatpush.msra.mxu0 0.0
        %1283 = vmatpush.msra.mxu0 0.0
        %1284 = vmatpush.msra.mxu0 %v1109
        %1285 = vmatpush.msra.mxu0 %v1106
        %1286 = vmatpush.msra.mxu0 %v1103
        %1287 = vmatpush.msra.mxu0 %v1100
        %1288 = vmatpush.msra.mxu0 %v1097
        %1289 = vmatpush.msra.mxu0 %v1094
        %1290 = vmatmul.f32.gmra.mxu0 %v1257
        %v1291 = vpop.f32.mrf.mxu0
        %v1292 = vadd.f32 0.0, %v1291
        %1293 = vmatmul.f32.gmra.mxu0 %v1260
        %v1294 = vpop.f32.mrf.mxu0
        %v1295 = vadd.f32 0.0, %v1294
        %1296 = vmatmul.f32.gmra.mxu0 %v1263
        %v1297 = vpop.f32.mrf.mxu0
        %v1298 = vadd.f32 0.0, %v1297
        %1299 = vmatmul.f32.gmra.mxu0 %v1266
        %v1300 = vpop.f32.mrf.mxu0
        %v1301 = vadd.f32 0.0, %v1300
        %1302 = vmatmul.f32.gmra.mxu0 %v1269
        %v1303 = vpop.f32.mrf.mxu0
        %v1304 = vadd.f32 0.0, %v1303
        %1305 = vmatmul.f32.gmra.mxu0 %v1272
        %v1306 = vpop.f32.mrf.mxu0
        %v1307 = vadd.f32 0.0, %v1306
        %1308 = vdwg.mxu0
        %v1309 = vld [vmem:[%s492] sm:$0xff]
        %v1310 = vld [vmem:[%s492 + $0x8] sm:$0xff]
        %v1311 = vld [vmem:[%s492 + $0x10] sm:$0xff]
        %v1312 = vld [vmem:[%s492 + $0x18] sm:$0xff]
        %s1313 = scalar_lea.vmem %s483, 128
        %v1314 = vld [vmem:[%s1313] sm:$0xff]
        %v1315 = vld [vmem:[%s1313 + $0x8] sm:$0xff]
        %v1316 = vld [vmem:[%s1313 + $0x10] sm:$0xff]
        %v1317 = vld [vmem:[%s1313 + $0x18] sm:$0xff]
        %v1318 = vld [vmem:[%s1313 + $0x20] sm:$0xff]
        %v1319 = vld [vmem:[%s1313 + $0x28] sm:$0xff]
        %v1320 = vld [vmem:[%s1313 + $0x30] sm:$0xff]
        %v1321 = vld [vmem:[%s1313 + $0x38] sm:$0xff]
        %v1322 = vld [vmem:[%s1313 + $0x40] sm:$0xff]
        %v1323 = vld [vmem:[%s1313 + $0x48] sm:$0xff]
        %v1324 = vld [vmem:[%s1313 + $0x50] sm:$0xff]
        %v1325 = vld [vmem:[%s1313 + $0x58] sm:$0xff]
        %v1326 = vld [vmem:[%s1313 + $0x60] sm:$0xff]
        %v1327 = vld [vmem:[%s1313 + $0x68] sm:$0xff]
        %v1328 = vld [vmem:[%s1313 + $0x70] sm:$0xff]
        %v1329 = vld [vmem:[%s1313 + $0x78] sm:$0xff]
        %s1330 = scalar_lea.vmem %s487, 1
        %v1331 = vld [vmem:[%s1330] sm:$0x1]
        %v1333 = vperm.slane %v1331, 0
        %1335 = vmatpush.msra.mxu0 %v1329
        %1336 = vmatpush.msra.mxu0 %v1328
        %1337 = vmatpush.msra.mxu0 %v1327
        %1338 = vmatpush.msra.mxu0 %v1326
        %1339 = vmatpush.msra.mxu0 %v1325
        %1340 = vmatpush.msra.mxu0 %v1324
        %1341 = vmatpush.msra.mxu0 %v1323
        %1342 = vmatpush.msra.mxu0 %v1322
        %1343 = vmatpush.msra.mxu0 %v1321
        %1344 = vmatpush.msra.mxu0 %v1320
        %1345 = vmatpush.msra.mxu0 %v1319
        %1346 = vmatpush.msra.mxu0 %v1318
        %1347 = vmatpush.msra.mxu0 %v1317
        %1348 = vmatpush.msra.mxu0 %v1316
        %1349 = vmatpush.msra.mxu0 %v1315
        %1350 = vmatpush.msra.mxu0 %v1314
        %1351 = vmatmul.f32.gmra.mxu0 %v936
        %v1352 = vpop.f32.mrf.mxu0
        %v1353 = vadd.f32 %v1333, %v1352
        %1354 = vmatmul.f32.gmra.mxu0 %v937
        %v1355 = vpop.f32.mrf.mxu0
        %v1356 = vadd.f32 %v1333, %v1355
        %1357 = vmatmul.f32.gmra.mxu0 %v938
        %v1358 = vpop.f32.mrf.mxu0
        %v1359 = vadd.f32 %v1333, %v1358
        %1360 = vmatmul.f32.gmra.mxu0 %v939
        %v1361 = vpop.f32.mrf.mxu0
        %v1362 = vadd.f32 %v1333, %v1361
        %1363 = vmatmul.f32.gmra.mxu0 %v940
        %v1364 = vpop.f32.mrf.mxu0
        %v1365 = vadd.f32 %v1333, %v1364
        %1366 = vmatmul.f32.gmra.mxu0 %v941
        %v1367 = vpop.f32.mrf.mxu0
        %v1368 = vadd.f32 %v1333, %v1367
        %1369 = vdwg.mxu0
        %s1370 = scalar_lea.vmem %s483, 640
        %v1371 = vld [vmem:[%s1370] sm:$0xff]
        %v1372 = vld [vmem:[%s1370 + $0x8] sm:$0xff]
        %v1373 = vld [vmem:[%s1370 + $0x10] sm:$0xff]
        %v1374 = vld [vmem:[%s1370 + $0x18] sm:$0xff]
        %v1375 = vld [vmem:[%s1370 + $0x20] sm:$0xff]
        %v1376 = vld [vmem:[%s1370 + $0x28] sm:$0xff]
        %v1377 = vld [vmem:[%s1370 + $0x30] sm:$0xff]
        %v1378 = vld [vmem:[%s1370 + $0x38] sm:$0xff]
        %v1379 = vld [vmem:[%s1370 + $0x40] sm:$0xff]
        %v1380 = vld [vmem:[%s1370 + $0x48] sm:$0xff]
        %v1381 = vld [vmem:[%s1370 + $0x50] sm:$0xff]
        %v1382 = vld [vmem:[%s1370 + $0x58] sm:$0xff]
        %v1383 = vld [vmem:[%s1370 + $0x60] sm:$0xff]
        %v1384 = vld [vmem:[%s1370 + $0x68] sm:$0xff]
        %v1385 = vld [vmem:[%s1370 + $0x70] sm:$0xff]
        %v1386 = vld [vmem:[%s1370 + $0x78] sm:$0xff]
        %s1387 = scalar_lea.vmem %s487, 5
        %v1388 = vld [vmem:[%s1387] sm:$0x1]
        %v1390 = vperm.slane %v1388, 0
        %1392 = vmatpush.msra.mxu0 %v1386
        %1393 = vmatpush.msra.mxu0 %v1385
        %1394 = vmatpush.msra.mxu0 %v1384
        %1395 = vmatpush.msra.mxu0 %v1383
        %1396 = vmatpush.msra.mxu0 %v1382
        %1397 = vmatpush.msra.mxu0 %v1381
        %1398 = vmatpush.msra.mxu0 %v1380
        %1399 = vmatpush.msra.mxu0 %v1379
        %1400 = vmatpush.msra.mxu0 %v1378
        %1401 = vmatpush.msra.mxu0 %v1377
        %1402 = vmatpush.msra.mxu0 %v1376
        %1403 = vmatpush.msra.mxu0 %v1375
        %1404 = vmatpush.msra.mxu0 %v1374
        %1405 = vmatpush.msra.mxu0 %v1373
        %1406 = vmatpush.msra.mxu0 %v1372
        %1407 = vmatpush.msra.mxu0 %v1371
        %1408 = vmatmul.f32.gmra.mxu0 %v936
        %v1409 = vpop.f32.mrf.mxu0
        %v1410 = vadd.f32 %v1390, %v1409
        %1411 = vmatmul.f32.gmra.mxu0 %v937
        %v1412 = vpop.f32.mrf.mxu0
        %v1413 = vadd.f32 %v1390, %v1412
        %1414 = vmatmul.f32.gmra.mxu0 %v938
        %v1415 = vpop.f32.mrf.mxu0
        %v1416 = vadd.f32 %v1390, %v1415
        %1417 = vmatmul.f32.gmra.mxu0 %v939
        %v1418 = vpop.f32.mrf.mxu0
        %v1419 = vadd.f32 %v1390, %v1418
        %1420 = vmatmul.f32.gmra.mxu0 %v940
        %v1421 = vpop.f32.mrf.mxu0
        %v1422 = vadd.f32 %v1390, %v1421
        %1423 = vmatmul.f32.gmra.mxu0 %v941
        %v1424 = vpop.f32.mrf.mxu0
        %v1425 = vadd.f32 %v1390, %v1424
        %1426 = vdwg.mxu0
        %s1427 = scalar_lea.vmem %s483, 1152
        %v1428 = vld [vmem:[%s1427] sm:$0xff]
        %v1429 = vld [vmem:[%s1427 + $0x8] sm:$0xff]
        %v1430 = vld [vmem:[%s1427 + $0x10] sm:$0xff]
        %v1431 = vld [vmem:[%s1427 + $0x18] sm:$0xff]
        %v1432 = vld [vmem:[%s1427 + $0x20] sm:$0xff]
        %v1433 = vld [vmem:[%s1427 + $0x28] sm:$0xff]
        %v1434 = vld [vmem:[%s1427 + $0x30] sm:$0xff]
        %v1435 = vld [vmem:[%s1427 + $0x38] sm:$0xff]
        %v1436 = vld [vmem:[%s1427 + $0x40] sm:$0xff]
        %v1437 = vld [vmem:[%s1427 + $0x48] sm:$0xff]
        %v1438 = vld [vmem:[%s1427 + $0x50] sm:$0xff]
        %v1439 = vld [vmem:[%s1427 + $0x58] sm:$0xff]
        %v1440 = vld [vmem:[%s1427 + $0x60] sm:$0xff]
        %v1441 = vld [vmem:[%s1427 + $0x68] sm:$0xff]
        %v1442 = vld [vmem:[%s1427 + $0x70] sm:$0xff]
        %v1443 = vld [vmem:[%s1427 + $0x78] sm:$0xff]
        %s1444 = scalar_lea.vmem %s487, 9
        %v1445 = vld [vmem:[%s1444] sm:$0x1]
        %v1447 = vperm.slane %v1445, 0
        %1449 = vmatpush.msra.mxu0 %v1443
        %1450 = vmatpush.msra.mxu0 %v1442
        %1451 = vmatpush.msra.mxu0 %v1441
        %1452 = vmatpush.msra.mxu0 %v1440
        %1453 = vmatpush.msra.mxu0 %v1439
        %1454 = vmatpush.msra.mxu0 %v1438
        %1455 = vmatpush.msra.mxu0 %v1437
        %1456 = vmatpush.msra.mxu0 %v1436
        %1457 = vmatpush.msra.mxu0 %v1435
        %1458 = vmatpush.msra.mxu0 %v1434
        %1459 = vmatpush.msra.mxu0 %v1433
        %1460 = vmatpush.msra.mxu0 %v1432
        %1461 = vmatpush.msra.mxu0 %v1431
        %1462 = vmatpush.msra.mxu0 %v1430
        %1463 = vmatpush.msra.mxu0 %v1429
        %1464 = vmatpush.msra.mxu0 %v1428
        %1465 = vmatmul.f32.gmra.mxu0 %v936
        %v1466 = vpop.f32.mrf.mxu0
        %v1467 = vadd.f32 %v1447, %v1466
        %1468 = vmatmul.f32.gmra.mxu0 %v937
        %v1469 = vpop.f32.mrf.mxu0
        %v1470 = vadd.f32 %v1447, %v1469
        %1471 = vmatmul.f32.gmra.mxu0 %v938
        %v1472 = vpop.f32.mrf.mxu0
        %v1473 = vadd.f32 %v1447, %v1472
        %1474 = vmatmul.f32.gmra.mxu0 %v939
        %v1475 = vpop.f32.mrf.mxu0
        %v1476 = vadd.f32 %v1447, %v1475
        %1477 = vmatmul.f32.gmra.mxu0 %v940
        %v1478 = vpop.f32.mrf.mxu0
        %v1479 = vadd.f32 %v1447, %v1478
        %1480 = vmatmul.f32.gmra.mxu0 %v941
        %v1481 = vpop.f32.mrf.mxu0
        %v1482 = vadd.f32 %v1447, %v1481
        %1483 = vdwg.mxu0
        %v1485 = vsel %vm1117, %v1353, 0
        %v1488 = vsel %vm1117, %v1356, 0
        %v1491 = vsel %vm1117, %v1359, 0
        %v1494 = vsel %vm1117, %v1362, 0
        %v1497 = vsel %vm1117, %v1365, 0
        %v1500 = vsel %vm1117, %v1368, 0
        %v1503 = vsel %vm1117, %v1410, 0
        %v1506 = vsel %vm1117, %v1413, 0
        %v1509 = vsel %vm1117, %v1416, 0
        %v1512 = vsel %vm1117, %v1419, 0
        %v1515 = vsel %vm1117, %v1422, 0
        %v1518 = vsel %vm1117, %v1425, 0
        %1520 = vmatpush.xpose.msra.mxu0 0.0
        %1521 = vmatpush.xpose.msra.mxu0 0.0
        %1522 = vmatpush.xpose.msra.mxu0 0.0
        %1523 = vmatpush.xpose.msra.mxu0 0.0
        %1524 = vmatpush.xpose.msra.mxu0 0.0
        %1525 = vmatpush.xpose.msra.mxu0 0.0
        %1526 = vmatpush.xpose.msra.mxu0 0.0
        %1527 = vmatpush.xpose.msra.mxu0 0.0
        %1528 = vmatpush.xpose.msra.mxu0 0.0
        %1529 = vmatpush.xpose.msra.mxu0 0.0
        %1530 = vmatpush.xpose.msra.mxu0 %v1518
        %1531 = vmatpush.xpose.msra.mxu0 %v1515
        %1532 = vmatpush.xpose.msra.mxu0 %v1512
        %1533 = vmatpush.xpose.msra.mxu0 %v1509
        %1534 = vmatpush.xpose.msra.mxu0 %v1506
        %1535 = vmatpush.xpose.msra.mxu0 %v1503
        %1536 = vmatmul.f32.gmra.mxu0 %v1485
        %v1537 = vpop.f32.mrf.mxu0
        %v1538 = vadd.f32 %v1111, %v1537
        %1539 = vmatmul.f32.gmra.mxu0 %v1488
        %v1540 = vpop.f32.mrf.mxu0
        %v1541 = vadd.f32 %v1112, %v1540
        %1542 = vmatmul.f32.gmra.mxu0 %v1491
        %v1543 = vpop.f32.mrf.mxu0
        %v1544 = vadd.f32 %v1113, %v1543
        %1545 = vmatmul.f32.gmra.mxu0 %v1494
        %v1546 = vpop.f32.mrf.mxu0
        %v1547 = vadd.f32 %v1114, %v1546
        %1548 = vmatmul.f32.gmra.mxu0 %v1497
        %v1549 = vpop.f32.mrf.mxu0
        %v1550 = vadd.f32 %v1115, %v1549
        %1551 = vmatmul.f32.gmra.mxu0 %v1500
        %v1552 = vpop.f32.mrf.mxu0
        %v1553 = vadd.f32 %v1116, %v1552
        %1554 = vdwg.mxu0
        %v1555 = vsel %vm1189, %v1538, -inf
        %1556 = vmax.xlane.f32.xlu0 %v1555
        %v1557 = vpop.xlane.xlu0 %1556
        %v1558 = vsel %vm1189, %v1541, -inf
        %1559 = vmax.xlane.f32.xlu0 %v1558
        %v1560 = vpop.xlane.xlu0 %1559
        %v1561 = vsel %vm1189, %v1544, -inf
        %1562 = vmax.xlane.f32.xlu0 %v1561
        %v1563 = vpop.xlane.xlu0 %1562
        %v1564 = vsel %vm1189, %v1547, -inf
        %1565 = vmax.xlane.f32.xlu0 %v1564
        %v1566 = vpop.xlane.xlu0 %1565
        %v1567 = vsel %vm1189, %v1550, -inf
        %1568 = vmax.xlane.f32.xlu0 %v1567
        %v1569 = vpop.xlane.xlu0 %1568
        %v1570 = vsel %vm1189, %v1553, -inf
        %1571 = vmax.xlane.f32.xlu0 %v1570
        %v1572 = vpop.xlane.xlu0 %1571
        %v1573 = vsub.f32 %v1538, %v1557
        %v1574 = vsub.f32 %v1541, %v1560
        %v1575 = vsub.f32 %v1544, %v1563
        %v1576 = vsub.f32 %v1547, %v1566
        %v1577 = vsub.f32 %v1550, %v1569
        %v1578 = vsub.f32 %v1553, %v1572
        %v1579 = vmul.f32 %v1573, 1.442695
        %v1580 = vpow.pop %v1579
        %v1581 = vmul.f32 %v1574, 1.442695
        %v1582 = vpow.pop %v1581
        %v1583 = vmul.f32 %v1575, 1.442695
        %v1584 = vpow.pop %v1583
        %v1585 = vmul.f32 %v1576, 1.442695
        %v1586 = vpow.pop %v1585
        %v1587 = vmul.f32 %v1577, 1.442695
        %v1588 = vpow.pop %v1587
        %v1589 = vmul.f32 %v1578, 1.442695
        %v1590 = vpow.pop %v1589
        %v1591 = vsel %vm1189, %v1580, 0.0
        %1592 = vadd.xlane.f32.xlu0 %v1591
        %v1593 = vpop.xlane.xlu0 %1592
        %v1594 = vsel %vm1189, %v1582, 0.0
        %1595 = vadd.xlane.f32.xlu0 %v1594
        %v1596 = vpop.xlane.xlu0 %1595
        %v1597 = vsel %vm1189, %v1584, 0.0
        %1598 = vadd.xlane.f32.xlu0 %v1597
        %v1599 = vpop.xlane.xlu0 %1598
        %v1600 = vsel %vm1189, %v1586, 0.0
        %1601 = vadd.xlane.f32.xlu0 %v1600
        %v1602 = vpop.xlane.xlu0 %1601
        %v1603 = vsel %vm1189, %v1588, 0.0
        %1604 = vadd.xlane.f32.xlu0 %v1603
        %v1605 = vpop.xlane.xlu0 %1604
        %v1606 = vsel %vm1189, %v1590, 0.0
        %1607 = vadd.xlane.f32.xlu0 %v1606
        %v1608 = vpop.xlane.xlu0 %1607
        %v1609 = vrcp.pop %v1593
        %v1610 = vrcp.pop %v1596
        %v1611 = vrcp.pop %v1599
        %v1612 = vrcp.pop %v1602
        %v1613 = vrcp.pop %v1605
        %v1614 = vrcp.pop %v1608
        %v1615 = vmul.f32 %v1580, %v1609
        %v1616 = vmul.f32 %v1582, %v1610
        %v1617 = vmul.f32 %v1584, %v1611
        %v1618 = vmul.f32 %v1586, %v1612
        %v1619 = vmul.f32 %v1588, %v1613
        %v1620 = vmul.f32 %v1590, %v1614
        %v1622 = vsel %vm1189, %v1615, 0
        %v1625 = vsel %vm1189, %v1616, 0
        %v1628 = vsel %vm1189, %v1617, 0
        %v1631 = vsel %vm1189, %v1618, 0
        %v1634 = vsel %vm1189, %v1619, 0
        %v1637 = vsel %vm1189, %v1620, 0
        %1639 = vmatpush.msra.mxu0 0.0
        %1640 = vmatpush.msra.mxu0 0.0
        %1641 = vmatpush.msra.mxu0 0.0
        %1642 = vmatpush.msra.mxu0 0.0
        %1643 = vmatpush.msra.mxu0 0.0
        %1644 = vmatpush.msra.mxu0 0.0
        %1645 = vmatpush.msra.mxu0 0.0
        %1646 = vmatpush.msra.mxu0 0.0
        %1647 = vmatpush.msra.mxu0 0.0
        %1648 = vmatpush.msra.mxu0 0.0
        %1649 = vmatpush.msra.mxu0 %v1482
        %1650 = vmatpush.msra.mxu0 %v1479
        %1651 = vmatpush.msra.mxu0 %v1476
        %1652 = vmatpush.msra.mxu0 %v1473
        %1653 = vmatpush.msra.mxu0 %v1470
        %1654 = vmatpush.msra.mxu0 %v1467
        %1655 = vmatmul.f32.gmra.mxu0 %v1622
        %v1656 = vpop.f32.mrf.mxu0
        %v1657 = vadd.f32 0.0, %v1656
        %1658 = vmatmul.f32.gmra.mxu0 %v1625
        %v1659 = vpop.f32.mrf.mxu0
        %v1660 = vadd.f32 0.0, %v1659
        %1661 = vmatmul.f32.gmra.mxu0 %v1628
        %v1662 = vpop.f32.mrf.mxu0
        %v1663 = vadd.f32 0.0, %v1662
        %1664 = vmatmul.f32.gmra.mxu0 %v1631
        %v1665 = vpop.f32.mrf.mxu0
        %v1666 = vadd.f32 0.0, %v1665
        %1667 = vmatmul.f32.gmra.mxu0 %v1634
        %v1668 = vpop.f32.mrf.mxu0
        %v1669 = vadd.f32 0.0, %v1668
        %1670 = vmatmul.f32.gmra.mxu0 %v1637
        %v1671 = vpop.f32.mrf.mxu0
        %v1672 = vadd.f32 0.0, %v1671
        %1673 = vdwg.mxu0
        %s1674 = scalar_lea.vmem %s492, 32
        %v1675 = vld [vmem:[%s1674] sm:$0xff]
        %v1676 = vld [vmem:[%s1674 + $0x8] sm:$0xff]
        %v1677 = vld [vmem:[%s1674 + $0x10] sm:$0xff]
        %v1678 = vld [vmem:[%s1674 + $0x18] sm:$0xff]
        %v1680 = vsel %vm1117, %v1657, 0
        %v1683 = vsel %vm1117, %v1660, 0
        %v1686 = vsel %vm1117, %v1663, 0
        %v1689 = vsel %vm1117, %v1666, 0
        %v1692 = vsel %vm1117, %v1669, 0
        %v1695 = vsel %vm1117, %v1672, 0
        %1697 = vmatpush.msra.mxu0 0.0
        %1698 = vmatpush.msra.mxu0 0.0
        %1699 = vmatpush.msra.mxu0 0.0
        %1700 = vmatpush.msra.mxu0 0.0
        %1701 = vmatpush.msra.mxu0 0.0
        %1702 = vmatpush.msra.mxu0 0.0
        %1703 = vmatpush.msra.mxu0 0.0
        %1704 = vmatpush.msra.mxu0 0.0
        %1705 = vmatpush.msra.mxu0 0.0
        %1706 = vmatpush.msra.mxu0 0.0
        %1707 = vmatpush.msra.mxu0 0.0
        %1708 = vmatpush.msra.mxu0 0.0
        %1709 = vmatpush.msra.mxu0 %v1678
        %1710 = vmatpush.msra.mxu0 %v1677
        %1711 = vmatpush.msra.mxu0 %v1676
        %1712 = vmatpush.msra.mxu0 %v1675
        %1713 = vmatmul.f32.gmra.mxu0 %v1680
        %v1714 = vpop.f32.mrf.mxu0
        %v1715 = vadd.f32 0.0, %v1714
        %1716 = vmatmul.f32.gmra.mxu0 %v1683
        %v1717 = vpop.f32.mrf.mxu0
        %v1718 = vadd.f32 0.0, %v1717
        %1719 = vmatmul.f32.gmra.mxu0 %v1686
        %v1720 = vpop.f32.mrf.mxu0
        %v1721 = vadd.f32 0.0, %v1720
        %1722 = vmatmul.f32.gmra.mxu0 %v1689
        %v1723 = vpop.f32.mrf.mxu0
        %v1724 = vadd.f32 0.0, %v1723
        %1725 = vmatmul.f32.gmra.mxu0 %v1692
        %v1726 = vpop.f32.mrf.mxu0
        %v1727 = vadd.f32 0.0, %v1726
        %1728 = vmatmul.f32.gmra.mxu0 %v1695
        %v1729 = vpop.f32.mrf.mxu0
        %v1730 = vadd.f32 0.0, %v1729
        %1731 = vdwg.mxu0
        %v1733 = vsel %vm1117, %v1292, 0
        %v1736 = vsel %vm1117, %v1295, 0
        %v1739 = vsel %vm1117, %v1298, 0
        %v1742 = vsel %vm1117, %v1301, 0
        %v1745 = vsel %vm1117, %v1304, 0
        %v1748 = vsel %vm1117, %v1307, 0
        %1750 = vmatpush.msra.mxu0 0.0
        %1751 = vmatpush.msra.mxu0 0.0
        %1752 = vmatpush.msra.mxu0 0.0
        %1753 = vmatpush.msra.mxu0 0.0
        %1754 = vmatpush.msra.mxu0 0.0
        %1755 = vmatpush.msra.mxu0 0.0
        %1756 = vmatpush.msra.mxu0 0.0
        %1757 = vmatpush.msra.mxu0 0.0
        %1758 = vmatpush.msra.mxu0 0.0
        %1759 = vmatpush.msra.mxu0 0.0
        %1760 = vmatpush.msra.mxu0 0.0
        %1761 = vmatpush.msra.mxu0 0.0
        %1762 = vmatpush.msra.mxu0 %v1312
        %1763 = vmatpush.msra.mxu0 %v1311
        %1764 = vmatpush.msra.mxu0 %v1310
        %1765 = vmatpush.msra.mxu0 %v1309
        %1766 = vmatmul.f32.gmra.mxu0 %v1733
        %v1767 = vpop.f32.mrf.mxu0
        %v1768 = vadd.f32 %v1715, %v1767
        %1769 = vmatmul.f32.gmra.mxu0 %v1736
        %v1770 = vpop.f32.mrf.mxu0
        %v1771 = vadd.f32 %v1718, %v1770
        %1772 = vmatmul.f32.gmra.mxu0 %v1739
        %v1773 = vpop.f32.mrf.mxu0
        %v1774 = vadd.f32 %v1721, %v1773
        %1775 = vmatmul.f32.gmra.mxu0 %v1742
        %v1776 = vpop.f32.mrf.mxu0
        %v1777 = vadd.f32 %v1724, %v1776
        %1778 = vmatmul.f32.gmra.mxu0 %v1745
        %v1779 = vpop.f32.mrf.mxu0
        %v1780 = vadd.f32 %v1727, %v1779
        %1781 = vmatmul.f32.gmra.mxu0 %v1748
        %v1782 = vpop.f32.mrf.mxu0
        %v1783 = vadd.f32 %v1730, %v1782
        %1784 = vdwg.mxu0
        %s1785 = scalar_lea.vmem %s483, 256
        %v1786 = vld [vmem:[%s1785] sm:$0xff]
        %v1787 = vld [vmem:[%s1785 + $0x8] sm:$0xff]
        %v1788 = vld [vmem:[%s1785 + $0x10] sm:$0xff]
        %v1789 = vld [vmem:[%s1785 + $0x18] sm:$0xff]
        %v1790 = vld [vmem:[%s1785 + $0x20] sm:$0xff]
        %v1791 = vld [vmem:[%s1785 + $0x28] sm:$0xff]
        %v1792 = vld [vmem:[%s1785 + $0x30] sm:$0xff]
        %v1793 = vld [vmem:[%s1785 + $0x38] sm:$0xff]
        %v1794 = vld [vmem:[%s1785 + $0x40] sm:$0xff]
        %v1795 = vld [vmem:[%s1785 + $0x48] sm:$0xff]
        %v1796 = vld [vmem:[%s1785 + $0x50] sm:$0xff]
        %v1797 = vld [vmem:[%s1785 + $0x58] sm:$0xff]
        %v1798 = vld [vmem:[%s1785 + $0x60] sm:$0xff]
        %v1799 = vld [vmem:[%s1785 + $0x68] sm:$0xff]
        %v1800 = vld [vmem:[%s1785 + $0x70] sm:$0xff]
        %v1801 = vld [vmem:[%s1785 + $0x78] sm:$0xff]
        %s1802 = scalar_lea.vmem %s487, 2
        %v1803 = vld [vmem:[%s1802] sm:$0x1]
        %v1805 = vperm.slane %v1803, 0
        %1807 = vmatpush.msra.mxu0 %v1801
        %1808 = vmatpush.msra.mxu0 %v1800
        %1809 = vmatpush.msra.mxu0 %v1799
        %1810 = vmatpush.msra.mxu0 %v1798
        %1811 = vmatpush.msra.mxu0 %v1797
        %1812 = vmatpush.msra.mxu0 %v1796
        %1813 = vmatpush.msra.mxu0 %v1795
        %1814 = vmatpush.msra.mxu0 %v1794
        %1815 = vmatpush.msra.mxu0 %v1793
        %1816 = vmatpush.msra.mxu0 %v1792
        %1817 = vmatpush.msra.mxu0 %v1791
        %1818 = vmatpush.msra.mxu0 %v1790
        %1819 = vmatpush.msra.mxu0 %v1789
        %1820 = vmatpush.msra.mxu0 %v1788
        %1821 = vmatpush.msra.mxu0 %v1787
        %1822 = vmatpush.msra.mxu0 %v1786
        %1823 = vmatmul.f32.gmra.mxu0 %v936
        %v1824 = vpop.f32.mrf.mxu0
        %v1825 = vadd.f32 %v1805, %v1824
        %1826 = vmatmul.f32.gmra.mxu0 %v937
        %v1827 = vpop.f32.mrf.mxu0
        %v1828 = vadd.f32 %v1805, %v1827
        %1829 = vmatmul.f32.gmra.mxu0 %v938
        %v1830 = vpop.f32.mrf.mxu0
        %v1831 = vadd.f32 %v1805, %v1830
        %1832 = vmatmul.f32.gmra.mxu0 %v939
        %v1833 = vpop.f32.mrf.mxu0
        %v1834 = vadd.f32 %v1805, %v1833
        %1835 = vmatmul.f32.gmra.mxu0 %v940
        %v1836 = vpop.f32.mrf.mxu0
        %v1837 = vadd.f32 %v1805, %v1836
        %1838 = vmatmul.f32.gmra.mxu0 %v941
        %v1839 = vpop.f32.mrf.mxu0
        %v1840 = vadd.f32 %v1805, %v1839
        %1841 = vdwg.mxu0
        %s1842 = scalar_lea.vmem %s483, 768
        %v1843 = vld [vmem:[%s1842] sm:$0xff]
        %v1844 = vld [vmem:[%s1842 + $0x8] sm:$0xff]
        %v1845 = vld [vmem:[%s1842 + $0x10] sm:$0xff]
        %v1846 = vld [vmem:[%s1842 + $0x18] sm:$0xff]
        %v1847 = vld [vmem:[%s1842 + $0x20] sm:$0xff]
        %v1848 = vld [vmem:[%s1842 + $0x28] sm:$0xff]
        %v1849 = vld [vmem:[%s1842 + $0x30] sm:$0xff]
        %v1850 = vld [vmem:[%s1842 + $0x38] sm:$0xff]
        %v1851 = vld [vmem:[%s1842 + $0x40] sm:$0xff]
        %v1852 = vld [vmem:[%s1842 + $0x48] sm:$0xff]
        %v1853 = vld [vmem:[%s1842 + $0x50] sm:$0xff]
        %v1854 = vld [vmem:[%s1842 + $0x58] sm:$0xff]
        %v1855 = vld [vmem:[%s1842 + $0x60] sm:$0xff]
        %v1856 = vld [vmem:[%s1842 + $0x68] sm:$0xff]
        %v1857 = vld [vmem:[%s1842 + $0x70] sm:$0xff]
        %v1858 = vld [vmem:[%s1842 + $0x78] sm:$0xff]
        %s1859 = scalar_lea.vmem %s487, 6
        %v1860 = vld [vmem:[%s1859] sm:$0x1]
        %v1862 = vperm.slane %v1860, 0
        %1864 = vmatpush.msra.mxu0 %v1858
        %1865 = vmatpush.msra.mxu0 %v1857
        %1866 = vmatpush.msra.mxu0 %v1856
        %1867 = vmatpush.msra.mxu0 %v1855
        %1868 = vmatpush.msra.mxu0 %v1854
        %1869 = vmatpush.msra.mxu0 %v1853
        %1870 = vmatpush.msra.mxu0 %v1852
        %1871 = vmatpush.msra.mxu0 %v1851
        %1872 = vmatpush.msra.mxu0 %v1850
        %1873 = vmatpush.msra.mxu0 %v1849
        %1874 = vmatpush.msra.mxu0 %v1848
        %1875 = vmatpush.msra.mxu0 %v1847
        %1876 = vmatpush.msra.mxu0 %v1846
        %1877 = vmatpush.msra.mxu0 %v1845
        %1878 = vmatpush.msra.mxu0 %v1844
        %1879 = vmatpush.msra.mxu0 %v1843
        %1880 = vmatmul.f32.gmra.mxu0 %v936
        %v1881 = vpop.f32.mrf.mxu0
        %v1882 = vadd.f32 %v1862, %v1881
        %1883 = vmatmul.f32.gmra.mxu0 %v937
        %v1884 = vpop.f32.mrf.mxu0
        %v1885 = vadd.f32 %v1862, %v1884
        %1886 = vmatmul.f32.gmra.mxu0 %v938
        %v1887 = vpop.f32.mrf.mxu0
        %v1888 = vadd.f32 %v1862, %v1887
        %1889 = vmatmul.f32.gmra.mxu0 %v939
        %v1890 = vpop.f32.mrf.mxu0
        %v1891 = vadd.f32 %v1862, %v1890
        %1892 = vmatmul.f32.gmra.mxu0 %v940
        %v1893 = vpop.f32.mrf.mxu0
        %v1894 = vadd.f32 %v1862, %v1893
        %1895 = vmatmul.f32.gmra.mxu0 %v941
        %v1896 = vpop.f32.mrf.mxu0
        %v1897 = vadd.f32 %v1862, %v1896
        %1898 = vdwg.mxu0
        %s1899 = scalar_lea.vmem %s483, 1280
        %v1900 = vld [vmem:[%s1899] sm:$0xff]
        %v1901 = vld [vmem:[%s1899 + $0x8] sm:$0xff]
        %v1902 = vld [vmem:[%s1899 + $0x10] sm:$0xff]
        %v1903 = vld [vmem:[%s1899 + $0x18] sm:$0xff]
        %v1904 = vld [vmem:[%s1899 + $0x20] sm:$0xff]
        %v1905 = vld [vmem:[%s1899 + $0x28] sm:$0xff]
        %v1906 = vld [vmem:[%s1899 + $0x30] sm:$0xff]
        %v1907 = vld [vmem:[%s1899 + $0x38] sm:$0xff]
        %v1908 = vld [vmem:[%s1899 + $0x40] sm:$0xff]
        %v1909 = vld [vmem:[%s1899 + $0x48] sm:$0xff]
        %v1910 = vld [vmem:[%s1899 + $0x50] sm:$0xff]
        %v1911 = vld [vmem:[%s1899 + $0x58] sm:$0xff]
        %v1912 = vld [vmem:[%s1899 + $0x60] sm:$0xff]
        %v1913 = vld [vmem:[%s1899 + $0x68] sm:$0xff]
        %v1914 = vld [vmem:[%s1899 + $0x70] sm:$0xff]
        %v1915 = vld [vmem:[%s1899 + $0x78] sm:$0xff]
        %s1916 = scalar_lea.vmem %s487, 10
        %v1917 = vld [vmem:[%s1916] sm:$0x1]
        %v1919 = vperm.slane %v1917, 0
        %1921 = vmatpush.msra.mxu0 %v1915
        %1922 = vmatpush.msra.mxu0 %v1914
        %1923 = vmatpush.msra.mxu0 %v1913
        %1924 = vmatpush.msra.mxu0 %v1912
        %1925 = vmatpush.msra.mxu0 %v1911
        %1926 = vmatpush.msra.mxu0 %v1910
        %1927 = vmatpush.msra.mxu0 %v1909
        %1928 = vmatpush.msra.mxu0 %v1908
        %1929 = vmatpush.msra.mxu0 %v1907
        %1930 = vmatpush.msra.mxu0 %v1906
        %1931 = vmatpush.msra.mxu0 %v1905
        %1932 = vmatpush.msra.mxu0 %v1904
        %1933 = vmatpush.msra.mxu0 %v1903
        %1934 = vmatpush.msra.mxu0 %v1902
        %1935 = vmatpush.msra.mxu0 %v1901
        %1936 = vmatpush.msra.mxu0 %v1900
        %1937 = vmatmul.f32.gmra.mxu0 %v936
        %v1938 = vpop.f32.mrf.mxu0
        %v1939 = vadd.f32 %v1919, %v1938
        %1940 = vmatmul.f32.gmra.mxu0 %v937
        %v1941 = vpop.f32.mrf.mxu0
        %v1942 = vadd.f32 %v1919, %v1941
        %1943 = vmatmul.f32.gmra.mxu0 %v938
        %v1944 = vpop.f32.mrf.mxu0
        %v1945 = vadd.f32 %v1919, %v1944
        %1946 = vmatmul.f32.gmra.mxu0 %v939
        %v1947 = vpop.f32.mrf.mxu0
        %v1948 = vadd.f32 %v1919, %v1947
        %1949 = vmatmul.f32.gmra.mxu0 %v940
        %v1950 = vpop.f32.mrf.mxu0
        %v1951 = vadd.f32 %v1919, %v1950
        %1952 = vmatmul.f32.gmra.mxu0 %v941
        %v1953 = vpop.f32.mrf.mxu0
        %v1954 = vadd.f32 %v1919, %v1953
        %1955 = vdwg.mxu0
        %v1957 = vsel %vm1117, %v1825, 0
        %v1960 = vsel %vm1117, %v1828, 0
        %v1963 = vsel %vm1117, %v1831, 0
        %v1966 = vsel %vm1117, %v1834, 0
        %v1969 = vsel %vm1117, %v1837, 0
        %v1972 = vsel %vm1117, %v1840, 0
        %v1975 = vsel %vm1117, %v1882, 0
        %v1978 = vsel %vm1117, %v1885, 0
        %v1981 = vsel %vm1117, %v1888, 0
        %v1984 = vsel %vm1117, %v1891, 0
        %v1987 = vsel %vm1117, %v1894, 0
        %v1990 = vsel %vm1117, %v1897, 0
        %1992 = vmatpush.xpose.msra.mxu0 0.0
        %1993 = vmatpush.xpose.msra.mxu0 0.0
        %1994 = vmatpush.xpose.msra.mxu0 0.0
        %1995 = vmatpush.xpose.msra.mxu0 0.0
        %1996 = vmatpush.xpose.msra.mxu0 0.0
        %1997 = vmatpush.xpose.msra.mxu0 0.0
        %1998 = vmatpush.xpose.msra.mxu0 0.0
        %1999 = vmatpush.xpose.msra.mxu0 0.0
        %2000 = vmatpush.xpose.msra.mxu0 0.0
        %2001 = vmatpush.xpose.msra.mxu0 0.0
        %2002 = vmatpush.xpose.msra.mxu0 %v1990
        %2003 = vmatpush.xpose.msra.mxu0 %v1987
        %2004 = vmatpush.xpose.msra.mxu0 %v1984
        %2005 = vmatpush.xpose.msra.mxu0 %v1981
        %2006 = vmatpush.xpose.msra.mxu0 %v1978
        %2007 = vmatpush.xpose.msra.mxu0 %v1975
        %2008 = vmatmul.f32.gmra.mxu0 %v1957
        %v2009 = vpop.f32.mrf.mxu0
        %v2010 = vadd.f32 %v1111, %v2009
        %2011 = vmatmul.f32.gmra.mxu0 %v1960
        %v2012 = vpop.f32.mrf.mxu0
        %v2013 = vadd.f32 %v1112, %v2012
        %2014 = vmatmul.f32.gmra.mxu0 %v1963
        %v2015 = vpop.f32.mrf.mxu0
        %v2016 = vadd.f32 %v1113, %v2015
        %2017 = vmatmul.f32.gmra.mxu0 %v1966
        %v2018 = vpop.f32.mrf.mxu0
        %v2019 = vadd.f32 %v1114, %v2018
        %2020 = vmatmul.f32.gmra.mxu0 %v1969
        %v2021 = vpop.f32.mrf.mxu0
        %v2022 = vadd.f32 %v1115, %v2021
        %2023 = vmatmul.f32.gmra.mxu0 %v1972
        %v2024 = vpop.f32.mrf.mxu0
        %v2025 = vadd.f32 %v1116, %v2024
        %2026 = vdwg.mxu0
        %v2027 = vsel %vm1189, %v2010, -inf
        %2028 = vmax.xlane.f32.xlu0 %v2027
        %v2029 = vpop.xlane.xlu0 %2028
        %v2030 = vsel %vm1189, %v2013, -inf
        %2031 = vmax.xlane.f32.xlu0 %v2030
        %v2032 = vpop.xlane.xlu0 %2031
        %v2033 = vsel %vm1189, %v2016, -inf
        %2034 = vmax.xlane.f32.xlu0 %v2033
        %v2035 = vpop.xlane.xlu0 %2034
        %v2036 = vsel %vm1189, %v2019, -inf
        %2037 = vmax.xlane.f32.xlu0 %v2036
        %v2038 = vpop.xlane.xlu0 %2037
        %v2039 = vsel %vm1189, %v2022, -inf
        %2040 = vmax.xlane.f32.xlu0 %v2039
        %v2041 = vpop.xlane.xlu0 %2040
        %v2042 = vsel %vm1189, %v2025, -inf
        %2043 = vmax.xlane.f32.xlu0 %v2042
        %v2044 = vpop.xlane.xlu0 %2043
        %v2045 = vsub.f32 %v2010, %v2029
        %v2046 = vsub.f32 %v2013, %v2032
        %v2047 = vsub.f32 %v2016, %v2035
        %v2048 = vsub.f32 %v2019, %v2038
        %v2049 = vsub.f32 %v2022, %v2041
        %v2050 = vsub.f32 %v2025, %v2044
        %v2051 = vmul.f32 %v2045, 1.442695
        %v2052 = vpow.pop %v2051
        %v2053 = vmul.f32 %v2046, 1.442695
        %v2054 = vpow.pop %v2053
        %v2055 = vmul.f32 %v2047, 1.442695
        %v2056 = vpow.pop %v2055
        %v2057 = vmul.f32 %v2048, 1.442695
        %v2058 = vpow.pop %v2057
        %v2059 = vmul.f32 %v2049, 1.442695
        %v2060 = vpow.pop %v2059
        %v2061 = vmul.f32 %v2050, 1.442695
        %v2062 = vpow.pop %v2061
        %v2063 = vsel %vm1189, %v2052, 0.0
        %2064 = vadd.xlane.f32.xlu0 %v2063
        %v2065 = vpop.xlane.xlu0 %2064
        %v2066 = vsel %vm1189, %v2054, 0.0
        %2067 = vadd.xlane.f32.xlu0 %v2066
        %v2068 = vpop.xlane.xlu0 %2067
        %v2069 = vsel %vm1189, %v2056, 0.0
        %2070 = vadd.xlane.f32.xlu0 %v2069
        %v2071 = vpop.xlane.xlu0 %2070
        %v2072 = vsel %vm1189, %v2058, 0.0
        %2073 = vadd.xlane.f32.xlu0 %v2072
        %v2074 = vpop.xlane.xlu0 %2073
        %v2075 = vsel %vm1189, %v2060, 0.0
        %2076 = vadd.xlane.f32.xlu0 %v2075
        %v2077 = vpop.xlane.xlu0 %2076
        %v2078 = vsel %vm1189, %v2062, 0.0
        %2079 = vadd.xlane.f32.xlu0 %v2078
        %v2080 = vpop.xlane.xlu0 %2079
        %v2081 = vrcp.pop %v2065
        %v2082 = vrcp.pop %v2068
        %v2083 = vrcp.pop %v2071
        %v2084 = vrcp.pop %v2074
        %v2085 = vrcp.pop %v2077
        %v2086 = vrcp.pop %v2080
        %v2087 = vmul.f32 %v2052, %v2081
        %v2088 = vmul.f32 %v2054, %v2082
        %v2089 = vmul.f32 %v2056, %v2083
        %v2090 = vmul.f32 %v2058, %v2084
        %v2091 = vmul.f32 %v2060, %v2085
        %v2092 = vmul.f32 %v2062, %v2086
        %v2094 = vsel %vm1189, %v2087, 0
        %v2097 = vsel %vm1189, %v2088, 0
        %v2100 = vsel %vm1189, %v2089, 0
        %v2103 = vsel %vm1189, %v2090, 0
        %v2106 = vsel %vm1189, %v2091, 0
        %v2109 = vsel %vm1189, %v2092, 0
        %2111 = vmatpush.msra.mxu0 0.0
        %2112 = vmatpush.msra.mxu0 0.0
        %2113 = vmatpush.msra.mxu0 0.0
        %2114 = vmatpush.msra.mxu0 0.0
        %2115 = vmatpush.msra.mxu0 0.0
        %2116 = vmatpush.msra.mxu0 0.0
        %2117 = vmatpush.msra.mxu0 0.0
        %2118 = vmatpush.msra.mxu0 0.0
        %2119 = vmatpush.msra.mxu0 0.0
        %2120 = vmatpush.msra.mxu0 0.0
        %2121 = vmatpush.msra.mxu0 %v1954
        %2122 = vmatpush.msra.mxu0 %v1951
        %2123 = vmatpush.msra.mxu0 %v1948
        %2124 = vmatpush.msra.mxu0 %v1945
        %2125 = vmatpush.msra.mxu0 %v1942
        %2126 = vmatpush.msra.mxu0 %v1939
        %2127 = vmatmul.f32.gmra.mxu0 %v2094
        %v2128 = vpop.f32.mrf.mxu0
        %v2129 = vadd.f32 0.0, %v2128
        %2130 = vmatmul.f32.gmra.mxu0 %v2097
        %v2131 = vpop.f32.mrf.mxu0
        %v2132 = vadd.f32 0.0, %v2131
        %2133 = vmatmul.f32.gmra.mxu0 %v2100
        %v2134 = vpop.f32.mrf.mxu0
        %v2135 = vadd.f32 0.0, %v2134
        %2136 = vmatmul.f32.gmra.mxu0 %v2103
        %v2137 = vpop.f32.mrf.mxu0
        %v2138 = vadd.f32 0.0, %v2137
        %2139 = vmatmul.f32.gmra.mxu0 %v2106
        %v2140 = vpop.f32.mrf.mxu0
        %v2141 = vadd.f32 0.0, %v2140
        %2142 = vmatmul.f32.gmra.mxu0 %v2109
        %v2143 = vpop.f32.mrf.mxu0
        %v2144 = vadd.f32 0.0, %v2143
        %2145 = vdwg.mxu0
        %s2146 = scalar_lea.vmem %s492, 64
        %v2147 = vld [vmem:[%s2146] sm:$0xff]
        %v2148 = vld [vmem:[%s2146 + $0x8] sm:$0xff]
        %v2149 = vld [vmem:[%s2146 + $0x10] sm:$0xff]
        %v2150 = vld [vmem:[%s2146 + $0x18] sm:$0xff]
        %v2152 = vsel %vm1117, %v2129, 0
        %v2155 = vsel %vm1117, %v2132, 0
        %v2158 = vsel %vm1117, %v2135, 0
        %v2161 = vsel %vm1117, %v2138, 0
        %v2164 = vsel %vm1117, %v2141, 0
        %v2167 = vsel %vm1117, %v2144, 0
        %2169 = vmatpush.msra.mxu0 0.0
        %2170 = vmatpush.msra.mxu0 0.0
        %2171 = vmatpush.msra.mxu0 0.0
        %2172 = vmatpush.msra.mxu0 0.0
        %2173 = vmatpush.msra.mxu0 0.0
        %2174 = vmatpush.msra.mxu0 0.0
        %2175 = vmatpush.msra.mxu0 0.0
        %2176 = vmatpush.msra.mxu0 0.0
        %2177 = vmatpush.msra.mxu0 0.0
        %2178 = vmatpush.msra.mxu0 0.0
        %2179 = vmatpush.msra.mxu0 0.0
        %2180 = vmatpush.msra.mxu0 0.0
        %2181 = vmatpush.msra.mxu0 %v2150
        %2182 = vmatpush.msra.mxu0 %v2149
        %2183 = vmatpush.msra.mxu0 %v2148
        %2184 = vmatpush.msra.mxu0 %v2147
        %2185 = vmatmul.f32.gmra.mxu0 %v2152
        %v2186 = vpop.f32.mrf.mxu0
        %v2187 = vadd.f32 0.0, %v2186
        %2188 = vmatmul.f32.gmra.mxu0 %v2155
        %v2189 = vpop.f32.mrf.mxu0
        %v2190 = vadd.f32 0.0, %v2189
        %2191 = vmatmul.f32.gmra.mxu0 %v2158
        %v2192 = vpop.f32.mrf.mxu0
        %v2193 = vadd.f32 0.0, %v2192
        %2194 = vmatmul.f32.gmra.mxu0 %v2161
        %v2195 = vpop.f32.mrf.mxu0
        %v2196 = vadd.f32 0.0, %v2195
        %2197 = vmatmul.f32.gmra.mxu0 %v2164
        %v2198 = vpop.f32.mrf.mxu0
        %v2199 = vadd.f32 0.0, %v2198
        %2200 = vmatmul.f32.gmra.mxu0 %v2167
        %v2201 = vpop.f32.mrf.mxu0
        %v2202 = vadd.f32 0.0, %v2201
        %2203 = vdwg.mxu0
        %v2204 = vadd.f32 %v1768, %v2187
        %v2205 = vadd.f32 %v1771, %v2190
        %v2206 = vadd.f32 %v1774, %v2193
        %v2207 = vadd.f32 %v1777, %v2196
        %v2208 = vadd.f32 %v1780, %v2199
        %v2209 = vadd.f32 %v1783, %v2202
        %s2210 = scalar_lea.vmem %s483, 384
        %v2211 = vld [vmem:[%s2210] sm:$0xff]
        %v2212 = vld [vmem:[%s2210 + $0x8] sm:$0xff]
        %v2213 = vld [vmem:[%s2210 + $0x10] sm:$0xff]
        %v2214 = vld [vmem:[%s2210 + $0x18] sm:$0xff]
        %v2215 = vld [vmem:[%s2210 + $0x20] sm:$0xff]
        %v2216 = vld [vmem:[%s2210 + $0x28] sm:$0xff]
        %v2217 = vld [vmem:[%s2210 + $0x30] sm:$0xff]
        %v2218 = vld [vmem:[%s2210 + $0x38] sm:$0xff]
        %v2219 = vld [vmem:[%s2210 + $0x40] sm:$0xff]
        %v2220 = vld [vmem:[%s2210 + $0x48] sm:$0xff]
        %v2221 = vld [vmem:[%s2210 + $0x50] sm:$0xff]
        %v2222 = vld [vmem:[%s2210 + $0x58] sm:$0xff]
        %v2223 = vld [vmem:[%s2210 + $0x60] sm:$0xff]
        %v2224 = vld [vmem:[%s2210 + $0x68] sm:$0xff]
        %v2225 = vld [vmem:[%s2210 + $0x70] sm:$0xff]
        %v2226 = vld [vmem:[%s2210 + $0x78] sm:$0xff]
        %s2227 = scalar_lea.vmem %s487, 3
        %v2228 = vld [vmem:[%s2227] sm:$0x1]
        %v2230 = vperm.slane %v2228, 0
        %2232 = vmatpush.msra.mxu0 %v2226
        %2233 = vmatpush.msra.mxu0 %v2225
        %2234 = vmatpush.msra.mxu0 %v2224
        %2235 = vmatpush.msra.mxu0 %v2223
        %2236 = vmatpush.msra.mxu0 %v2222
        %2237 = vmatpush.msra.mxu0 %v2221
        %2238 = vmatpush.msra.mxu0 %v2220
        %2239 = vmatpush.msra.mxu0 %v2219
        %2240 = vmatpush.msra.mxu0 %v2218
        %2241 = vmatpush.msra.mxu0 %v2217
        %2242 = vmatpush.msra.mxu0 %v2216
        %2243 = vmatpush.msra.mxu0 %v2215
        %2244 = vmatpush.msra.mxu0 %v2214
        %2245 = vmatpush.msra.mxu0 %v2213
        %2246 = vmatpush.msra.mxu0 %v2212
        %2247 = vmatpush.msra.mxu0 %v2211
        %2248 = vmatmul.f32.gmra.mxu0 %v936
        %v2249 = vpop.f32.mrf.mxu0
        %v2250 = vadd.f32 %v2230, %v2249
        %2251 = vmatmul.f32.gmra.mxu0 %v937
        %v2252 = vpop.f32.mrf.mxu0
        %v2253 = vadd.f32 %v2230, %v2252
        %2254 = vmatmul.f32.gmra.mxu0 %v938
        %v2255 = vpop.f32.mrf.mxu0
        %v2256 = vadd.f32 %v2230, %v2255
        %2257 = vmatmul.f32.gmra.mxu0 %v939
        %v2258 = vpop.f32.mrf.mxu0
        %v2259 = vadd.f32 %v2230, %v2258
        %2260 = vmatmul.f32.gmra.mxu0 %v940
        %v2261 = vpop.f32.mrf.mxu0
        %v2262 = vadd.f32 %v2230, %v2261
        %2263 = vmatmul.f32.gmra.mxu0 %v941
        %v2264 = vpop.f32.mrf.mxu0
        %v2265 = vadd.f32 %v2230, %v2264
        %2266 = vdwg.mxu0
        %s2267 = scalar_lea.vmem %s483, 896
        %v2268 = vld [vmem:[%s2267] sm:$0xff]
        %v2269 = vld [vmem:[%s2267 + $0x8] sm:$0xff]
        %v2270 = vld [vmem:[%s2267 + $0x10] sm:$0xff]
        %v2271 = vld [vmem:[%s2267 + $0x18] sm:$0xff]
        %v2272 = vld [vmem:[%s2267 + $0x20] sm:$0xff]
        %v2273 = vld [vmem:[%s2267 + $0x28] sm:$0xff]
        %v2274 = vld [vmem:[%s2267 + $0x30] sm:$0xff]
        %v2275 = vld [vmem:[%s2267 + $0x38] sm:$0xff]
        %v2276 = vld [vmem:[%s2267 + $0x40] sm:$0xff]
        %v2277 = vld [vmem:[%s2267 + $0x48] sm:$0xff]
        %v2278 = vld [vmem:[%s2267 + $0x50] sm:$0xff]
        %v2279 = vld [vmem:[%s2267 + $0x58] sm:$0xff]
        %v2280 = vld [vmem:[%s2267 + $0x60] sm:$0xff]
        %v2281 = vld [vmem:[%s2267 + $0x68] sm:$0xff]
        %v2282 = vld [vmem:[%s2267 + $0x70] sm:$0xff]
        %v2283 = vld [vmem:[%s2267 + $0x78] sm:$0xff]
        %s2284 = scalar_lea.vmem %s487, 7
        %v2285 = vld [vmem:[%s2284] sm:$0x1]
        %v2287 = vperm.slane %v2285, 0
        %2289 = vmatpush.msra.mxu0 %v2283
        %2290 = vmatpush.msra.mxu0 %v2282
        %2291 = vmatpush.msra.mxu0 %v2281
        %2292 = vmatpush.msra.mxu0 %v2280
        %2293 = vmatpush.msra.mxu0 %v2279
        %2294 = vmatpush.msra.mxu0 %v2278
        %2295 = vmatpush.msra.mxu0 %v2277
        %2296 = vmatpush.msra.mxu0 %v2276
        %2297 = vmatpush.msra.mxu0 %v2275
        %2298 = vmatpush.msra.mxu0 %v2274
        %2299 = vmatpush.msra.mxu0 %v2273
        %2300 = vmatpush.msra.mxu0 %v2272
        %2301 = vmatpush.msra.mxu0 %v2271
        %2302 = vmatpush.msra.mxu0 %v2270
        %2303 = vmatpush.msra.mxu0 %v2269
        %2304 = vmatpush.msra.mxu0 %v2268
        %2305 = vmatmul.f32.gmra.mxu0 %v936
        %v2306 = vpop.f32.mrf.mxu0
        %v2307 = vadd.f32 %v2287, %v2306
        %2308 = vmatmul.f32.gmra.mxu0 %v937
        %v2309 = vpop.f32.mrf.mxu0
        %v2310 = vadd.f32 %v2287, %v2309
        %2311 = vmatmul.f32.gmra.mxu0 %v938
        %v2312 = vpop.f32.mrf.mxu0
        %v2313 = vadd.f32 %v2287, %v2312
        %2314 = vmatmul.f32.gmra.mxu0 %v939
        %v2315 = vpop.f32.mrf.mxu0
        %v2316 = vadd.f32 %v2287, %v2315
        %2317 = vmatmul.f32.gmra.mxu0 %v940
        %v2318 = vpop.f32.mrf.mxu0
        %v2319 = vadd.f32 %v2287, %v2318
        %2320 = vmatmul.f32.gmra.mxu0 %v941
        %v2321 = vpop.f32.mrf.mxu0
        %v2322 = vadd.f32 %v2287, %v2321
        %2323 = vdwg.mxu0
        %s2324 = scalar_lea.vmem %s483, 1408
        %v2325 = vld [vmem:[%s2324] sm:$0xff]
        %v2326 = vld [vmem:[%s2324 + $0x8] sm:$0xff]
        %v2327 = vld [vmem:[%s2324 + $0x10] sm:$0xff]
        %v2328 = vld [vmem:[%s2324 + $0x18] sm:$0xff]
        %v2329 = vld [vmem:[%s2324 + $0x20] sm:$0xff]
        %v2330 = vld [vmem:[%s2324 + $0x28] sm:$0xff]
        %v2331 = vld [vmem:[%s2324 + $0x30] sm:$0xff]
        %v2332 = vld [vmem:[%s2324 + $0x38] sm:$0xff]
        %v2333 = vld [vmem:[%s2324 + $0x40] sm:$0xff]
        %v2334 = vld [vmem:[%s2324 + $0x48] sm:$0xff]
        %v2335 = vld [vmem:[%s2324 + $0x50] sm:$0xff]
        %v2336 = vld [vmem:[%s2324 + $0x58] sm:$0xff]
        %v2337 = vld [vmem:[%s2324 + $0x60] sm:$0xff]
        %v2338 = vld [vmem:[%s2324 + $0x68] sm:$0xff]
        %v2339 = vld [vmem:[%s2324 + $0x70] sm:$0xff]
        %v2340 = vld [vmem:[%s2324 + $0x78] sm:$0xff]
        %s2341 = scalar_lea.vmem %s487, 11
        %v2342 = vld [vmem:[%s2341] sm:$0x1]
        %v2344 = vperm.slane %v2342, 0
        %2346 = vmatpush.msra.mxu0 %v2340
        %2347 = vmatpush.msra.mxu0 %v2339
        %2348 = vmatpush.msra.mxu0 %v2338
        %2349 = vmatpush.msra.mxu0 %v2337
        %2350 = vmatpush.msra.mxu0 %v2336
        %2351 = vmatpush.msra.mxu0 %v2335
        %2352 = vmatpush.msra.mxu0 %v2334
        %2353 = vmatpush.msra.mxu0 %v2333
        %2354 = vmatpush.msra.mxu0 %v2332
        %2355 = vmatpush.msra.mxu0 %v2331
        %2356 = vmatpush.msra.mxu0 %v2330
        %2357 = vmatpush.msra.mxu0 %v2329
        %2358 = vmatpush.msra.mxu0 %v2328
        %2359 = vmatpush.msra.mxu0 %v2327
        %2360 = vmatpush.msra.mxu0 %v2326
        %2361 = vmatpush.msra.mxu0 %v2325
        %2362 = vmatmul.f32.gmra.mxu0 %v936
        %v2363 = vpop.f32.mrf.mxu0
        %v2364 = vadd.f32 %v2344, %v2363
        %2365 = vmatmul.f32.gmra.mxu0 %v937
        %v2366 = vpop.f32.mrf.mxu0
        %v2367 = vadd.f32 %v2344, %v2366
        %2368 = vmatmul.f32.gmra.mxu0 %v938
        %v2369 = vpop.f32.mrf.mxu0
        %v2370 = vadd.f32 %v2344, %v2369
        %2371 = vmatmul.f32.gmra.mxu0 %v939
        %v2372 = vpop.f32.mrf.mxu0
        %v2373 = vadd.f32 %v2344, %v2372
        %2374 = vmatmul.f32.gmra.mxu0 %v940
        %v2375 = vpop.f32.mrf.mxu0
        %v2376 = vadd.f32 %v2344, %v2375
        %2377 = vmatmul.f32.gmra.mxu0 %v941
        %v2378 = vpop.f32.mrf.mxu0
        %v2379 = vadd.f32 %v2344, %v2378
        %2380 = vdwg.mxu0
        %v2382 = vsel %vm1117, %v2250, 0
        %v2385 = vsel %vm1117, %v2253, 0
        %v2388 = vsel %vm1117, %v2256, 0
        %v2391 = vsel %vm1117, %v2259, 0
        %v2394 = vsel %vm1117, %v2262, 0
        %v2397 = vsel %vm1117, %v2265, 0
        %v2400 = vsel %vm1117, %v2307, 0
        %v2403 = vsel %vm1117, %v2310, 0
        %v2406 = vsel %vm1117, %v2313, 0
        %v2409 = vsel %vm1117, %v2316, 0
        %v2412 = vsel %vm1117, %v2319, 0
        %v2415 = vsel %vm1117, %v2322, 0
        %2417 = vmatpush.xpose.msra.mxu0 0.0
        %2418 = vmatpush.xpose.msra.mxu0 0.0
        %2419 = vmatpush.xpose.msra.mxu0 0.0
        %2420 = vmatpush.xpose.msra.mxu0 0.0
        %2421 = vmatpush.xpose.msra.mxu0 0.0
        %2422 = vmatpush.xpose.msra.mxu0 0.0
        %2423 = vmatpush.xpose.msra.mxu0 0.0
        %2424 = vmatpush.xpose.msra.mxu0 0.0
        %2425 = vmatpush.xpose.msra.mxu0 0.0
        %2426 = vmatpush.xpose.msra.mxu0 0.0
        %2427 = vmatpush.xpose.msra.mxu0 %v2415
        %2428 = vmatpush.xpose.msra.mxu0 %v2412
        %2429 = vmatpush.xpose.msra.mxu0 %v2409
        %2430 = vmatpush.xpose.msra.mxu0 %v2406
        %2431 = vmatpush.xpose.msra.mxu0 %v2403
        %2432 = vmatpush.xpose.msra.mxu0 %v2400
        %2433 = vmatmul.f32.gmra.mxu0 %v2382
        %v2434 = vpop.f32.mrf.mxu0
        %v2435 = vadd.f32 %v1111, %v2434
        %2436 = vmatmul.f32.gmra.mxu0 %v2385
        %v2437 = vpop.f32.mrf.mxu0
        %v2438 = vadd.f32 %v1112, %v2437
        %2439 = vmatmul.f32.gmra.mxu0 %v2388
        %v2440 = vpop.f32.mrf.mxu0
        %v2441 = vadd.f32 %v1113, %v2440
        %2442 = vmatmul.f32.gmra.mxu0 %v2391
        %v2443 = vpop.f32.mrf.mxu0
        %v2444 = vadd.f32 %v1114, %v2443
        %2445 = vmatmul.f32.gmra.mxu0 %v2394
        %v2446 = vpop.f32.mrf.mxu0
        %v2447 = vadd.f32 %v1115, %v2446
        %2448 = vmatmul.f32.gmra.mxu0 %v2397
        %v2449 = vpop.f32.mrf.mxu0
        %v2450 = vadd.f32 %v1116, %v2449
        %2451 = vdwg.mxu0
        %v2452 = vsel %vm1189, %v2435, -inf
        %2453 = vmax.xlane.f32.xlu0 %v2452
        %v2454 = vpop.xlane.xlu0 %2453
        %v2455 = vsel %vm1189, %v2438, -inf
        %2456 = vmax.xlane.f32.xlu0 %v2455
        %v2457 = vpop.xlane.xlu0 %2456
        %v2458 = vsel %vm1189, %v2441, -inf
        %2459 = vmax.xlane.f32.xlu0 %v2458
        %v2460 = vpop.xlane.xlu0 %2459
        %v2461 = vsel %vm1189, %v2444, -inf
        %2462 = vmax.xlane.f32.xlu0 %v2461
        %v2463 = vpop.xlane.xlu0 %2462
        %v2464 = vsel %vm1189, %v2447, -inf
        %2465 = vmax.xlane.f32.xlu0 %v2464
        %v2466 = vpop.xlane.xlu0 %2465
        %v2467 = vsel %vm1189, %v2450, -inf
        %2468 = vmax.xlane.f32.xlu0 %v2467
        %v2469 = vpop.xlane.xlu0 %2468
        %v2470 = vsub.f32 %v2435, %v2454
        %v2471 = vsub.f32 %v2438, %v2457
        %v2472 = vsub.f32 %v2441, %v2460
        %v2473 = vsub.f32 %v2444, %v2463
        %v2474 = vsub.f32 %v2447, %v2466
        %v2475 = vsub.f32 %v2450, %v2469
        %v2476 = vmul.f32 %v2470, 1.442695
        %v2477 = vpow.pop %v2476
        %v2478 = vmul.f32 %v2471, 1.442695
        %v2479 = vpow.pop %v2478
        %v2480 = vmul.f32 %v2472, 1.442695
        %v2481 = vpow.pop %v2480
        %v2482 = vmul.f32 %v2473, 1.442695
        %v2483 = vpow.pop %v2482
        %v2484 = vmul.f32 %v2474, 1.442695
        %v2485 = vpow.pop %v2484
        %v2486 = vmul.f32 %v2475, 1.442695
        %v2487 = vpow.pop %v2486
        %v2488 = vsel %vm1189, %v2477, 0.0
        %2489 = vadd.xlane.f32.xlu0 %v2488
        %v2490 = vpop.xlane.xlu0 %2489
        %v2491 = vsel %vm1189, %v2479, 0.0
        %2492 = vadd.xlane.f32.xlu0 %v2491
        %v2493 = vpop.xlane.xlu0 %2492
        %v2494 = vsel %vm1189, %v2481, 0.0
        %2495 = vadd.xlane.f32.xlu0 %v2494
        %v2496 = vpop.xlane.xlu0 %2495
        %v2497 = vsel %vm1189, %v2483, 0.0
        %2498 = vadd.xlane.f32.xlu0 %v2497
        %v2499 = vpop.xlane.xlu0 %2498
        %v2500 = vsel %vm1189, %v2485, 0.0
        %2501 = vadd.xlane.f32.xlu0 %v2500
        %v2502 = vpop.xlane.xlu0 %2501
        %v2503 = vsel %vm1189, %v2487, 0.0
        %2504 = vadd.xlane.f32.xlu0 %v2503
        %v2505 = vpop.xlane.xlu0 %2504
        %v2506 = vrcp.pop %v2490
        %v2507 = vrcp.pop %v2493
        %v2508 = vrcp.pop %v2496
        %v2509 = vrcp.pop %v2499
        %v2510 = vrcp.pop %v2502
        %v2511 = vrcp.pop %v2505
        %v2512 = vmul.f32 %v2477, %v2506
        %v2513 = vmul.f32 %v2479, %v2507
        %v2514 = vmul.f32 %v2481, %v2508
        %v2515 = vmul.f32 %v2483, %v2509
        %v2516 = vmul.f32 %v2485, %v2510
        %v2517 = vmul.f32 %v2487, %v2511
        %v2519 = vsel %vm1189, %v2512, 0
        %v2522 = vsel %vm1189, %v2513, 0
        %v2525 = vsel %vm1189, %v2514, 0
        %v2528 = vsel %vm1189, %v2515, 0
        %v2531 = vsel %vm1189, %v2516, 0
        %v2534 = vsel %vm1189, %v2517, 0
        %2536 = vmatpush.msra.mxu0 0.0
        %2537 = vmatpush.msra.mxu0 0.0
        %2538 = vmatpush.msra.mxu0 0.0
        %2539 = vmatpush.msra.mxu0 0.0
        %2540 = vmatpush.msra.mxu0 0.0
        %2541 = vmatpush.msra.mxu0 0.0
        %2542 = vmatpush.msra.mxu0 0.0
        %2543 = vmatpush.msra.mxu0 0.0
        %2544 = vmatpush.msra.mxu0 0.0
        %2545 = vmatpush.msra.mxu0 0.0
        %2546 = vmatpush.msra.mxu0 %v2379
        %2547 = vmatpush.msra.mxu0 %v2376
        %2548 = vmatpush.msra.mxu0 %v2373
        %2549 = vmatpush.msra.mxu0 %v2370
        %2550 = vmatpush.msra.mxu0 %v2367
        %2551 = vmatpush.msra.mxu0 %v2364
        %2552 = vmatmul.f32.gmra.mxu0 %v2519
        %v2553 = vpop.f32.mrf.mxu0
        %v2554 = vadd.f32 0.0, %v2553
        %2555 = vmatmul.f32.gmra.mxu0 %v2522
        %v2556 = vpop.f32.mrf.mxu0
        %v2557 = vadd.f32 0.0, %v2556
        %2558 = vmatmul.f32.gmra.mxu0 %v2525
        %v2559 = vpop.f32.mrf.mxu0
        %v2560 = vadd.f32 0.0, %v2559
        %2561 = vmatmul.f32.gmra.mxu0 %v2528
        %v2562 = vpop.f32.mrf.mxu0
        %v2563 = vadd.f32 0.0, %v2562
        %2564 = vmatmul.f32.gmra.mxu0 %v2531
        %v2565 = vpop.f32.mrf.mxu0
        %v2566 = vadd.f32 0.0, %v2565
        %2567 = vmatmul.f32.gmra.mxu0 %v2534
        %v2568 = vpop.f32.mrf.mxu0
        %v2569 = vadd.f32 0.0, %v2568
        %2570 = vdwg.mxu0
        %s2571 = scalar_lea.vmem %s492, 96
        %v2572 = vld [vmem:[%s2571] sm:$0xff]
        %v2573 = vld [vmem:[%s2571 + $0x8] sm:$0xff]
        %v2574 = vld [vmem:[%s2571 + $0x10] sm:$0xff]
        %v2575 = vld [vmem:[%s2571 + $0x18] sm:$0xff]
        %v2577 = vsel %vm1117, %v2554, 0
        %v2580 = vsel %vm1117, %v2557, 0
        %v2583 = vsel %vm1117, %v2560, 0
        %v2586 = vsel %vm1117, %v2563, 0
        %v2589 = vsel %vm1117, %v2566, 0
        %v2592 = vsel %vm1117, %v2569, 0
        %2594 = vmatpush.msra.mxu0 0.0
        %2595 = vmatpush.msra.mxu0 0.0
        %2596 = vmatpush.msra.mxu0 0.0
        %2597 = vmatpush.msra.mxu0 0.0
        %2598 = vmatpush.msra.mxu0 0.0
        %2599 = vmatpush.msra.mxu0 0.0
        %2600 = vmatpush.msra.mxu0 0.0
        %2601 = vmatpush.msra.mxu0 0.0
        %2602 = vmatpush.msra.mxu0 0.0
        %2603 = vmatpush.msra.mxu0 0.0
        %2604 = vmatpush.msra.mxu0 0.0
        %2605 = vmatpush.msra.mxu0 0.0
        %2606 = vmatpush.msra.mxu0 %v2575
        %2607 = vmatpush.msra.mxu0 %v2574
        %2608 = vmatpush.msra.mxu0 %v2573
        %2609 = vmatpush.msra.mxu0 %v2572
        %2610 = vmatmul.f32.gmra.mxu0 %v2577
        %v2611 = vpop.f32.mrf.mxu0
        %v2612 = vadd.f32 0.0, %v2611
        %2613 = vmatmul.f32.gmra.mxu0 %v2580
        %v2614 = vpop.f32.mrf.mxu0
        %v2615 = vadd.f32 0.0, %v2614
        %2616 = vmatmul.f32.gmra.mxu0 %v2583
        %v2617 = vpop.f32.mrf.mxu0
        %v2618 = vadd.f32 0.0, %v2617
        %2619 = vmatmul.f32.gmra.mxu0 %v2586
        %v2620 = vpop.f32.mrf.mxu0
        %v2621 = vadd.f32 0.0, %v2620
        %2622 = vmatmul.f32.gmra.mxu0 %v2589
        %v2623 = vpop.f32.mrf.mxu0
        %v2624 = vadd.f32 0.0, %v2623
        %2625 = vmatmul.f32.gmra.mxu0 %v2592
        %v2626 = vpop.f32.mrf.mxu0
        %v2627 = vadd.f32 0.0, %v2626
        %2628 = vdwg.mxu0
        %v2629 = vadd.f32 %v2204, %v2612
        %v2630 = vadd.f32 %v2205, %v2615
        %v2631 = vadd.f32 %v2206, %v2618
        %v2632 = vadd.f32 %v2207, %v2621
        %v2633 = vadd.f32 %v2208, %v2624
        %v2634 = vadd.f32 %v2209, %v2627
        %v2635 = vadd.f32 %v794, %v2629
        %v2636 = vadd.f32 %v795, %v2630
        %v2637 = vadd.f32 %v796, %v2631
        %v2638 = vadd.f32 %v797, %v2632
        %v2639 = vadd.f32 %v798, %v2633
        %v2640 = vadd.f32 %v799, %v2634
        %v2641 = vperm.slane %v800, 4
        %v2642 = vadd.f32 %v2635, %v2641
        %v2643 = vadd.f32 %v2636, %v2641
        %v2644 = vadd.f32 %v2637, %v2641
        %v2645 = vadd.f32 %v2638, %v2641
        %v2646 = vadd.f32 %v2639, %v2641
        %v2647 = vadd.f32 %v2640, %v2641
        %2648 = vadd.xlane.f32.xlu0 %v2642
        %v2649 = vpop.xlane.xlu0 %2648
        %2650 = vadd.xlane.f32.xlu0 %v2643
        %v2651 = vpop.xlane.xlu0 %2650
        %2652 = vadd.xlane.f32.xlu0 %v2644
        %v2653 = vpop.xlane.xlu0 %2652
        %2654 = vadd.xlane.f32.xlu0 %v2645
        %v2655 = vpop.xlane.xlu0 %2654
        %2656 = vadd.xlane.f32.xlu0 %v2646
        %v2657 = vpop.xlane.xlu0 %2656
        %2658 = vadd.xlane.f32.xlu0 %v2647
        %v2659 = vpop.xlane.xlu0 %2658
        %v2660 = vmul.f32 %v2649, %v819
        %v2661 = vmul.f32 %v2651, %v819
        %v2662 = vmul.f32 %v2653, %v819
        %v2663 = vmul.f32 %v2655, %v819
        %v2664 = vmul.f32 %v2657, %v819
        %v2665 = vmul.f32 %v2659, %v819
        %v2666 = vsub.f32 %v2642, %v2660
        %v2667 = vsub.f32 %v2643, %v2661
        %v2668 = vsub.f32 %v2644, %v2662
        %v2669 = vsub.f32 %v2645, %v2663
        %v2670 = vsub.f32 %v2646, %v2664
        %v2671 = vsub.f32 %v2647, %v2665
        %v2672 = vmul.f32 %v2666, %v2666
        %v2673 = vmul.f32 %v2667, %v2667
        %v2674 = vmul.f32 %v2668, %v2668
        %v2675 = vmul.f32 %v2669, %v2669
        %v2676 = vmul.f32 %v2670, %v2670
        %v2677 = vmul.f32 %v2671, %v2671
        %2678 = vadd.xlane.f32.xlu0 %v2672
        %v2679 = vpop.xlane.xlu0 %2678
        %2680 = vadd.xlane.f32.xlu0 %v2673
        %v2681 = vpop.xlane.xlu0 %2680
        %2682 = vadd.xlane.f32.xlu0 %v2674
        %v2683 = vpop.xlane.xlu0 %2682
        %2684 = vadd.xlane.f32.xlu0 %v2675
        %v2685 = vpop.xlane.xlu0 %2684
        %2686 = vadd.xlane.f32.xlu0 %v2676
        %v2687 = vpop.xlane.xlu0 %2686
        %2688 = vadd.xlane.f32.xlu0 %v2677
        %v2689 = vpop.xlane.xlu0 %2688
        %v2690 = vmul.f32 %v2679, %v819
        %v2691 = vmul.f32 %v2681, %v819
        %v2692 = vmul.f32 %v2683, %v819
        %v2693 = vmul.f32 %v2685, %v819
        %v2694 = vmul.f32 %v2687, %v819
        %v2695 = vmul.f32 %v2689, %v819
        %v2696 = vadd.f32 %v2690, 1e-05
        %v2697 = vadd.f32 %v2691, 1e-05
        %v2698 = vadd.f32 %v2692, 1e-05
        %v2699 = vadd.f32 %v2693, 1e-05
        %v2700 = vadd.f32 %v2694, 1e-05
        %v2701 = vadd.f32 %v2695, 1e-05
        %v2702 = vrsqrt.pop %v2696
        %v2703 = vmul.f32 %v2702, %v2696
        %v2704 = vmul.f32 %v2703, %v2702
        %v2705 = vmul.f32 0.5, %v2704
        %v2706 = vsub.f32 1.5, %v2705
        %v2707 = vmul.f32 %v2702, %v2706
        %vm2708 = vweird.f32 %v2696
        %vm2709 = vweird.f32 %v2702
        %vm2710 = vmor %vm2708, %vm2709
        %v2711 = vsel %vm2710, %v2702, %v2707
        %v2712 = vrsqrt.pop %v2697
        %v2713 = vmul.f32 %v2712, %v2697
        %v2714 = vmul.f32 %v2713, %v2712
        %v2715 = vmul.f32 0.5, %v2714
        %v2716 = vsub.f32 1.5, %v2715
        %v2717 = vmul.f32 %v2712, %v2716
        %vm2718 = vweird.f32 %v2697
        %vm2719 = vweird.f32 %v2712
        %vm2720 = vmor %vm2718, %vm2719
        %v2721 = vsel %vm2720, %v2712, %v2717
        %v2722 = vrsqrt.pop %v2698
        %v2723 = vmul.f32 %v2722, %v2698
        %v2724 = vmul.f32 %v2723, %v2722
        %v2725 = vmul.f32 0.5, %v2724
        %v2726 = vsub.f32 1.5, %v2725
        %v2727 = vmul.f32 %v2722, %v2726
        %vm2728 = vweird.f32 %v2698
        %vm2729 = vweird.f32 %v2722
        %vm2730 = vmor %vm2728, %vm2729
        %v2731 = vsel %vm2730, %v2722, %v2727
        %v2732 = vrsqrt.pop %v2699
        %v2733 = vmul.f32 %v2732, %v2699
        %v2734 = vmul.f32 %v2733, %v2732
        %v2735 = vmul.f32 0.5, %v2734
        %v2736 = vsub.f32 1.5, %v2735
        %v2737 = vmul.f32 %v2732, %v2736
        %vm2738 = vweird.f32 %v2699
        %vm2739 = vweird.f32 %v2732
        %vm2740 = vmor %vm2738, %vm2739
        %v2741 = vsel %vm2740, %v2732, %v2737
        %v2742 = vrsqrt.pop %v2700
        %v2743 = vmul.f32 %v2742, %v2700
        %v2744 = vmul.f32 %v2743, %v2742
        %v2745 = vmul.f32 0.5, %v2744
        %v2746 = vsub.f32 1.5, %v2745
        %v2747 = vmul.f32 %v2742, %v2746
        %vm2748 = vweird.f32 %v2700
        %vm2749 = vweird.f32 %v2742
        %vm2750 = vmor %vm2748, %vm2749
        %v2751 = vsel %vm2750, %v2742, %v2747
        %v2752 = vrsqrt.pop %v2701
        %v2753 = vmul.f32 %v2752, %v2701
        %v2754 = vmul.f32 %v2753, %v2752
        %v2755 = vmul.f32 0.5, %v2754
        %v2756 = vsub.f32 1.5, %v2755
        %v2757 = vmul.f32 %v2752, %v2756
        %vm2758 = vweird.f32 %v2701
        %vm2759 = vweird.f32 %v2752
        %vm2760 = vmor %vm2758, %vm2759
        %v2761 = vsel %vm2760, %v2752, %v2757
        %v2762 = vmul.f32 %v2666, %v2711
        %v2763 = vmul.f32 %v2667, %v2721
        %v2764 = vmul.f32 %v2668, %v2731
        %v2765 = vmul.f32 %v2669, %v2741
        %v2766 = vmul.f32 %v2670, %v2751
        %v2767 = vmul.f32 %v2671, %v2761
        %v2768 = vperm.slane %v800, 2
        %v2769 = vmul.f32 %v2762, %v2768
        %v2770 = vmul.f32 %v2763, %v2768
        %v2771 = vmul.f32 %v2764, %v2768
        %v2772 = vmul.f32 %v2765, %v2768
        %v2773 = vmul.f32 %v2766, %v2768
        %v2774 = vmul.f32 %v2767, %v2768
        %v2775 = vperm.slane %v800, 3
        %v2776 = vadd.f32 %v2769, %v2775
        %v2777 = vadd.f32 %v2770, %v2775
        %v2778 = vadd.f32 %v2771, %v2775
        %v2779 = vadd.f32 %v2772, %v2775
        %v2780 = vadd.f32 %v2773, %v2775
        %v2781 = vadd.f32 %v2774, %v2775
        %v2782 = vld [vmem:[%s501] sm:$0xff]
        %v2783 = vld [vmem:[%s501 + $0x8] sm:$0xff]
        %v2784 = vld [vmem:[%s501 + $0x10] sm:$0xff]
        %v2785 = vld [vmem:[%s501 + $0x18] sm:$0xff]
        %v2786 = vld [vmem:[%s501 + $0x20] sm:$0xff]
        %v2787 = vld [vmem:[%s501 + $0x28] sm:$0xff]
        %v2788 = vld [vmem:[%s501 + $0x30] sm:$0xff]
        %v2789 = vld [vmem:[%s501 + $0x38] sm:$0xff]
        %v2790 = vld [vmem:[%s501 + $0x40] sm:$0xff]
        %v2791 = vld [vmem:[%s501 + $0x48] sm:$0xff]
        %v2792 = vld [vmem:[%s501 + $0x50] sm:$0xff]
        %v2793 = vld [vmem:[%s501 + $0x58] sm:$0xff]
        %v2794 = vld [vmem:[%s501 + $0x60] sm:$0xff]
        %v2795 = vld [vmem:[%s501 + $0x68] sm:$0xff]
        %v2796 = vld [vmem:[%s501 + $0x70] sm:$0xff]
        %v2797 = vld [vmem:[%s501 + $0x78] sm:$0xff]
        %v2798 = vld [vmem:[%s501 + $0x80] sm:$0xff]
        %v2799 = vld [vmem:[%s501 + $0x88] sm:$0xff]
        %v2800 = vld [vmem:[%s501 + $0x90] sm:$0xff]
        %v2801 = vld [vmem:[%s501 + $0x98] sm:$0xff]
        %v2802 = vld [vmem:[%s501 + $0xa0] sm:$0xff]
        %v2803 = vld [vmem:[%s501 + $0xa8] sm:$0xff]
        %v2804 = vld [vmem:[%s501 + $0xb0] sm:$0xff]
        %v2805 = vld [vmem:[%s501 + $0xb8] sm:$0xff]
        %v2806 = vld [vmem:[%s501 + $0xc0] sm:$0xff]
        %v2807 = vld [vmem:[%s501 + $0xc8] sm:$0xff]
        %v2808 = vld [vmem:[%s501 + $0xd0] sm:$0xff]
        %v2809 = vld [vmem:[%s501 + $0xd8] sm:$0xff]
        %v2810 = vld [vmem:[%s501 + $0xe0] sm:$0xff]
        %v2811 = vld [vmem:[%s501 + $0xe8] sm:$0xff]
        %v2812 = vld [vmem:[%s501 + $0xf0] sm:$0xff]
        %v2813 = vld [vmem:[%s501 + $0xf8] sm:$0xff]
        %v2814 = vld [vmem:[%s505] sm:$0x3]
        %v2816 = vperm.slane %v2814, 0
        %v2817 = vperm.slane %v2814, 1
        %2820 = vmatpush.msra.mxu0 %v2812
        %2821 = vmatpush.msra.mxu0 %v2810
        %2822 = vmatpush.msra.mxu0 %v2808
        %2823 = vmatpush.msra.mxu0 %v2806
        %2824 = vmatpush.msra.mxu0 %v2804
        %2825 = vmatpush.msra.mxu0 %v2802
        %2826 = vmatpush.msra.mxu0 %v2800
        %2827 = vmatpush.msra.mxu0 %v2798
        %2828 = vmatpush.msra.mxu0 %v2796
        %2829 = vmatpush.msra.mxu0 %v2794
        %2830 = vmatpush.msra.mxu0 %v2792
        %2831 = vmatpush.msra.mxu0 %v2790
        %2832 = vmatpush.msra.mxu0 %v2788
        %2833 = vmatpush.msra.mxu0 %v2786
        %2834 = vmatpush.msra.mxu0 %v2784
        %2835 = vmatpush.msra.mxu0 %v2782
        %2836 = vmatmul.f32.gmra.mxu0 %v2776
        %v2837 = vpop.f32.mrf.mxu0
        %v2838 = vadd.f32 %v2816, %v2837
        %2839 = vmatmul.f32.gmra.mxu0 %v2777
        %v2840 = vpop.f32.mrf.mxu0
        %v2841 = vadd.f32 %v2816, %v2840
        %2842 = vmatmul.f32.gmra.mxu0 %v2778
        %v2843 = vpop.f32.mrf.mxu0
        %v2844 = vadd.f32 %v2816, %v2843
        %2845 = vmatmul.f32.gmra.mxu0 %v2779
        %v2846 = vpop.f32.mrf.mxu0
        %v2847 = vadd.f32 %v2816, %v2846
        %2848 = vmatmul.f32.gmra.mxu0 %v2780
        %v2849 = vpop.f32.mrf.mxu0
        %v2850 = vadd.f32 %v2816, %v2849
        %2851 = vmatmul.f32.gmra.mxu0 %v2781
        %v2852 = vpop.f32.mrf.mxu0
        %v2853 = vadd.f32 %v2816, %v2852
        %2854 = vdwg.mxu0
        %2855 = vmatpush.msra.mxu0 %v2813
        %2856 = vmatpush.msra.mxu0 %v2811
        %2857 = vmatpush.msra.mxu0 %v2809
        %2858 = vmatpush.msra.mxu0 %v2807
        %2859 = vmatpush.msra.mxu0 %v2805
        %2860 = vmatpush.msra.mxu0 %v2803
        %2861 = vmatpush.msra.mxu0 %v2801
        %2862 = vmatpush.msra.mxu0 %v2799
        %2863 = vmatpush.msra.mxu0 %v2797
        %2864 = vmatpush.msra.mxu0 %v2795
        %2865 = vmatpush.msra.mxu0 %v2793
        %2866 = vmatpush.msra.mxu0 %v2791
        %2867 = vmatpush.msra.mxu0 %v2789
        %2868 = vmatpush.msra.mxu0 %v2787
        %2869 = vmatpush.msra.mxu0 %v2785
        %2870 = vmatpush.msra.mxu0 %v2783
        %2871 = vmatmul.f32.gmra.mxu0 %v2776
        %v2872 = vpop.f32.mrf.mxu0
        %v2873 = vadd.f32 %v2817, %v2872
        %2874 = vmatmul.f32.gmra.mxu0 %v2777
        %v2875 = vpop.f32.mrf.mxu0
        %v2876 = vadd.f32 %v2817, %v2875
        %2877 = vmatmul.f32.gmra.mxu0 %v2778
        %v2878 = vpop.f32.mrf.mxu0
        %v2879 = vadd.f32 %v2817, %v2878
        %2880 = vmatmul.f32.gmra.mxu0 %v2779
        %v2881 = vpop.f32.mrf.mxu0
        %v2882 = vadd.f32 %v2817, %v2881
        %2883 = vmatmul.f32.gmra.mxu0 %v2780
        %v2884 = vpop.f32.mrf.mxu0
        %v2885 = vadd.f32 %v2817, %v2884
        %2886 = vmatmul.f32.gmra.mxu0 %v2781
        %v2887 = vpop.f32.mrf.mxu0
        %v2888 = vadd.f32 %v2817, %v2887
        %2889 = vdwg.mxu0
        %v2890 = vmul.f32 %v2838, 1.702
        %v2891 = vmul.f32 %v2873, 1.702
        %v2892 = vmul.f32 %v2841, 1.702
        %v2893 = vmul.f32 %v2876, 1.702
        %v2894 = vmul.f32 %v2844, 1.702
        %v2895 = vmul.f32 %v2879, 1.702
        %v2896 = vmul.f32 %v2847, 1.702
        %v2897 = vmul.f32 %v2882, 1.702
        %v2898 = vmul.f32 %v2850, 1.702
        %v2899 = vmul.f32 %v2885, 1.702
        %v2900 = vmul.f32 %v2853, 1.702
        %v2901 = vmul.f32 %v2888, 1.702
        %v2902 = vxor.u32 %v2890, 2147483648
        %v2903 = vxor.u32 %v2891, 2147483648
        %v2904 = vxor.u32 %v2892, 2147483648
        %v2905 = vxor.u32 %v2893, 2147483648
        %v2906 = vxor.u32 %v2894, 2147483648
        %v2907 = vxor.u32 %v2895, 2147483648
        %v2908 = vxor.u32 %v2896, 2147483648
        %v2909 = vxor.u32 %v2897, 2147483648
        %v2910 = vxor.u32 %v2898, 2147483648
        %v2911 = vxor.u32 %v2899, 2147483648
        %v2912 = vxor.u32 %v2900, 2147483648
        %v2913 = vxor.u32 %v2901, 2147483648
        %v2914 = vmul.f32 %v2902, 1.442695
        %v2915 = vpow.pop %v2914
        %v2916 = vmul.f32 %v2903, 1.442695
        %v2917 = vpow.pop %v2916
        %v2918 = vmul.f32 %v2904, 1.442695
        %v2919 = vpow.pop %v2918
        %v2920 = vmul.f32 %v2905, 1.442695
        %v2921 = vpow.pop %v2920
        %v2922 = vmul.f32 %v2906, 1.442695
        %v2923 = vpow.pop %v2922
        %v2924 = vmul.f32 %v2907, 1.442695
        %v2925 = vpow.pop %v2924
        %v2926 = vmul.f32 %v2908, 1.442695
        %v2927 = vpow.pop %v2926
        %v2928 = vmul.f32 %v2909, 1.442695
        %v2929 = vpow.pop %v2928
        %v2930 = vmul.f32 %v2910, 1.442695
        %v2931 = vpow.pop %v2930
        %v2932 = vmul.f32 %v2911, 1.442695
        %v2933 = vpow.pop %v2932
        %v2934 = vmul.f32 %v2912, 1.442695
        %v2935 = vpow.pop %v2934
        %v2936 = vmul.f32 %v2913, 1.442695
        %v2937 = vpow.pop %v2936
        %v2938 = vadd.f32 %v2915, 1.0
        %v2939 = vadd.f32 %v2917, 1.0
        %v2940 = vadd.f32 %v2919, 1.0
        %v2941 = vadd.f32 %v2921, 1.0
        %v2942 = vadd.f32 %v2923, 1.0
        %v2943 = vadd.f32 %v2925, 1.0
        %v2944 = vadd.f32 %v2927, 1.0
        %v2945 = vadd.f32 %v2929, 1.0
        %v2946 = vadd.f32 %v2931, 1.0
        %v2947 = vadd.f32 %v2933, 1.0
        %v2948 = vadd.f32 %v2935, 1.0
        %v2949 = vadd.f32 %v2937, 1.0
        %v2950 = vrcp.pop %v2938
        %v2951 = vmul.f32 %v2938, %v2950
        %v2952 = vsub.f32 1.0, %v2951
        %v2953 = vmul.f32 %v2950, %v2952
        %v2954 = vadd.f32 %v2950, %v2953
        %vm2955 = vweird.f32 %v2938
        %vm2956 = vweird.f32 %v2950
        %vm2957 = vmor %vm2955, %vm2956
        %v2958 = vsel %vm2957, %v2950, %v2954
        %v2959 = vand.u32 2147483647, %v2938
        %vm2960 = vcmp.eq.f32.partialorder %v2959, 8.507059e+37
        %v2961 = vand.u32 %v2938, 2147483648
        %v2962 = vor.u32 1.1754944e-38, %v2961
        %v2963 = vsel %vm2960, %v2962, %v2958
        %v2964 = vmul.f32 1.0, %v2963
        %v2965 = vrcp.pop %v2939
        %v2966 = vmul.f32 %v2939, %v2965
        %v2967 = vsub.f32 1.0, %v2966
        %v2968 = vmul.f32 %v2965, %v2967
        %v2969 = vadd.f32 %v2965, %v2968
        %vm2970 = vweird.f32 %v2939
        %vm2971 = vweird.f32 %v2965
        %vm2972 = vmor %vm2970, %vm2971
        %v2973 = vsel %vm2972, %v2965, %v2969
        %v2974 = vand.u32 2147483647, %v2939
        %vm2975 = vcmp.eq.f32.partialorder %v2974, 8.507059e+37
        %v2976 = vand.u32 %v2939, 2147483648
        %v2977 = vor.u32 1.1754944e-38, %v2976
        %v2978 = vsel %vm2975, %v2977, %v2973
        %v2979 = vmul.f32 1.0, %v2978
        %v2980 = vrcp.pop %v2940
        %v2981 = vmul.f32 %v2940, %v2980
        %v2982 = vsub.f32 1.0, %v2981
        %v2983 = vmul.f32 %v2980, %v2982
        %v2984 = vadd.f32 %v2980, %v2983
        %vm2985 = vweird.f32 %v2940
        %vm2986 = vweird.f32 %v2980
        %vm2987 = vmor %vm2985, %vm2986
        %v2988 = vsel %vm2987, %v2980, %v2984
        %v2989 = vand.u32 2147483647, %v2940
        %vm2990 = vcmp.eq.f32.partialorder %v2989, 8.507059e+37
        %v2991 = vand.u32 %v2940, 2147483648
        %v2992 = vor.u32 1.1754944e-38, %v2991
        %v2993 = vsel %vm2990, %v2992, %v2988
        %v2994 = vmul.f32 1.0, %v2993
        %v2995 = vrcp.pop %v2941
        %v2996 = vmul.f32 %v2941, %v2995
        %v2997 = vsub.f32 1.0, %v2996
        %v2998 = vmul.f32 %v2995, %v2997
        %v2999 = vadd.f32 %v2995, %v2998
        %vm3000 = vweird.f32 %v2941
        %vm3001 = vweird.f32 %v2995
        %vm3002 = vmor %vm3000, %vm3001
        %v3003 = vsel %vm3002, %v2995, %v2999
        %v3004 = vand.u32 2147483647, %v2941
        %vm3005 = vcmp.eq.f32.partialorder %v3004, 8.507059e+37
        %v3006 = vand.u32 %v2941, 2147483648
        %v3007 = vor.u32 1.1754944e-38, %v3006
        %v3008 = vsel %vm3005, %v3007, %v3003
        %v3009 = vmul.f32 1.0, %v3008
        %v3010 = vrcp.pop %v2942
        %v3011 = vmul.f32 %v2942, %v3010
        %v3012 = vsub.f32 1.0, %v3011
        %v3013 = vmul.f32 %v3010, %v3012
        %v3014 = vadd.f32 %v3010, %v3013
        %vm3015 = vweird.f32 %v2942
        %vm3016 = vweird.f32 %v3010
        %vm3017 = vmor %vm3015, %vm3016
        %v3018 = vsel %vm3017, %v3010, %v3014
        %v3019 = vand.u32 2147483647, %v2942
        %vm3020 = vcmp.eq.f32.partialorder %v3019, 8.507059e+37
        %v3021 = vand.u32 %v2942, 2147483648
        %v3022 = vor.u32 1.1754944e-38, %v3021
        %v3023 = vsel %vm3020, %v3022, %v3018
        %v3024 = vmul.f32 1.0, %v3023
        %v3025 = vrcp.pop %v2943
        %v3026 = vmul.f32 %v2943, %v3025
        %v3027 = vsub.f32 1.0, %v3026
        %v3028 = vmul.f32 %v3025, %v3027
        %v3029 = vadd.f32 %v3025, %v3028
        %vm3030 = vweird.f32 %v2943
        %vm3031 = vweird.f32 %v3025
        %vm3032 = vmor %vm3030, %vm3031
        %v3033 = vsel %vm3032, %v3025, %v3029
        %v3034 = vand.u32 2147483647, %v2943
        %vm3035 = vcmp.eq.f32.partialorder %v3034, 8.507059e+37
        %v3036 = vand.u32 %v2943, 2147483648
        %v3037 = vor.u32 1.1754944e-38, %v3036
        %v3038 = vsel %vm3035, %v3037, %v3033
        %v3039 = vmul.f32 1.0, %v3038
        %v3040 = vrcp.pop %v2944
        %v3041 = vmul.f32 %v2944, %v3040
        %v3042 = vsub.f32 1.0, %v3041
        %v3043 = vmul.f32 %v3040, %v3042
        %v3044 = vadd.f32 %v3040, %v3043
        %vm3045 = vweird.f32 %v2944
        %vm3046 = vweird.f32 %v3040
        %vm3047 = vmor %vm3045, %vm3046
        %v3048 = vsel %vm3047, %v3040, %v3044
        %v3049 = vand.u32 2147483647, %v2944
        %vm3050 = vcmp.eq.f32.partialorder %v3049, 8.507059e+37
        %v3051 = vand.u32 %v2944, 2147483648
        %v3052 = vor.u32 1.1754944e-38, %v3051
        %v3053 = vsel %vm3050, %v3052, %v3048
        %v3054 = vmul.f32 1.0, %v3053
        %v3055 = vrcp.pop %v2945
        %v3056 = vmul.f32 %v2945, %v3055
        %v3057 = vsub.f32 1.0, %v3056
        %v3058 = vmul.f32 %v3055, %v3057
        %v3059 = vadd.f32 %v3055, %v3058
        %vm3060 = vweird.f32 %v2945
        %vm3061 = vweird.f32 %v3055
        %vm3062 = vmor %vm3060, %vm3061
        %v3063 = vsel %vm3062, %v3055, %v3059
        %v3064 = vand.u32 2147483647, %v2945
        %vm3065 = vcmp.eq.f32.partialorder %v3064, 8.507059e+37
        %v3066 = vand.u32 %v2945, 2147483648
        %v3067 = vor.u32 1.1754944e-38, %v3066
        %v3068 = vsel %vm3065, %v3067, %v3063
        %v3069 = vmul.f32 1.0, %v3068
        %v3070 = vrcp.pop %v2946
        %v3071 = vmul.f32 %v2946, %v3070
        %v3072 = vsub.f32 1.0, %v3071
        %v3073 = vmul.f32 %v3070, %v3072
        %v3074 = vadd.f32 %v3070, %v3073
        %vm3075 = vweird.f32 %v2946
        %vm3076 = vweird.f32 %v3070
        %vm3077 = vmor %vm3075, %vm3076
        %v3078 = vsel %vm3077, %v3070, %v3074
        %v3079 = vand.u32 2147483647, %v2946
        %vm3080 = vcmp.eq.f32.partialorder %v3079, 8.507059e+37
        %v3081 = vand.u32 %v2946, 2147483648
        %v3082 = vor.u32 1.1754944e-38, %v3081
        %v3083 = vsel %vm3080, %v3082, %v3078
        %v3084 = vmul.f32 1.0, %v3083
        %v3085 = vrcp.pop %v2947
        %v3086 = vmul.f32 %v2947, %v3085
        %v3087 = vsub.f32 1.0, %v3086
        %v3088 = vmul.f32 %v3085, %v3087
        %v3089 = vadd.f32 %v3085, %v3088
        %vm3090 = vweird.f32 %v2947
        %vm3091 = vweird.f32 %v3085
        %vm3092 = vmor %vm3090, %vm3091
        %v3093 = vsel %vm3092, %v3085, %v3089
        %v3094 = vand.u32 2147483647, %v2947
        %vm3095 = vcmp.eq.f32.partialorder %v3094, 8.507059e+37
        %v3096 = vand.u32 %v2947, 2147483648
        %v3097 = vor.u32 1.1754944e-38, %v3096
        %v3098 = vsel %vm3095, %v3097, %v3093
        %v3099 = vmul.f32 1.0, %v3098
        %v3100 = vrcp.pop %v2948
        %v3101 = vmul.f32 %v2948, %v3100
        %v3102 = vsub.f32 1.0, %v3101
        %v3103 = vmul.f32 %v3100, %v3102
        %v3104 = vadd.f32 %v3100, %v3103
        %vm3105 = vweird.f32 %v2948
        %vm3106 = vweird.f32 %v3100
        %vm3107 = vmor %vm3105, %vm3106
        %v3108 = vsel %vm3107, %v3100, %v3104
        %v3109 = vand.u32 2147483647, %v2948
        %vm3110 = vcmp.eq.f32.partialorder %v3109, 8.507059e+37
        %v3111 = vand.u32 %v2948, 2147483648
        %v3112 = vor.u32 1.1754944e-38, %v3111
        %v3113 = vsel %vm3110, %v3112, %v3108
        %v3114 = vmul.f32 1.0, %v3113
        %v3115 = vrcp.pop %v2949
        %v3116 = vmul.f32 %v2949, %v3115
        %v3117 = vsub.f32 1.0, %v3116
        %v3118 = vmul.f32 %v3115, %v3117
        %v3119 = vadd.f32 %v3115, %v3118
        %vm3120 = vweird.f32 %v2949
        %vm3121 = vweird.f32 %v3115
        %vm3122 = vmor %vm3120, %vm3121
        %v3123 = vsel %vm3122, %v3115, %v3119
        %v3124 = vand.u32 2147483647, %v2949
        %vm3125 = vcmp.eq.f32.partialorder %v3124, 8.507059e+37
        %v3126 = vand.u32 %v2949, 2147483648
        %v3127 = vor.u32 1.1754944e-38, %v3126
        %v3128 = vsel %vm3125, %v3127, %v3123
        %v3129 = vmul.f32 1.0, %v3128
        %v3130 = vmul.f32 %v2838, %v2964
        %v3131 = vmul.f32 %v2873, %v2979
        %v3132 = vmul.f32 %v2841, %v2994
        %v3133 = vmul.f32 %v2876, %v3009
        %v3134 = vmul.f32 %v2844, %v3024
        %v3135 = vmul.f32 %v2879, %v3039
        %v3136 = vmul.f32 %v2847, %v3054
        %v3137 = vmul.f32 %v2882, %v3069
        %v3138 = vmul.f32 %v2850, %v3084
        %v3139 = vmul.f32 %v2885, %v3099
        %v3140 = vmul.f32 %v2853, %v3114
        %v3141 = vmul.f32 %v2888, %v3129
        %v3142 = vld [vmem:[%s510] sm:$0xff]
        %v3143 = vld [vmem:[%s510 + $0x8] sm:$0xff]
        %v3144 = vld [vmem:[%s510 + $0x10] sm:$0xff]
        %v3145 = vld [vmem:[%s510 + $0x18] sm:$0xff]
        %v3146 = vld [vmem:[%s510 + $0x20] sm:$0xff]
        %v3147 = vld [vmem:[%s510 + $0x28] sm:$0xff]
        %v3148 = vld [vmem:[%s510 + $0x30] sm:$0xff]
        %v3149 = vld [vmem:[%s510 + $0x38] sm:$0xff]
        %v3150 = vld [vmem:[%s510 + $0x40] sm:$0xff]
        %v3151 = vld [vmem:[%s510 + $0x48] sm:$0xff]
        %v3152 = vld [vmem:[%s510 + $0x50] sm:$0xff]
        %v3153 = vld [vmem:[%s510 + $0x58] sm:$0xff]
        %v3154 = vld [vmem:[%s510 + $0x60] sm:$0xff]
        %v3155 = vld [vmem:[%s510 + $0x68] sm:$0xff]
        %v3156 = vld [vmem:[%s510 + $0x70] sm:$0xff]
        %v3157 = vld [vmem:[%s510 + $0x78] sm:$0xff]
        %v3158 = vld [vmem:[%s510 + $0x80] sm:$0xff]
        %v3159 = vld [vmem:[%s510 + $0x88] sm:$0xff]
        %v3160 = vld [vmem:[%s510 + $0x90] sm:$0xff]
        %v3161 = vld [vmem:[%s510 + $0x98] sm:$0xff]
        %v3162 = vld [vmem:[%s510 + $0xa0] sm:$0xff]
        %v3163 = vld [vmem:[%s510 + $0xa8] sm:$0xff]
        %v3164 = vld [vmem:[%s510 + $0xb0] sm:$0xff]
        %v3165 = vld [vmem:[%s510 + $0xb8] sm:$0xff]
        %v3166 = vld [vmem:[%s510 + $0xc0] sm:$0xff]
        %v3167 = vld [vmem:[%s510 + $0xc8] sm:$0xff]
        %v3168 = vld [vmem:[%s510 + $0xd0] sm:$0xff]
        %v3169 = vld [vmem:[%s510 + $0xd8] sm:$0xff]
        %v3170 = vld [vmem:[%s510 + $0xe0] sm:$0xff]
        %v3171 = vld [vmem:[%s510 + $0xe8] sm:$0xff]
        %v3172 = vld [vmem:[%s510 + $0xf0] sm:$0xff]
        %v3173 = vld [vmem:[%s510 + $0xf8] sm:$0xff]
        %3174 = vmatpush.msra.mxu0 %v3157
        %3175 = vmatpush.msra.mxu0 %v3156
        %3176 = vmatpush.msra.mxu0 %v3155
        %3177 = vmatpush.msra.mxu0 %v3154
        %3178 = vmatpush.msra.mxu0 %v3153
        %3179 = vmatpush.msra.mxu0 %v3152
        %3180 = vmatpush.msra.mxu0 %v3151
        %3181 = vmatpush.msra.mxu0 %v3150
        %3182 = vmatpush.msra.mxu0 %v3149
        %3183 = vmatpush.msra.mxu0 %v3148
        %3184 = vmatpush.msra.mxu0 %v3147
        %3185 = vmatpush.msra.mxu0 %v3146
        %3186 = vmatpush.msra.mxu0 %v3145
        %3187 = vmatpush.msra.mxu0 %v3144
        %3188 = vmatpush.msra.mxu0 %v3143
        %3189 = vmatpush.msra.mxu0 %v3142
        %3190 = vmatmul.f32.gmra.mxu0 %v3130
        %v3191 = vpop.f32.mrf.mxu0
        %v3192 = vadd.f32 0.0, %v3191
        %3193 = vmatmul.f32.gmra.mxu0 %v3132
        %v3194 = vpop.f32.mrf.mxu0
        %v3195 = vadd.f32 0.0, %v3194
        %3196 = vmatmul.f32.gmra.mxu0 %v3134
        %v3197 = vpop.f32.mrf.mxu0
        %v3198 = vadd.f32 0.0, %v3197
        %3199 = vmatmul.f32.gmra.mxu0 %v3136
        %v3200 = vpop.f32.mrf.mxu0
        %v3201 = vadd.f32 0.0, %v3200
        %3202 = vmatmul.f32.gmra.mxu0 %v3138
        %v3203 = vpop.f32.mrf.mxu0
        %v3204 = vadd.f32 0.0, %v3203
        %3205 = vmatmul.f32.gmra.mxu0 %v3140
        %v3206 = vpop.f32.mrf.mxu0
        %v3207 = vadd.f32 0.0, %v3206
        %3208 = vdwg.mxu0
        %3209 = vmatpush.msra.mxu0 %v3173
        %3210 = vmatpush.msra.mxu0 %v3172
        %3211 = vmatpush.msra.mxu0 %v3171
        %3212 = vmatpush.msra.mxu0 %v3170
        %3213 = vmatpush.msra.mxu0 %v3169
        %3214 = vmatpush.msra.mxu0 %v3168
        %3215 = vmatpush.msra.mxu0 %v3167
        %3216 = vmatpush.msra.mxu0 %v3166
        %3217 = vmatpush.msra.mxu0 %v3165
        %3218 = vmatpush.msra.mxu0 %v3164
        %3219 = vmatpush.msra.mxu0 %v3163
        %3220 = vmatpush.msra.mxu0 %v3162
        %3221 = vmatpush.msra.mxu0 %v3161
        %3222 = vmatpush.msra.mxu0 %v3160
        %3223 = vmatpush.msra.mxu0 %v3159
        %3224 = vmatpush.msra.mxu0 %v3158
        %3225 = vmatmul.f32.gmra.mxu0 %v3131
        %v3226 = vpop.f32.mrf.mxu0
        %v3227 = vadd.f32 %v3192, %v3226
        %3228 = vmatmul.f32.gmra.mxu0 %v3133
        %v3229 = vpop.f32.mrf.mxu0
        %v3230 = vadd.f32 %v3195, %v3229
        %3231 = vmatmul.f32.gmra.mxu0 %v3135
        %v3232 = vpop.f32.mrf.mxu0
        %v3233 = vadd.f32 %v3198, %v3232
        %3234 = vmatmul.f32.gmra.mxu0 %v3137
        %v3235 = vpop.f32.mrf.mxu0
        %v3236 = vadd.f32 %v3201, %v3235
        %3237 = vmatmul.f32.gmra.mxu0 %v3139
        %v3238 = vpop.f32.mrf.mxu0
        %v3239 = vadd.f32 %v3204, %v3238
        %3240 = vmatmul.f32.gmra.mxu0 %v3141
        %v3241 = vpop.f32.mrf.mxu0
        %v3242 = vadd.f32 %v3207, %v3241
        %3243 = vdwg.mxu0
        %v3244 = vadd.f32 %v2642, %v3227
        %v3245 = vadd.f32 %v2643, %v3230
        %v3246 = vadd.f32 %v2644, %v3233
        %v3247 = vadd.f32 %v2645, %v3236
        %v3248 = vadd.f32 %v2646, %v3239
        %v3249 = vadd.f32 %v2647, %v3242
        %v3250 = vperm.slane %v800, 5
        %v3251 = vadd.f32 %v3244, %v3250
        %v3252 = vadd.f32 %v3245, %v3250
        %v3253 = vadd.f32 %v3246, %v3250
        %v3254 = vadd.f32 %v3247, %v3250
        %v3255 = vadd.f32 %v3248, %v3250
        %v3256 = vadd.f32 %v3249, %v3250
        %3257 = vst [vmem:[#allocation2] sm:$0xff] %v3251
        %3258 = vst [vmem:[#allocation2 + $0x8] sm:$0xff] %v3252
        %3259 = vst [vmem:[#allocation2 + $0x10] sm:$0xff] %v3253
        %3260 = vst [vmem:[#allocation2 + $0x18] sm:$0xff] %v3254
        %3261 = vst [vmem:[#allocation2 + $0x20] sm:$0xff] %v3255
        %3262 = vst [vmem:[#allocation2 + $0x28] sm:$0xff] %v3256
        %p3263 = scmp.eq.s32.totalorder %s24, 1
        // Predicated region
        $region73: #{image_encoder_forward.1} parent=67 // pred_check
          %p3264 = pneg %p3263
        $region74: #{image_encoder_forward.1} parent=67 // pred_check_branch
          %3266 = sbr.rel (%p3264) target = $region76
        $region75: #{image_encoder_forward.1} parent=67 // pred_region
          %v3267 = vld [vmem:[%s3] sm:$0xff]
          %v3269 = vrot.slane %v3254, 7
          %vm3271 = vcmask 1040384
          %v3272 = vsel %vm3271, %v3251, %v3269
          %vm3273 = vcmask 1041408
          %v3274 = vsel %vm3273, %v3272, 0.0
          %3275 = vadd.xlane.f32.xlu0 %v3274
          %v3276 = vpop.xlane.xlu0 %3275
          %v3277 = vmul.f32 %v3276, %v819
          %v3278 = vsub.f32 %v3272, %v3277
          %v3279 = vmul.f32 %v3278, %v3278
          %v3280 = vsel %vm3273, %v3279, 0.0
          %3281 = vadd.xlane.f32.xlu0 %v3280
          %v3282 = vpop.xlane.xlu0 %3281
          %v3283 = vmul.f32 %v3282, %v819
          %v3284 = vadd.f32 %v3283, 1e-05
          %v3285 = vrsqrt.pop %v3284
          %v3286 = vmul.f32 %v3285, %v3284
          %v3287 = vmul.f32 %v3286, %v3285
          %v3288 = vmul.f32 0.5, %v3287
          %v3289 = vsub.f32 1.5, %v3288
          %v3290 = vmul.f32 %v3285, %v3289
          %vm3291 = vweird.f32 %v3284
          %vm3292 = vweird.f32 %v3285
          %vm3293 = vmor %vm3291, %vm3292
          %v3294 = vsel %vm3293, %v3285, %v3290
          %v3295 = vmul.f32 %v3278, %v3294
          %v3296 = vperm.slane %v3267, 2
          %v3297 = vmul.f32 %v3295, %v3296
          %v3298 = vperm.slane %v3267, 3
          %v3299 = vadd.f32 %v3297, %v3298
          %3300 = vst [vmem:[#allocation3] sm:$0x3] %v3299
        $region76: #{image_encoder_forward.1} parent=67 // pred_fallthru
          _
        // Predicated region
        $region77: #{image_encoder_forward.1} parent=67 // pred_check
          %p3301 = pneg %p324
        $region78: #{image_encoder_forward.1} parent=67 // pred_check_branch
          %3303 = sbr.rel (%p3301) target = $region80
        $region79: #{image_encoder_forward.1} parent=67 // pred_region
          %3305 = vsyncadd [#allocation4], 0
          %s3307 = sshll.u32 [#allocation3], 4
          %s3308 = int_to_ptr.vmem [resolvable:$true] %s3307
          %s3309 = sshll.u32 %s12, 4
          %s3310 = int_to_ptr.hbm [resolvable:$true] %s3309
          %3312 = dma.vmem_to_hbm [thread:$0]  %s3308, 32, %s3310, [#allocation4]
        $region80: #{image_encoder_forward.1} parent=67 // pred_fallthru
          _
        // Predicated region
        $region81: #{image_encoder_forward.1} parent=67 // pred_check
          %p3313 = pneg %p324
        $region82: #{image_encoder_forward.1} parent=67 // pred_check_branch
          %3315 = sbr.rel (%p3313) target = $region84
        $region83: #{image_encoder_forward.1} parent=67 // pred_region
          %3317 = dma.done [#allocation4], 32
        $region84: #{image_encoder_forward.1} parent=67 // pred_fallthru
          _
      $region68: #{image_encoder_forward.1} parent=5 // pred_fallthru
        _
      %p3318 = scmp.le.s32.totalorder 2, %s19
      // Predicated region
      $region85: #{image_encoder_forward.1} parent=5 // pred_check
        %p3319 = pneg %p3318
      $region86: #{image_encoder_forward.1} parent=5 // pred_check_branch
        %3321 = sbr.rel (%p3319) target = $region88
      $region87: #{image_encoder_forward.1} parent=5 // pred_region
        %s3322 = ssub.s32 %s19, 2
      $region88: #{image_encoder_forward.1} parent=5 // pred_fallthru
        _
    $region6: #{image_encoder_forward.1} parent=1 // loop_footer
      %s23 = sadd.s32 1, %s19
    $region7: #{image_encoder_forward.1} parent=1 // loop_footer_branch
      %18 = sbr.rel target = $region3
    $region8: #{image_encoder_forward.1} parent=1 // loop_exit
      _
    %3323 = vsyncpa [#allocation4], 1
    %s3324 = scalar_lea.sflag [#allocation4], 1
    %3325 = vsyncpa %s3324, 1

</llo_original>
